<compile_context>
chip_gen: v5e
topology: v5e:2x2
jax: 0.10.0
libtpu: 0.0.40
codegen_flags: <defaults>
</compile_context>

<pallas_src>
import math

import jax
import jax.numpy as jnp
from jax.experimental import pallas as pl
from jax.experimental.pallas import tpu as pltpu


def _leaky_relu(x, slope=0.2):
    return jnp.where(x > 0, x, slope * x)


def _round_up(n, m):
    return ((n + m - 1) // m) * m


def disc_kernel(x_ref, w1_ref, b1_ref, w2_ref, b2_ref, w3_ref, b3_ref, out_ref):
    """Fused MLP forward for one batch tile.

    x_ref : (TB, D)    bf16   flattened image tile
    w1_ref: (D, 512)   bf16   b1_ref: (1, 512) f32
    w2_ref: (512, 256) bf16   b2_ref: (1, 256) f32
    w3_ref: (1, 256)   f32    b3_ref: (1, 1)   f32
    out   : (TB, 128)  f32    score broadcast across 128 lanes
    """
    # Layer 1: bf16 MXU matmul with f32 accumulation; bias + LeakyReLU in f32.
    h1 = jnp.dot(x_ref[...], w1_ref[...], preferred_element_type=jnp.float32)
    h1 = _leaky_relu(h1 + b1_ref[...])

    # Layer 2.
    h2 = jnp.dot(h1.astype(jnp.bfloat16), w2_ref[...],
                 preferred_element_type=jnp.float32)
    h2 = _leaky_relu(h2 + b2_ref[...])

    # Layer 3 (256 -> 1) as elementwise mul + lane reduction (avoids a
    # degenerate N=1 MXU matmul), all in f32.
    score = jnp.sum(h2 * w3_ref[...], axis=-1, keepdims=True) + b3_ref[...]

    # Lane-dense store: broadcast the (TB, 1) column over 128 lanes so stores
    # are unmasked; the wrapper slices column 0.
    out_ref[...] = jnp.broadcast_to(score, out_ref.shape).astype(out_ref.dtype)


def discriminator_forward(img, params, *, tb=128):
    """img: (B, C, H, W) float32, NCHW.  Returns validity scores (B, 1) f32."""
    w1, b1, w2, b2, w3, b3 = params
    B = img.shape[0]
    D, H1 = w1.shape
    H2 = w2.shape[1]

    # Glue (layout only): flatten like img.view(B, -1); bf16 cast halves the
    # dominant HBM traffic (x, w1, w2).  Accumulation stays f32 in-kernel.
    x = img.reshape(B, -1).astype(jnp.bfloat16)
    assert x.shape[1] == D
    w1b = w1.astype(jnp.bfloat16)
    w2b = w2.astype(jnp.bfloat16)

    # Batch tile: 128 rows fills v5e's MXU and is a fine default everywhere
    # (pass tb=256 on v6e/v7x to fully fill the 256-row MXU).
    TB = min(tb, _round_up(B, 8))
    B_pad = _round_up(B, TB)
    if B_pad != B:
        x = jnp.pad(x, ((0, B_pad - B), (0, 0)))
    grid = (B_pad // TB,)

    flops = 2 * B_pad * (D * H1 + H1 * H2 + H2)
    bytes_accessed = (
        x.size * 2 + w1b.size * 2 + w2b.size * 2
        + (b1.size + b2.size + w3.size + b3.size) * 4
        + B_pad * 128 * 4
    )

    out_pad = pl.pallas_call(
        disc_kernel,
        out_shape=jax.ShapeDtypeStruct((B_pad, 128), jnp.float32),
        grid=grid,
        in_specs=[
            pl.BlockSpec((TB, D), lambda i: (i, 0)),    # x tile (pipelined)
            pl.BlockSpec((D, H1), lambda i: (0, 0)),    # w1 (DMA'd once, resident)
            pl.BlockSpec((1, H1), lambda i: (0, 0)),    # b1
            pl.BlockSpec((H1, H2), lambda i: (0, 0)),   # w2
            pl.BlockSpec((1, H2), lambda i: (0, 0)),    # b2
            pl.BlockSpec((1, H2), lambda i: (0, 0)),    # w3 stored as (1, 256)
            pl.BlockSpec((1, 1), lambda i: (0, 0)),     # b3
        ],
        out_specs=pl.BlockSpec((TB, 128), lambda i: (i, 0)),
        compiler_params=pltpu.CompilerParams(
            dimension_semantics=("parallel",),
            vmem_limit_bytes=32 * 1024 * 1024,
        ),
        cost_estimate=pl.CostEstimate(
            flops=flops, transcendentals=0, bytes_accessed=bytes_accessed),
    )(x, w1b, b1, w2b, b2, w3, b3)

    return out_pad[:B, :1]


def init_params(key, in_dim, h1=512, h2=256, out_dim=1):
    """Deterministic init matching PyTorch nn.Linear default:
    U(-1/sqrt(fan_in), 1/sqrt(fan_in)) for both weight and bias."""
    ks = jax.random.split(key, 6)

    def lin(kw, kb, fan_in, fan_out):
        bound = 1.0 / math.sqrt(fan_in)
        w = jax.random.uniform(kw, (fan_in, fan_out), jnp.float32, -bound, bound)
        b = jax.random.uniform(kb, (1, fan_out), jnp.float32, -bound, bound)
        return w, b

    w1, b1 = lin(ks[0], ks[1], in_dim, h1)
    w2, b2 = lin(ks[2], ks[3], h1, h2)
    w3_full, b3 = lin(ks[4], ks[5], h2, out_dim)
    # Store last layer weight as (1, 256) for the in-kernel lane reduction.
    w3 = w3_full.T  # (out_dim, h2) == (1, 256)
    return (w1, b1, w2, b2, w3, b3)


def reference_forward(img, params, use_bf16=True):
    """Pure-JAX reference of the same forward (optionally mirroring the
    kernel's bf16-operand / f32-accumulate math)."""
    w1, b1, w2, b2, w3, b3 = params
    x = img.reshape(img.shape[0], -1).astype(jnp.float32)
    if use_bf16:
        x = x.astype(jnp.bfloat16)
        w1 = w1.astype(jnp.bfloat16)
        w2 = w2.astype(jnp.bfloat16)
    h1 = _leaky_relu(
        jnp.dot(x, w1, preferred_element_type=jnp.float32) + b1)
    h1_in = h1.astype(jnp.bfloat16) if use_bf16 else h1
    h2 = _leaky_relu(
        jnp.dot(h1_in, w2, preferred_element_type=jnp.float32) + b2)
    return jnp.sum(h2 * w3, axis=-1, keepdims=True) + b3


if __name__ == "__main__":
    # Small synthetic config: channels=4, img_size=16 -> flattened dim 1024.
    # B=256 with TB=128 exercises a 2-step batch grid.
    B, C, H, W = 256, 4, 16, 16
    in_dim = C * H * W

    key = jax.random.PRNGKey(0)
    k_img, k_params = jax.random.split(key)

    img = jax.random.normal(k_img, (B, C, H, W), jnp.float32)
    params = init_params(k_params, in_dim)

    out = discriminator_forward(img, params)
    out = jax.block_until_ready(out)
    assert out.shape == (B, 1), out.shape

    # Apples-to-apples check (same bf16-operand / f32-accumulate math).
    ref_bf16 = reference_forward(img, params, use_bf16=True)
    assert jnp.allclose(out, ref_bf16, atol=5e-3, rtol=5e-2), "mismatch vs bf16 reference"

    # Loose sanity check against the full-f32 reference (bf16 operand rounding).
    ref_f32 = reference_forward(img, params, use_bf16=False)
    assert jnp.allclose(out, ref_f32, atol=5e-2, rtol=5e-2), "mismatch vs f32 reference"

    print("KERNEL_OK")
</pallas_src>

<mosaic_0001>
module attributes {stable_mosaic.version = 11 : i64} {
  func.func @disc_kernel(%arg0: i32, %arg1: memref<128x1024xbf16, #tpu.memory_space<vmem>>, %arg2: memref<1024x512xbf16, #tpu.memory_space<vmem>>, %arg3: memref<1x512xf32, #tpu.memory_space<vmem>>, %arg4: memref<512x256xbf16, #tpu.memory_space<vmem>>, %arg5: memref<1x256xf32, #tpu.memory_space<vmem>>, %arg6: memref<1x256xf32, #tpu.memory_space<vmem>>, %arg7: memref<1x1xf32, #tpu.memory_space<vmem>>, %arg8: memref<128x128xf32, #tpu.memory_space<vmem>>) attributes {dimension_semantics = [#tpu.dimension_semantics<parallel>], iteration_bounds = array<i64: 2>, scalar_prefetch = 0 : i64, scratch_operands = 0 : i64, tpu.core_type = #tpu.core_type<tc>, window_params = [{transform_indices = @transform_0, window_bounds = array<i64: 128, 1024>}, {pipeline_mode = #tpu.pipeline_mode<synchronous>, transform_indices = @transform_1, window_bounds = array<i64: 1024, 512>}, {pipeline_mode = #tpu.pipeline_mode<synchronous>, transform_indices = @transform_2, window_bounds = array<i64: 1, 512>}, {pipeline_mode = #tpu.pipeline_mode<synchronous>, transform_indices = @transform_3, window_bounds = array<i64: 512, 256>}, {pipeline_mode = #tpu.pipeline_mode<synchronous>, transform_indices = @transform_4, window_bounds = array<i64: 1, 256>}, {pipeline_mode = #tpu.pipeline_mode<synchronous>, transform_indices = @transform_5, window_bounds = array<i64: 1, 256>}, {pipeline_mode = #tpu.pipeline_mode<synchronous>, transform_indices = @transform_6, window_bounds = array<i64: 1, 1>}, {transform_indices = @transform_7, window_bounds = array<i64: 128, 128>}]} {
    %c0 = arith.constant 0 : index
    %c0_0 = arith.constant 0 : index
    %0 = vector.load %arg1[%c0, %c0_0] : memref<128x1024xbf16, #tpu.memory_space<vmem>>, vector<128x1024xbf16>
    %c0_1 = arith.constant 0 : index
    %c0_2 = arith.constant 0 : index
    %1 = vector.load %arg2[%c0_1, %c0_2] : memref<1024x512xbf16, #tpu.memory_space<vmem>>, vector<1024x512xbf16>
    %cst = arith.constant dense<0.000000e+00> : vector<128x512xf32>
    %2 = tpu.matmul %0, %1, %cst {dimension_numbers = #tpu.dot_dimension_numbers<[1], [0], [0], [1], [0, 0, 1, 1], [], []>} : vector<128x1024xbf16>, vector<1024x512xbf16>, vector<128x512xf32> -> vector<128x512xf32>
    %c0_3 = arith.constant 0 : index
    %c0_4 = arith.constant 0 : index
    %3 = vector.load %arg3[%c0_3, %c0_4] : memref<1x512xf32, #tpu.memory_space<vmem>>, vector<1x512xf32>
    %4 = vector.broadcast %3 : vector<1x512xf32> to vector<128x512xf32>
    %5 = arith.addf %2, %4 : vector<128x512xf32>
    %cst_5 = arith.constant 0.000000e+00 : f32
    %6 = vector.broadcast %cst_5 : f32 to vector<128x512xf32>
    %7 = arith.cmpf ogt, %5, %6 : vector<128x512xf32>
    %cst_6 = arith.constant 2.000000e-01 : f32
    %8 = vector.broadcast %cst_6 : f32 to vector<128x512xf32>
    %9 = arith.mulf %8, %5 : vector<128x512xf32>
    %10 = arith.select %7, %5, %9 : vector<128x512xi1>, vector<128x512xf32>
    %11 = arith.truncf %10 : vector<128x512xf32> to vector<128x512xbf16>
    %c0_7 = arith.constant 0 : index
    %c0_8 = arith.constant 0 : index
    %12 = vector.load %arg4[%c0_7, %c0_8] : memref<512x256xbf16, #tpu.memory_space<vmem>>, vector<512x256xbf16>
    %cst_9 = arith.constant dense<0.000000e+00> : vector<128x256xf32>
    %13 = tpu.matmul %11, %12, %cst_9 {dimension_numbers = #tpu.dot_dimension_numbers<[1], [0], [0], [1], [0, 0, 1, 1], [], []>} : vector<128x512xbf16>, vector<512x256xbf16>, vector<128x256xf32> -> vector<128x256xf32>
    %c0_10 = arith.constant 0 : index
    %c0_11 = arith.constant 0 : index
    %14 = vector.load %arg5[%c0_10, %c0_11] : memref<1x256xf32, #tpu.memory_space<vmem>>, vector<1x256xf32>
    %15 = vector.broadcast %14 : vector<1x256xf32> to vector<128x256xf32>
    %16 = arith.addf %13, %15 : vector<128x256xf32>
    %cst_12 = arith.constant 0.000000e+00 : f32
    %17 = vector.broadcast %cst_12 : f32 to vector<128x256xf32>
    %18 = arith.cmpf ogt, %16, %17 : vector<128x256xf32>
    %cst_13 = arith.constant 2.000000e-01 : f32
    %19 = vector.broadcast %cst_13 : f32 to vector<128x256xf32>
    %20 = arith.mulf %19, %16 : vector<128x256xf32>
    %21 = arith.select %18, %16, %20 : vector<128x256xi1>, vector<128x256xf32>
    %c0_14 = arith.constant 0 : index
    %c0_15 = arith.constant 0 : index
    %22 = vector.load %arg6[%c0_14, %c0_15] : memref<1x256xf32, #tpu.memory_space<vmem>>, vector<1x256xf32>
    %23 = vector.broadcast %22 : vector<1x256xf32> to vector<128x256xf32>
    %24 = arith.mulf %21, %23 : vector<128x256xf32>
    %cst_16 = arith.constant dense<0.000000e+00> : vector<128xf32>
    %25 = vector.multi_reduction <add>, %24, %cst_16 [1] : vector<128x256xf32> to vector<128xf32>
    %26 = vector.shape_cast %25 : vector<128xf32> to vector<128x1xf32>
    %c0_17 = arith.constant 0 : index
    %c0_18 = arith.constant 0 : index
    %27 = vector.load %arg7[%c0_17, %c0_18] : memref<1x1xf32, #tpu.memory_space<vmem>>, vector<1x1xf32>
    %28 = vector.broadcast %27 : vector<1x1xf32> to vector<128x1xf32>
    %29 = arith.addf %26, %28 : vector<128x1xf32>
    %30 = vector.shape_cast %29 : vector<128x1xf32> to vector<128x1xf32>
    %31 = vector.broadcast %30 : vector<128x1xf32> to vector<128x128xf32>
    %c0_19 = arith.constant 0 : index
    %c0_20 = arith.constant 0 : index
    %32 = vector.load %arg8[%c0_19, %c0_20] : memref<128x128xf32, #tpu.memory_space<vmem>>, vector<128x128xf32>
    tpu.vector_store %arg8[%c0_19, %c0_20], %31 {strides = array<i32>} : memref<128x128xf32, #tpu.memory_space<vmem>>, vector<128x128xf32>,
    return
  }
  func.func @transform_0(%arg0: i32) -> (i32, i32) {
    %c0_i32 = arith.constant 0 : i32
    %c0_i32_0 = arith.constant 0 : i32
    return %arg0, %c0_i32 : i32, i32
  }
  func.func @transform_1(%arg0: i32) -> (i32, i32) {
    %c0_i32 = arith.constant 0 : i32
    %c0_i32_0 = arith.constant 0 : i32
    %c0_i32_1 = arith.constant 0 : i32
    return %c0_i32, %c0_i32_0 : i32, i32
  }
  func.func @transform_2(%arg0: i32) -> (i32, i32) {
    %c0_i32 = arith.constant 0 : i32
    %c0_i32_0 = arith.constant 0 : i32
    %c0_i32_1 = arith.constant 0 : i32
    return %c0_i32, %c0_i32_0 : i32, i32
  }
  func.func @transform_3(%arg0: i32) -> (i32, i32) {
    %c0_i32 = arith.constant 0 : i32
    %c0_i32_0 = arith.constant 0 : i32
    %c0_i32_1 = arith.constant 0 : i32
    return %c0_i32, %c0_i32_0 : i32, i32
  }
  func.func @transform_4(%arg0: i32) -> (i32, i32) {
    %c0_i32 = arith.constant 0 : i32
    %c0_i32_0 = arith.constant 0 : i32
    %c0_i32_1 = arith.constant 0 : i32
    return %c0_i32, %c0_i32_0 : i32, i32
  }
  func.func @transform_5(%arg0: i32) -> (i32, i32) {
    %c0_i32 = arith.constant 0 : i32
    %c0_i32_0 = arith.constant 0 : i32
    %c0_i32_1 = arith.constant 0 : i32
    return %c0_i32, %c0_i32_0 : i32, i32
  }
  func.func @transform_6(%arg0: i32) -> (i32, i32) {
    %c0_i32 = arith.constant 0 : i32
    %c0_i32_0 = arith.constant 0 : i32
    %c0_i32_1 = arith.constant 0 : i32
    return %c0_i32, %c0_i32_0 : i32, i32
  }
  func.func @transform_7(%arg0: i32) -> (i32, i32) {
    %c0_i32 = arith.constant 0 : i32
    %c0_i32_0 = arith.constant 0 : i32
    return %arg0, %c0_i32 : i32, i32
  }
}

</mosaic_0001>

<llo_original>
// kernel: tpu_custom_call.1
$region0: #{tpu_custom_call.1}
  #allocation0 [shape = 'u32[]', space=smem, size = 0x4, offset = 0x4, fixed_abs, tag = 'smem constant byte address 0x4 - core index']
  #allocation1 [shape = 'u32[72,128]{1,0:T(1,128)}', space=vmem, size = 0x9000, scoped, tag = 'internal scratch']
  #allocation2 [shape = 'f32[1,1]{1,0:T(1,128)S(1)}', space=vmem, size = 0x200, scoped, tag = 'scoped memory for tpu_custom_call.1']
  %s0 = inlined_call_operand.hbm [shape: bf16[256,1024], index: 0, kind: input, shape index: {}]
  %s1 = inlined_call_operand.hbm [shape: bf16[1024,512], index: 1, kind: input, shape index: {}]
  %s2 = inlined_call_operand.hbm [shape: f32[1,512], index: 2, kind: input, shape index: {}]
  %s3 = inlined_call_operand.hbm [shape: bf16[512,256], index: 3, kind: input, shape index: {}]
  %s4 = inlined_call_operand.vmem [shape: f32[1,256], index: 4, kind: input, shape index: {}]
  %s5 = inlined_call_operand.vmem [shape: f32[1,256], index: 5, kind: input, shape index: {}]
  %s6 = inlined_call_operand.<no memory space> [shape: f32[1,1], index: 6, kind: input, shape index: {}]
  %s7 = inlined_call_operand.hbm [shape: f32[256,128], index: 7, kind: output, shape index: {}]
  %s8 = sld [smem:[#allocation0]]
  $region77: #{tpu_custom_call.1} parent=0
    _
  %s10 = ssub.s32 1, %s8
  %s11 = scalar_select 0, %s10, %s8
  %v12 = vstv %s6
  %13 = vst [vmem:[#allocation2] sm:$0x1] %v12
  $region1: #{tpu_custom_call.1} parent=0
    #allocation3 [shape = 'u8[524288]{0}', space=vmem, size = 0x80000, scoped, tag = 'input window, operand 0']
    #allocation4 [shape = 's32[2]{0}', space=sflag, size = 0x8, scoped, tag = 'scoped memory for tpu_custom_call.1']
    #allocation5 [shape = 's32[2]{0}', space=sflag, size = 0x8, scoped, tag = 'scoped memory for tpu_custom_call.1']
    #allocation6 [shape = 'u8[1048576]{0}', space=vmem, size = 0x100000, scoped, tag = 'input window, operand 1, single buffered']
    #allocation7 [shape = 's32[1]{0}', space=sflag, size = 0x4, scoped, tag = 'scoped memory for tpu_custom_call.1']
    #allocation8 [shape = 'u8[2048]{0}', space=vmem, size = 0x800, scoped, tag = 'input window, operand 2, single buffered']
    #allocation9 [shape = 'u8[262144]{0}', space=vmem, size = 0x40000, scoped, tag = 'input window, operand 3, single buffered']
    #allocation10 [shape = 's32[1]{0}', space=sflag, size = 0x4, scoped, tag = 'scoped memory for tpu_custom_call.1']
    #allocation11 [shape = 'u8[131072]{0}', space=vmem, size = 0x20000, scoped, tag = 'output window, operand 0']
    %14 = vsyncpa [#allocation4], 0
    %s15 = scalar_lea.sflag [#allocation4], 1
    %16 = vsyncpa %s15, 0
    %17 = vsyncpa [#allocation7], 0
    %18 = vsyncpa [#allocation10], 0
    %19 = vsyncpa [#allocation5], 0
    %s20 = scalar_lea.sflag [#allocation5], 1
    %21 = vsyncpa %s20, 0
    loop: start=0, step=1, limit=4
    $region2: #{tpu_custom_call.1} parent=1 // loop_pre_header
      _
    $region3: #{tpu_custom_call.1} parent=1 // loop_header
      %s23 = sphi 0, %s27
      %p24 = scmp.ge.s32.totalorder %s23, 4
      %s33 = sphi 0, %s35
      %s36 = sphi 0, %s33
      %s37 = sphi 0, %s36
      %s53 = sphi 0, %s37
      %s57 = sphi 0, %s57
      %s59 = sphi 0, %s57
      %s60 = sphi 0, %s59
      %s74 = sphi 0, %s60
      %s78 = sphi 0, %s78
      %s80 = sphi 0, %s78
      %s81 = sphi 0, %s80
      %s95 = sphi 0, %s81
      %s99 = sphi 0, %s99
      %s101 = sphi 0, %s99
      %s102 = sphi 0, %s101
      %s116 = sphi 0, %s102
      %s120 = sphi 0, %s120
      %s122 = sphi 0, %s120
      %s123 = sphi 0, %s122
      %s137 = sphi 0, %s123
      %s141 = sphi 0, %s141
      %s143 = sphi 0, %s141
      %s144 = sphi 0, %s143
      %s158 = sphi 0, %s144
      %s162 = sphi 0, %s162
      %s164 = sphi 0, %s162
      %s165 = sphi 0, %s164
      %s179 = sphi 0, %s165
      %s185 = sphi 0, %s187
      %s188 = sphi 0, %s185
      %s189 = sphi 0, %s188
      %s205 = sphi 0, %s189
    $region4: #{tpu_custom_call.1} parent=1 // loop_header_branch
      %26 = sbr.rel (%p24) target = $region8
    $region5: #{tpu_custom_call.1} parent=1 // loop_body
      %s28 = ssub.s32 %s23, 1
      %s29 = ssub.s32 %s23, 2
      %s30 = sadd.s32 %s23, 1
      %s31 = ssub.s32 %s23, %s30
      %p32 = scmp.eq.s32.totalorder %s31, 0
      %s34 = sadd.s32 %s33, 1
      %s35 = scalar_select %p32, %s33, %s34
      %p38 = pneg %p32
      %p39 = scmp.eq.s32.totalorder %s23, 1
      %p40 = por %p38, %p39
      %p41 = scmp.ne.s32.totalorder %s33, %s36
      %p42 = scmp.eq.s32.totalorder %s23, 0
      %p43 = por %p41, %p42
      %p44 = scmp.ne.s32.totalorder %s33, %s36
      %p45 = scmp.eq.s32.totalorder %s28, 1
      %p46 = por %p44, %p45
      %p47 = scmp.ne.s32.totalorder %s36, %s37
      %p48 = scmp.eq.s32.totalorder %s28, 0
      %p49 = por %p47, %p48
      %p50 = scmp.ne.s32.totalorder %s36, %s37
      %p51 = scmp.eq.s32.totalorder %s29, 1
      %p52 = por %p50, %p51
      %p54 = scmp.ne.s32.totalorder %s37, %s53
      %p55 = scmp.eq.s32.totalorder %s29, 0
      %p56 = por %p54, %p55
      %s58 = sadd.s32 %s57, 1
      %p61 = scmp.eq.s32.totalorder %s23, 1
      %p62 = scmp.ne.s32.totalorder %s57, %s59
      %p63 = scmp.eq.s32.totalorder %s23, 0
      %p64 = por %p62, %p63
      %p65 = scmp.ne.s32.totalorder %s57, %s59
      %p66 = scmp.eq.s32.totalorder %s28, 1
      %p67 = por %p65, %p66
      %p68 = scmp.ne.s32.totalorder %s59, %s60
      %p69 = scmp.eq.s32.totalorder %s28, 0
      %p70 = por %p68, %p69
      %p71 = scmp.ne.s32.totalorder %s59, %s60
      %p72 = scmp.eq.s32.totalorder %s29, 1
      %p73 = por %p71, %p72
      %p75 = scmp.ne.s32.totalorder %s60, %s74
      %p76 = scmp.eq.s32.totalorder %s29, 0
      %p77 = por %p75, %p76
      %s79 = sadd.s32 %s78, 1
      %p82 = scmp.eq.s32.totalorder %s23, 1
      %p83 = scmp.ne.s32.totalorder %s78, %s80
      %p84 = scmp.eq.s32.totalorder %s23, 0
      %p85 = por %p83, %p84
      %p86 = scmp.ne.s32.totalorder %s78, %s80
      %p87 = scmp.eq.s32.totalorder %s28, 1
      %p88 = por %p86, %p87
      %p89 = scmp.ne.s32.totalorder %s80, %s81
      %p90 = scmp.eq.s32.totalorder %s28, 0
      %p91 = por %p89, %p90
      %p92 = scmp.ne.s32.totalorder %s80, %s81
      %p93 = scmp.eq.s32.totalorder %s29, 1
      %p94 = por %p92, %p93
      %p96 = scmp.ne.s32.totalorder %s81, %s95
      %p97 = scmp.eq.s32.totalorder %s29, 0
      %p98 = por %p96, %p97
      %s100 = sadd.s32 %s99, 1
      %p103 = scmp.eq.s32.totalorder %s23, 1
      %p104 = scmp.ne.s32.totalorder %s99, %s101
      %p105 = scmp.eq.s32.totalorder %s23, 0
      %p106 = por %p104, %p105
      %p107 = scmp.ne.s32.totalorder %s99, %s101
      %p108 = scmp.eq.s32.totalorder %s28, 1
      %p109 = por %p107, %p108
      %p110 = scmp.ne.s32.totalorder %s101, %s102
      %p111 = scmp.eq.s32.totalorder %s28, 0
      %p112 = por %p110, %p111
      %p113 = scmp.ne.s32.totalorder %s101, %s102
      %p114 = scmp.eq.s32.totalorder %s29, 1
      %p115 = por %p113, %p114
      %p117 = scmp.ne.s32.totalorder %s102, %s116
      %p118 = scmp.eq.s32.totalorder %s29, 0
      %p119 = por %p117, %p118
      %s121 = sadd.s32 %s120, 1
      %p124 = scmp.eq.s32.totalorder %s23, 1
      %p125 = scmp.ne.s32.totalorder %s120, %s122
      %p126 = scmp.eq.s32.totalorder %s23, 0
      %p127 = por %p125, %p126
      %p128 = scmp.ne.s32.totalorder %s120, %s122
      %p129 = scmp.eq.s32.totalorder %s28, 1
      %p130 = por %p128, %p129
      %p131 = scmp.ne.s32.totalorder %s122, %s123
      %p132 = scmp.eq.s32.totalorder %s28, 0
      %p133 = por %p131, %p132
      %p134 = scmp.ne.s32.totalorder %s122, %s123
      %p135 = scmp.eq.s32.totalorder %s29, 1
      %p136 = por %p134, %p135
      %p138 = scmp.ne.s32.totalorder %s123, %s137
      %p139 = scmp.eq.s32.totalorder %s29, 0
      %p140 = por %p138, %p139
      %s142 = sadd.s32 %s141, 1
      %p145 = scmp.eq.s32.totalorder %s23, 1
      %p146 = scmp.ne.s32.totalorder %s141, %s143
      %p147 = scmp.eq.s32.totalorder %s23, 0
      %p148 = por %p146, %p147
      %p149 = scmp.ne.s32.totalorder %s141, %s143
      %p150 = scmp.eq.s32.totalorder %s28, 1
      %p151 = por %p149, %p150
      %p152 = scmp.ne.s32.totalorder %s143, %s144
      %p153 = scmp.eq.s32.totalorder %s28, 0
      %p154 = por %p152, %p153
      %p155 = scmp.ne.s32.totalorder %s143, %s144
      %p156 = scmp.eq.s32.totalorder %s29, 1
      %p157 = por %p155, %p156
      %p159 = scmp.ne.s32.totalorder %s144, %s158
      %p160 = scmp.eq.s32.totalorder %s29, 0
      %p161 = por %p159, %p160
      %s163 = sadd.s32 %s162, 1
      %p166 = scmp.eq.s32.totalorder %s23, 1
      %p167 = scmp.ne.s32.totalorder %s162, %s164
      %p168 = scmp.eq.s32.totalorder %s23, 0
      %p169 = por %p167, %p168
      %p170 = scmp.ne.s32.totalorder %s162, %s164
      %p171 = scmp.eq.s32.totalorder %s28, 1
      %p172 = por %p170, %p171
      %p173 = scmp.ne.s32.totalorder %s164, %s165
      %p174 = scmp.eq.s32.totalorder %s28, 0
      %p175 = por %p173, %p174
      %p176 = scmp.ne.s32.totalorder %s164, %s165
      %p177 = scmp.eq.s32.totalorder %s29, 1
      %p178 = por %p176, %p177
      %p180 = scmp.ne.s32.totalorder %s165, %s179
      %p181 = scmp.eq.s32.totalorder %s29, 0
      %p182 = por %p180, %p181
      %s183 = ssub.s32 %s23, %s30
      %p184 = scmp.eq.s32.totalorder %s183, 0
      %s186 = sadd.s32 %s185, 1
      %s187 = scalar_select %p184, %s185, %s186
      %p190 = pneg %p184
      %p191 = scmp.eq.s32.totalorder %s23, 1
      %p192 = por %p190, %p191
      %p193 = scmp.ne.s32.totalorder %s185, %s188
      %p194 = scmp.eq.s32.totalorder %s23, 0
      %p195 = por %p193, %p194
      %p196 = scmp.ne.s32.totalorder %s185, %s188
      %p197 = scmp.eq.s32.totalorder %s28, 1
      %p198 = por %p196, %p197
      %p199 = scmp.ne.s32.totalorder %s188, %s189
      %p200 = scmp.eq.s32.totalorder %s28, 0
      %p201 = por %p199, %p200
      %p202 = scmp.ne.s32.totalorder %s188, %s189
      %p203 = scmp.eq.s32.totalorder %s29, 1
      %p204 = por %p202, %p203
      %p206 = scmp.ne.s32.totalorder %s189, %s205
      %p207 = scmp.eq.s32.totalorder %s29, 0
      %p208 = por %p206, %p207
      %p209 = scmp.le.s32.totalorder 1, %s23
      %p210 = scmp.lt.s32.totalorder %s23, 3
      %p211 = pnand %p209, %p210
      %p212 = pneg %p211
      // Predicated region
      $region9: #{tpu_custom_call.1} parent=5 // pred_check
        _
      $region10: #{tpu_custom_call.1} parent=5 // pred_check_branch
        %214 = sbr.rel (%p211) target = $region12
      $region11: #{tpu_custom_call.1} parent=5 // pred_region
        %s215 = ssub.s32 %s23, 1
        // Predicated region
        $region13: #{tpu_custom_call.1} parent=11 // pred_check
          %p216 = pneg %p70
        $region14: #{tpu_custom_call.1} parent=11 // pred_check_branch
          %218 = sbr.rel (%p216) target = $region16
        $region15: #{tpu_custom_call.1} parent=11 // pred_region
          %220 = vsyncadd [#allocation7], 0
          %s221 = sshll.u32 %s1, 4
          %s222 = int_to_ptr.hbm [resolvable:$true] %s221
          %s223 = sshll.u32 [#allocation6], 4
          %s224 = int_to_ptr.vmem [resolvable:$true] %s223
          %229 = dma.hbm_to_vmem [thread:$0]  %s222, 32768, %s224, [#allocation7], 256, 256, 16
        $region16: #{tpu_custom_call.1} parent=11 // pred_fallthru
          _
        // Predicated region
        $region17: #{tpu_custom_call.1} parent=11 // pred_check
          %p230 = pneg %p91
        $region18: #{tpu_custom_call.1} parent=11 // pred_check_branch
          %232 = sbr.rel (%p230) target = $region20
        $region19: #{tpu_custom_call.1} parent=11 // pred_region
          %234 = vsyncadd [#allocation7], 0
          %s236 = sshll.u32 %s2, 4
          %s237 = int_to_ptr.hbm [resolvable:$true] %s236
          %s238 = sshll.u32 [#allocation8], 4
          %s239 = int_to_ptr.vmem [resolvable:$true] %s238
          %241 = dma.hbm_to_vmem [thread:$0]  %s237, 64, %s239, [#allocation7]
        $region20: #{tpu_custom_call.1} parent=11 // pred_fallthru
          _
        // Predicated region
        $region21: #{tpu_custom_call.1} parent=11 // pred_check
          %p242 = pneg %p112
        $region22: #{tpu_custom_call.1} parent=11 // pred_check_branch
          %244 = sbr.rel (%p242) target = $region24
        $region23: #{tpu_custom_call.1} parent=11 // pred_region
          %246 = vsyncadd [#allocation10], 0
          %s247 = sshll.u32 %s3, 4
          %s248 = int_to_ptr.hbm [resolvable:$true] %s247
          %s249 = sshll.u32 [#allocation9], 4
          %s250 = int_to_ptr.vmem [resolvable:$true] %s249
          %255 = dma.hbm_to_vmem [thread:$0]  %s248, 8192, %s250, [#allocation10], 128, 128, 8
        $region24: #{tpu_custom_call.1} parent=11 // pred_fallthru
          _
        // Predicated region
        $region25: #{tpu_custom_call.1} parent=11 // pred_check
          %p256 = pneg %p133
        $region26: #{tpu_custom_call.1} parent=11 // pred_check_branch
          %258 = sbr.rel (%p256) target = $region28
        $region27: #{tpu_custom_call.1} parent=11 // pred_region
          _
        $region28: #{tpu_custom_call.1} parent=11 // pred_fallthru
          _
        // Predicated region
        $region29: #{tpu_custom_call.1} parent=11 // pred_check
          %p259 = pneg %p154
        $region30: #{tpu_custom_call.1} parent=11 // pred_check_branch
          %261 = sbr.rel (%p259) target = $region32
        $region31: #{tpu_custom_call.1} parent=11 // pred_region
          _
        $region32: #{tpu_custom_call.1} parent=11 // pred_fallthru
          _
        // Predicated region
        $region33: #{tpu_custom_call.1} parent=11 // pred_check
          %p262 = pneg %p175
        $region34: #{tpu_custom_call.1} parent=11 // pred_check_branch
          %264 = sbr.rel (%p262) target = $region36
        $region35: #{tpu_custom_call.1} parent=11 // pred_region
          _
        $region36: #{tpu_custom_call.1} parent=11 // pred_fallthru
          _
      $region12: #{tpu_custom_call.1} parent=5 // pred_fallthru
        _
      %p265 = scmp.lt.s32.totalorder %s23, 2
      // Predicated region
      $region37: #{tpu_custom_call.1} parent=5 // pred_check
        %p266 = pneg %p265
      $region38: #{tpu_custom_call.1} parent=5 // pred_check_branch
        %268 = sbr.rel (%p266) target = $region40
      $region39: #{tpu_custom_call.1} parent=5 // pred_region
        // Predicated region
        $region41: #{tpu_custom_call.1} parent=39 // pred_check
          %p269 = pneg %p43
        $region42: #{tpu_custom_call.1} parent=39 // pred_check_branch
          %271 = sbr.rel (%p269) target = $region44
        $region43: #{tpu_custom_call.1} parent=39 // pred_region
          %s272 = sand.u32 %s33, 1
          %s273 = scalar_lea.sflag [#allocation4], %s272
          %s274 = sand.u32 %s33, 1
          %s275 = smul.addr %s274, 512
          %s276 = scalar_lea.vmem [#allocation3], %s275
          %s277 = smul.u32 16, %s23
          %279 = vsyncadd %s273, 0
          %s280 = smul.addr %s277, 8
          %s281 = smul.addr %s280, 4
          %s282 = scalar_lea.hbm %s0, %s281
          %s283 = sshll.u32 %s282, 4
          %s284 = int_to_ptr.hbm [resolvable:$true] %s283
          %s285 = sshll.u32 %s276, 4
          %s286 = int_to_ptr.vmem [resolvable:$true] %s285
          %291 = dma.hbm_to_vmem [thread:$0]  %s284, 8192, %s286, %s273, 512, 512, 32
        $region44: #{tpu_custom_call.1} parent=39 // pred_fallthru
          _
      $region40: #{tpu_custom_call.1} parent=5 // pred_fallthru
        _
      %p292 = scmp.le.s32.totalorder 1, %s23
      %p293 = scmp.lt.s32.totalorder %s23, 3
      %p294 = pnand %p292, %p293
      %p295 = pneg %p294
      // Predicated region
      $region45: #{tpu_custom_call.1} parent=5 // pred_check
        _
      $region46: #{tpu_custom_call.1} parent=5 // pred_check_branch
        %297 = sbr.rel (%p294) target = $region48
      $region47: #{tpu_custom_call.1} parent=5 // pred_region
        %s298 = ssub.s32 %s23, 1
        %s299 = sand.u32 %s36, 1
        %s300 = scalar_lea.sflag [#allocation4], %s299
        %s301 = sand.u32 %s36, 1
        %s302 = smul.addr %s301, 512
        %s303 = scalar_lea.vmem [#allocation3], %s302
        // Predicated region
        $region49: #{tpu_custom_call.1} parent=47 // pred_check
          %p304 = pneg %p49
        $region50: #{tpu_custom_call.1} parent=47 // pred_check_branch
          %306 = sbr.rel (%p304) target = $region52
        $region51: #{tpu_custom_call.1} parent=47 // pred_region
          %308 = dma.done %s300, 8192
        $region52: #{tpu_custom_call.1} parent=47 // pred_fallthru
          _
        // Predicated region
        $region53: #{tpu_custom_call.1} parent=47 // pred_check
          %p309 = pneg %p70
        $region54: #{tpu_custom_call.1} parent=47 // pred_check_branch
          %311 = sbr.rel (%p309) target = $region56
        $region55: #{tpu_custom_call.1} parent=47 // pred_region
          %313 = dma.done [#allocation7], 32768
        $region56: #{tpu_custom_call.1} parent=47 // pred_fallthru
          _
        // Predicated region
        $region57: #{tpu_custom_call.1} parent=47 // pred_check
          %p314 = pneg %p91
        $region58: #{tpu_custom_call.1} parent=47 // pred_check_branch
          %316 = sbr.rel (%p314) target = $region60
        $region59: #{tpu_custom_call.1} parent=47 // pred_region
          %318 = dma.done [#allocation7], 64
        $region60: #{tpu_custom_call.1} parent=47 // pred_fallthru
          _
        // Predicated region
        $region61: #{tpu_custom_call.1} parent=47 // pred_check
          %p319 = pneg %p112
        $region62: #{tpu_custom_call.1} parent=47 // pred_check_branch
          %321 = sbr.rel (%p319) target = $region64
        $region63: #{tpu_custom_call.1} parent=47 // pred_region
          %323 = dma.done [#allocation10], 8192
        $region64: #{tpu_custom_call.1} parent=47 // pred_fallthru
          _
        %s324 = sand.u32 %s36, 1
        %s325 = scalar_lea.sflag [#allocation4], %s324
        %s326 = sand.u32 %s36, 1
        %s327 = smul.addr %s326, 512
        %s328 = scalar_lea.vmem [#allocation3], %s327
        %p329 = pneg %p49
        %p330 = pneg %p46
        %p331 = pneg %p70
        %p332 = pneg %p67
        %p333 = pneg %p91
        %p334 = pneg %p88
        %p335 = pneg %p112
        %p336 = pneg %p109
        %p337 = pneg %p133
        %p338 = pneg %p130
        %p339 = pneg %p154
        %p340 = pneg %p151
        %p341 = pneg %p175
        %p342 = pneg %p172
        %p343 = pneg %p201
        %p344 = pneg %p198
        %s345 = sand.u32 %s188, 1
        %s346 = scalar_lea.sflag [#allocation5], %s345
        %s347 = sand.u32 %s188, 1
        %s348 = smul.addr %s347, 128
        %s349 = scalar_lea.vmem [#allocation11], %s348
        %s350 = smul.u32 16, %s28
        %s351 = smul.u32 16, %s28
        %v352 = vld [vmem:[%s303] sm:$0xff]
        %v353 = vld [vmem:[%s303 + $0x8] sm:$0xff]
        %v354 = vld [vmem:[%s303 + $0x10] sm:$0xff]
        %v355 = vld [vmem:[%s303 + $0x18] sm:$0xff]
        %v356 = vld [vmem:[%s303 + $0x20] sm:$0xff]
        %v357 = vld [vmem:[%s303 + $0x28] sm:$0xff]
        %v358 = vld [vmem:[%s303 + $0x30] sm:$0xff]
        %v359 = vld [vmem:[%s303 + $0x38] sm:$0xff]
        %v360 = vld [vmem:[%s303 + $0x40] sm:$0xff]
        %v361 = vld [vmem:[%s303 + $0x48] sm:$0xff]
        %v362 = vld [vmem:[%s303 + $0x50] sm:$0xff]
        %v363 = vld [vmem:[%s303 + $0x58] sm:$0xff]
        %v364 = vld [vmem:[%s303 + $0x60] sm:$0xff]
        %v365 = vld [vmem:[%s303 + $0x68] sm:$0xff]
        %v366 = vld [vmem:[%s303 + $0x70] sm:$0xff]
        %v367 = vld [vmem:[%s303 + $0x78] sm:$0xff]
        %v368 = vld [vmem:[%s303 + $0x80] sm:$0xff]
        %v369 = vld [vmem:[%s303 + $0x88] sm:$0xff]
        %v370 = vld [vmem:[%s303 + $0x90] sm:$0xff]
        %v371 = vld [vmem:[%s303 + $0x98] sm:$0xff]
        %v372 = vld [vmem:[%s303 + $0xa0] sm:$0xff]
        %v373 = vld [vmem:[%s303 + $0xa8] sm:$0xff]
        %v374 = vld [vmem:[%s303 + $0xb0] sm:$0xff]
        %v375 = vld [vmem:[%s303 + $0xb8] sm:$0xff]
        %v376 = vld [vmem:[%s303 + $0xc0] sm:$0xff]
        %v377 = vld [vmem:[%s303 + $0xc8] sm:$0xff]
        %v378 = vld [vmem:[%s303 + $0xd0] sm:$0xff]
        %v379 = vld [vmem:[%s303 + $0xd8] sm:$0xff]
        %v380 = vld [vmem:[%s303 + $0xe0] sm:$0xff]
        %v381 = vld [vmem:[%s303 + $0xe8] sm:$0xff]
        %v382 = vld [vmem:[%s303 + $0xf0] sm:$0xff]
        %v383 = vld [vmem:[%s303 + $0xf8] sm:$0xff]
        %v384 = vld [vmem:[%s303 + $0x100] sm:$0xff]
        %v385 = vld [vmem:[%s303 + $0x108] sm:$0xff]
        %v386 = vld [vmem:[%s303 + $0x110] sm:$0xff]
        %v387 = vld [vmem:[%s303 + $0x118] sm:$0xff]
        %v388 = vld [vmem:[%s303 + $0x120] sm:$0xff]
        %v389 = vld [vmem:[%s303 + $0x128] sm:$0xff]
        %v390 = vld [vmem:[%s303 + $0x130] sm:$0xff]
        %v391 = vld [vmem:[%s303 + $0x138] sm:$0xff]
        %v392 = vld [vmem:[%s303 + $0x140] sm:$0xff]
        %v393 = vld [vmem:[%s303 + $0x148] sm:$0xff]
        %v394 = vld [vmem:[%s303 + $0x150] sm:$0xff]
        %v395 = vld [vmem:[%s303 + $0x158] sm:$0xff]
        %v396 = vld [vmem:[%s303 + $0x160] sm:$0xff]
        %v397 = vld [vmem:[%s303 + $0x168] sm:$0xff]
        %v398 = vld [vmem:[%s303 + $0x170] sm:$0xff]
        %v399 = vld [vmem:[%s303 + $0x178] sm:$0xff]
        %v400 = vld [vmem:[%s303 + $0x180] sm:$0xff]
        %v401 = vld [vmem:[%s303 + $0x188] sm:$0xff]
        %v402 = vld [vmem:[%s303 + $0x190] sm:$0xff]
        %v403 = vld [vmem:[%s303 + $0x198] sm:$0xff]
        %v404 = vld [vmem:[%s303 + $0x1a0] sm:$0xff]
        %v405 = vld [vmem:[%s303 + $0x1a8] sm:$0xff]
        %v406 = vld [vmem:[%s303 + $0x1b0] sm:$0xff]
        %v407 = vld [vmem:[%s303 + $0x1b8] sm:$0xff]
        %v408 = vld [vmem:[%s303 + $0x1c0] sm:$0xff]
        %v409 = vld [vmem:[%s303 + $0x1c8] sm:$0xff]
        %v410 = vld [vmem:[%s303 + $0x1d0] sm:$0xff]
        %v411 = vld [vmem:[%s303 + $0x1d8] sm:$0xff]
        %v412 = vld [vmem:[%s303 + $0x1e0] sm:$0xff]
        %v413 = vld [vmem:[%s303 + $0x1e8] sm:$0xff]
        %v414 = vld [vmem:[%s303 + $0x1f0] sm:$0xff]
        %v415 = vld [vmem:[%s303 + $0x1f8] sm:$0xff]
        %v416 = vld [vmem:[#allocation6] sm:$0xff]
        %v417 = vld [vmem:[#allocation6 + $0x8] sm:$0xff]
        %v418 = vld [vmem:[#allocation6 + $0x10] sm:$0xff]
        %v419 = vld [vmem:[#allocation6 + $0x18] sm:$0xff]
        %v420 = vld [vmem:[#allocation6 + $0x20] sm:$0xff]
        %v421 = vld [vmem:[#allocation6 + $0x28] sm:$0xff]
        %v422 = vld [vmem:[#allocation6 + $0x30] sm:$0xff]
        %v423 = vld [vmem:[#allocation6 + $0x38] sm:$0xff]
        %v424 = vld [vmem:[#allocation6 + $0x40] sm:$0xff]
        %v425 = vld [vmem:[#allocation6 + $0x48] sm:$0xff]
        %v426 = vld [vmem:[#allocation6 + $0x50] sm:$0xff]
        %v427 = vld [vmem:[#allocation6 + $0x58] sm:$0xff]
        %v428 = vld [vmem:[#allocation6 + $0x60] sm:$0xff]
        %v429 = vld [vmem:[#allocation6 + $0x68] sm:$0xff]
        %v430 = vld [vmem:[#allocation6 + $0x70] sm:$0xff]
        %v431 = vld [vmem:[#allocation6 + $0x78] sm:$0xff]
        %v432 = vld [vmem:[#allocation6 + $0x80] sm:$0xff]
        %v433 = vld [vmem:[#allocation6 + $0x88] sm:$0xff]
        %v434 = vld [vmem:[#allocation6 + $0x90] sm:$0xff]
        %v435 = vld [vmem:[#allocation6 + $0x98] sm:$0xff]
        %v436 = vld [vmem:[#allocation6 + $0xa0] sm:$0xff]
        %v437 = vld [vmem:[#allocation6 + $0xa8] sm:$0xff]
        %v438 = vld [vmem:[#allocation6 + $0xb0] sm:$0xff]
        %v439 = vld [vmem:[#allocation6 + $0xb8] sm:$0xff]
        %v440 = vld [vmem:[#allocation6 + $0xc0] sm:$0xff]
        %v441 = vld [vmem:[#allocation6 + $0xc8] sm:$0xff]
        %v442 = vld [vmem:[#allocation6 + $0xd0] sm:$0xff]
        %v443 = vld [vmem:[#allocation6 + $0xd8] sm:$0xff]
        %v444 = vld [vmem:[#allocation6 + $0xe0] sm:$0xff]
        %v445 = vld [vmem:[#allocation6 + $0xe8] sm:$0xff]
        %v446 = vld [vmem:[#allocation6 + $0xf0] sm:$0xff]
        %v447 = vld [vmem:[#allocation6 + $0xf8] sm:$0xff]
        %v448 = vld [vmem:[#allocation6 + $0x100] sm:$0xff]
        %v449 = vld [vmem:[#allocation6 + $0x108] sm:$0xff]
        %v450 = vld [vmem:[#allocation6 + $0x110] sm:$0xff]
        %v451 = vld [vmem:[#allocation6 + $0x118] sm:$0xff]
        %v452 = vld [vmem:[#allocation6 + $0x120] sm:$0xff]
        %v453 = vld [vmem:[#allocation6 + $0x128] sm:$0xff]
        %v454 = vld [vmem:[#allocation6 + $0x130] sm:$0xff]
        %v455 = vld [vmem:[#allocation6 + $0x138] sm:$0xff]
        %v456 = vld [vmem:[#allocation6 + $0x140] sm:$0xff]
        %v457 = vld [vmem:[#allocation6 + $0x148] sm:$0xff]
        %v458 = vld [vmem:[#allocation6 + $0x150] sm:$0xff]
        %v459 = vld [vmem:[#allocation6 + $0x158] sm:$0xff]
        %v460 = vld [vmem:[#allocation6 + $0x160] sm:$0xff]
        %v461 = vld [vmem:[#allocation6 + $0x168] sm:$0xff]
        %v462 = vld [vmem:[#allocation6 + $0x170] sm:$0xff]
        %v463 = vld [vmem:[#allocation6 + $0x178] sm:$0xff]
        %v464 = vld [vmem:[#allocation6 + $0x180] sm:$0xff]
        %v465 = vld [vmem:[#allocation6 + $0x188] sm:$0xff]
        %v466 = vld [vmem:[#allocation6 + $0x190] sm:$0xff]
        %v467 = vld [vmem:[#allocation6 + $0x198] sm:$0xff]
        %v468 = vld [vmem:[#allocation6 + $0x1a0] sm:$0xff]
        %v469 = vld [vmem:[#allocation6 + $0x1a8] sm:$0xff]
        %v470 = vld [vmem:[#allocation6 + $0x1b0] sm:$0xff]
        %v471 = vld [vmem:[#allocation6 + $0x1b8] sm:$0xff]
        %v472 = vld [vmem:[#allocation6 + $0x1c0] sm:$0xff]
        %v473 = vld [vmem:[#allocation6 + $0x1c8] sm:$0xff]
        %v474 = vld [vmem:[#allocation6 + $0x1d0] sm:$0xff]
        %v475 = vld [vmem:[#allocation6 + $0x1d8] sm:$0xff]
        %v476 = vld [vmem:[#allocation6 + $0x1e0] sm:$0xff]
        %v477 = vld [vmem:[#allocation6 + $0x1e8] sm:$0xff]
        %v478 = vld [vmem:[#allocation6 + $0x1f0] sm:$0xff]
        %v479 = vld [vmem:[#allocation6 + $0x1f8] sm:$0xff]
        %v480 = vld [vmem:[#allocation6 + $0x200] sm:$0xff]
        %v481 = vld [vmem:[#allocation6 + $0x208] sm:$0xff]
        %v482 = vld [vmem:[#allocation6 + $0x210] sm:$0xff]
        %v483 = vld [vmem:[#allocation6 + $0x218] sm:$0xff]
        %v484 = vld [vmem:[#allocation6 + $0x220] sm:$0xff]
        %v485 = vld [vmem:[#allocation6 + $0x228] sm:$0xff]
        %v486 = vld [vmem:[#allocation6 + $0x230] sm:$0xff]
        %v487 = vld [vmem:[#allocation6 + $0x238] sm:$0xff]
        %v488 = vld [vmem:[#allocation6 + $0x240] sm:$0xff]
        %v489 = vld [vmem:[#allocation6 + $0x248] sm:$0xff]
        %v490 = vld [vmem:[#allocation6 + $0x250] sm:$0xff]
        %v491 = vld [vmem:[#allocation6 + $0x258] sm:$0xff]
        %v492 = vld [vmem:[#allocation6 + $0x260] sm:$0xff]
        %v493 = vld [vmem:[#allocation6 + $0x268] sm:$0xff]
        %v494 = vld [vmem:[#allocation6 + $0x270] sm:$0xff]
        %v495 = vld [vmem:[#allocation6 + $0x278] sm:$0xff]
        %v496 = vld [vmem:[#allocation6 + $0x280] sm:$0xff]
        %v497 = vld [vmem:[#allocation6 + $0x288] sm:$0xff]
        %v498 = vld [vmem:[#allocation6 + $0x290] sm:$0xff]
        %v499 = vld [vmem:[#allocation6 + $0x298] sm:$0xff]
        %v500 = vld [vmem:[#allocation6 + $0x2a0] sm:$0xff]
        %v501 = vld [vmem:[#allocation6 + $0x2a8] sm:$0xff]
        %v502 = vld [vmem:[#allocation6 + $0x2b0] sm:$0xff]
        %v503 = vld [vmem:[#allocation6 + $0x2b8] sm:$0xff]
        %v504 = vld [vmem:[#allocation6 + $0x2c0] sm:$0xff]
        %v505 = vld [vmem:[#allocation6 + $0x2c8] sm:$0xff]
        %v506 = vld [vmem:[#allocation6 + $0x2d0] sm:$0xff]
        %v507 = vld [vmem:[#allocation6 + $0x2d8] sm:$0xff]
        %v508 = vld [vmem:[#allocation6 + $0x2e0] sm:$0xff]
        %v509 = vld [vmem:[#allocation6 + $0x2e8] sm:$0xff]
        %v510 = vld [vmem:[#allocation6 + $0x2f0] sm:$0xff]
        %v511 = vld [vmem:[#allocation6 + $0x2f8] sm:$0xff]
        %v512 = vld [vmem:[#allocation6 + $0x300] sm:$0xff]
        %v513 = vld [vmem:[#allocation6 + $0x308] sm:$0xff]
        %v514 = vld [vmem:[#allocation6 + $0x310] sm:$0xff]
        %v515 = vld [vmem:[#allocation6 + $0x318] sm:$0xff]
        %v516 = vld [vmem:[#allocation6 + $0x320] sm:$0xff]
        %v517 = vld [vmem:[#allocation6 + $0x328] sm:$0xff]
        %v518 = vld [vmem:[#allocation6 + $0x330] sm:$0xff]
        %v519 = vld [vmem:[#allocation6 + $0x338] sm:$0xff]
        %v520 = vld [vmem:[#allocation6 + $0x340] sm:$0xff]
        %v521 = vld [vmem:[#allocation6 + $0x348] sm:$0xff]
        %v522 = vld [vmem:[#allocation6 + $0x350] sm:$0xff]
        %v523 = vld [vmem:[#allocation6 + $0x358] sm:$0xff]
        %v524 = vld [vmem:[#allocation6 + $0x360] sm:$0xff]
        %v525 = vld [vmem:[#allocation6 + $0x368] sm:$0xff]
        %v526 = vld [vmem:[#allocation6 + $0x370] sm:$0xff]
        %v527 = vld [vmem:[#allocation6 + $0x378] sm:$0xff]
        %v528 = vld [vmem:[#allocation6 + $0x380] sm:$0xff]
        %v529 = vld [vmem:[#allocation6 + $0x388] sm:$0xff]
        %v530 = vld [vmem:[#allocation6 + $0x390] sm:$0xff]
        %v531 = vld [vmem:[#allocation6 + $0x398] sm:$0xff]
        %v532 = vld [vmem:[#allocation6 + $0x3a0] sm:$0xff]
        %v533 = vld [vmem:[#allocation6 + $0x3a8] sm:$0xff]
        %v534 = vld [vmem:[#allocation6 + $0x3b0] sm:$0xff]
        %v535 = vld [vmem:[#allocation6 + $0x3b8] sm:$0xff]
        %v536 = vld [vmem:[#allocation6 + $0x3c0] sm:$0xff]
        %v537 = vld [vmem:[#allocation6 + $0x3c8] sm:$0xff]
        %v538 = vld [vmem:[#allocation6 + $0x3d0] sm:$0xff]
        %v539 = vld [vmem:[#allocation6 + $0x3d8] sm:$0xff]
        %v540 = vld [vmem:[#allocation6 + $0x3e0] sm:$0xff]
        %v541 = vld [vmem:[#allocation6 + $0x3e8] sm:$0xff]
        %v542 = vld [vmem:[#allocation6 + $0x3f0] sm:$0xff]
        %v543 = vld [vmem:[#allocation6 + $0x3f8] sm:$0xff]
        %v544 = vld [vmem:[#allocation6 + $0x400] sm:$0xff]
        %v545 = vld [vmem:[#allocation6 + $0x408] sm:$0xff]
        %v546 = vld [vmem:[#allocation6 + $0x410] sm:$0xff]
        %v547 = vld [vmem:[#allocation6 + $0x418] sm:$0xff]
        %v548 = vld [vmem:[#allocation6 + $0x420] sm:$0xff]
        %v549 = vld [vmem:[#allocation6 + $0x428] sm:$0xff]
        %v550 = vld [vmem:[#allocation6 + $0x430] sm:$0xff]
        %v551 = vld [vmem:[#allocation6 + $0x438] sm:$0xff]
        %v552 = vld [vmem:[#allocation6 + $0x440] sm:$0xff]
        %v553 = vld [vmem:[#allocation6 + $0x448] sm:$0xff]
        %v554 = vld [vmem:[#allocation6 + $0x450] sm:$0xff]
        %v555 = vld [vmem:[#allocation6 + $0x458] sm:$0xff]
        %v556 = vld [vmem:[#allocation6 + $0x460] sm:$0xff]
        %v557 = vld [vmem:[#allocation6 + $0x468] sm:$0xff]
        %v558 = vld [vmem:[#allocation6 + $0x470] sm:$0xff]
        %v559 = vld [vmem:[#allocation6 + $0x478] sm:$0xff]
        %v560 = vld [vmem:[#allocation6 + $0x480] sm:$0xff]
        %v561 = vld [vmem:[#allocation6 + $0x488] sm:$0xff]
        %v562 = vld [vmem:[#allocation6 + $0x490] sm:$0xff]
        %v563 = vld [vmem:[#allocation6 + $0x498] sm:$0xff]
        %v564 = vld [vmem:[#allocation6 + $0x4a0] sm:$0xff]
        %v565 = vld [vmem:[#allocation6 + $0x4a8] sm:$0xff]
        %v566 = vld [vmem:[#allocation6 + $0x4b0] sm:$0xff]
        %v567 = vld [vmem:[#allocation6 + $0x4b8] sm:$0xff]
        %v568 = vld [vmem:[#allocation6 + $0x4c0] sm:$0xff]
        %v569 = vld [vmem:[#allocation6 + $0x4c8] sm:$0xff]
        %v570 = vld [vmem:[#allocation6 + $0x4d0] sm:$0xff]
        %v571 = vld [vmem:[#allocation6 + $0x4d8] sm:$0xff]
        %v572 = vld [vmem:[#allocation6 + $0x4e0] sm:$0xff]
        %v573 = vld [vmem:[#allocation6 + $0x4e8] sm:$0xff]
        %v574 = vld [vmem:[#allocation6 + $0x4f0] sm:$0xff]
        %v575 = vld [vmem:[#allocation6 + $0x4f8] sm:$0xff]
        %v576 = vld [vmem:[#allocation6 + $0x500] sm:$0xff]
        %v577 = vld [vmem:[#allocation6 + $0x508] sm:$0xff]
        %v578 = vld [vmem:[#allocation6 + $0x510] sm:$0xff]
        %v579 = vld [vmem:[#allocation6 + $0x518] sm:$0xff]
        %v580 = vld [vmem:[#allocation6 + $0x520] sm:$0xff]
        %v581 = vld [vmem:[#allocation6 + $0x528] sm:$0xff]
        %v582 = vld [vmem:[#allocation6 + $0x530] sm:$0xff]
        %v583 = vld [vmem:[#allocation6 + $0x538] sm:$0xff]
        %v584 = vld [vmem:[#allocation6 + $0x540] sm:$0xff]
        %v585 = vld [vmem:[#allocation6 + $0x548] sm:$0xff]
        %v586 = vld [vmem:[#allocation6 + $0x550] sm:$0xff]
        %v587 = vld [vmem:[#allocation6 + $0x558] sm:$0xff]
        %v588 = vld [vmem:[#allocation6 + $0x560] sm:$0xff]
        %v589 = vld [vmem:[#allocation6 + $0x568] sm:$0xff]
        %v590 = vld [vmem:[#allocation6 + $0x570] sm:$0xff]
        %v591 = vld [vmem:[#allocation6 + $0x578] sm:$0xff]
        %v592 = vld [vmem:[#allocation6 + $0x580] sm:$0xff]
        %v593 = vld [vmem:[#allocation6 + $0x588] sm:$0xff]
        %v594 = vld [vmem:[#allocation6 + $0x590] sm:$0xff]
        %v595 = vld [vmem:[#allocation6 + $0x598] sm:$0xff]
        %v596 = vld [vmem:[#allocation6 + $0x5a0] sm:$0xff]
        %v597 = vld [vmem:[#allocation6 + $0x5a8] sm:$0xff]
        %v598 = vld [vmem:[#allocation6 + $0x5b0] sm:$0xff]
        %v599 = vld [vmem:[#allocation6 + $0x5b8] sm:$0xff]
        %v600 = vld [vmem:[#allocation6 + $0x5c0] sm:$0xff]
        %v601 = vld [vmem:[#allocation6 + $0x5c8] sm:$0xff]
        %v602 = vld [vmem:[#allocation6 + $0x5d0] sm:$0xff]
        %v603 = vld [vmem:[#allocation6 + $0x5d8] sm:$0xff]
        %v604 = vld [vmem:[#allocation6 + $0x5e0] sm:$0xff]
        %v605 = vld [vmem:[#allocation6 + $0x5e8] sm:$0xff]
        %v606 = vld [vmem:[#allocation6 + $0x5f0] sm:$0xff]
        %v607 = vld [vmem:[#allocation6 + $0x5f8] sm:$0xff]
        %v608 = vld [vmem:[#allocation6 + $0x600] sm:$0xff]
        %v609 = vld [vmem:[#allocation6 + $0x608] sm:$0xff]
        %v610 = vld [vmem:[#allocation6 + $0x610] sm:$0xff]
        %v611 = vld [vmem:[#allocation6 + $0x618] sm:$0xff]
        %v612 = vld [vmem:[#allocation6 + $0x620] sm:$0xff]
        %v613 = vld [vmem:[#allocation6 + $0x628] sm:$0xff]
        %v614 = vld [vmem:[#allocation6 + $0x630] sm:$0xff]
        %v615 = vld [vmem:[#allocation6 + $0x638] sm:$0xff]
        %v616 = vld [vmem:[#allocation6 + $0x640] sm:$0xff]
        %v617 = vld [vmem:[#allocation6 + $0x648] sm:$0xff]
        %v618 = vld [vmem:[#allocation6 + $0x650] sm:$0xff]
        %v619 = vld [vmem:[#allocation6 + $0x658] sm:$0xff]
        %v620 = vld [vmem:[#allocation6 + $0x660] sm:$0xff]
        %v621 = vld [vmem:[#allocation6 + $0x668] sm:$0xff]
        %v622 = vld [vmem:[#allocation6 + $0x670] sm:$0xff]
        %v623 = vld [vmem:[#allocation6 + $0x678] sm:$0xff]
        %v624 = vld [vmem:[#allocation6 + $0x680] sm:$0xff]
        %v625 = vld [vmem:[#allocation6 + $0x688] sm:$0xff]
        %v626 = vld [vmem:[#allocation6 + $0x690] sm:$0xff]
        %v627 = vld [vmem:[#allocation6 + $0x698] sm:$0xff]
        %v628 = vld [vmem:[#allocation6 + $0x6a0] sm:$0xff]
        %v629 = vld [vmem:[#allocation6 + $0x6a8] sm:$0xff]
        %v630 = vld [vmem:[#allocation6 + $0x6b0] sm:$0xff]
        %v631 = vld [vmem:[#allocation6 + $0x6b8] sm:$0xff]
        %v632 = vld [vmem:[#allocation6 + $0x6c0] sm:$0xff]
        %v633 = vld [vmem:[#allocation6 + $0x6c8] sm:$0xff]
        %v634 = vld [vmem:[#allocation6 + $0x6d0] sm:$0xff]
        %v635 = vld [vmem:[#allocation6 + $0x6d8] sm:$0xff]
        %v636 = vld [vmem:[#allocation6 + $0x6e0] sm:$0xff]
        %v637 = vld [vmem:[#allocation6 + $0x6e8] sm:$0xff]
        %v638 = vld [vmem:[#allocation6 + $0x6f0] sm:$0xff]
        %v639 = vld [vmem:[#allocation6 + $0x6f8] sm:$0xff]
        %v640 = vld [vmem:[#allocation6 + $0x700] sm:$0xff]
        %v641 = vld [vmem:[#allocation6 + $0x708] sm:$0xff]
        %v642 = vld [vmem:[#allocation6 + $0x710] sm:$0xff]
        %v643 = vld [vmem:[#allocation6 + $0x718] sm:$0xff]
        %v644 = vld [vmem:[#allocation6 + $0x720] sm:$0xff]
        %v645 = vld [vmem:[#allocation6 + $0x728] sm:$0xff]
        %v646 = vld [vmem:[#allocation6 + $0x730] sm:$0xff]
        %v647 = vld [vmem:[#allocation6 + $0x738] sm:$0xff]
        %v648 = vld [vmem:[#allocation6 + $0x740] sm:$0xff]
        %v649 = vld [vmem:[#allocation6 + $0x748] sm:$0xff]
        %v650 = vld [vmem:[#allocation6 + $0x750] sm:$0xff]
        %v651 = vld [vmem:[#allocation6 + $0x758] sm:$0xff]
        %v652 = vld [vmem:[#allocation6 + $0x760] sm:$0xff]
        %v653 = vld [vmem:[#allocation6 + $0x768] sm:$0xff]
        %v654 = vld [vmem:[#allocation6 + $0x770] sm:$0xff]
        %v655 = vld [vmem:[#allocation6 + $0x778] sm:$0xff]
        %v656 = vld [vmem:[#allocation6 + $0x780] sm:$0xff]
        %v657 = vld [vmem:[#allocation6 + $0x788] sm:$0xff]
        %v658 = vld [vmem:[#allocation6 + $0x790] sm:$0xff]
        %v659 = vld [vmem:[#allocation6 + $0x798] sm:$0xff]
        %v660 = vld [vmem:[#allocation6 + $0x7a0] sm:$0xff]
        %v661 = vld [vmem:[#allocation6 + $0x7a8] sm:$0xff]
        %v662 = vld [vmem:[#allocation6 + $0x7b0] sm:$0xff]
        %v663 = vld [vmem:[#allocation6 + $0x7b8] sm:$0xff]
        %v664 = vld [vmem:[#allocation6 + $0x7c0] sm:$0xff]
        %v665 = vld [vmem:[#allocation6 + $0x7c8] sm:$0xff]
        %v666 = vld [vmem:[#allocation6 + $0x7d0] sm:$0xff]
        %v667 = vld [vmem:[#allocation6 + $0x7d8] sm:$0xff]
        %v668 = vld [vmem:[#allocation6 + $0x7e0] sm:$0xff]
        %v669 = vld [vmem:[#allocation6 + $0x7e8] sm:$0xff]
        %v670 = vld [vmem:[#allocation6 + $0x7f0] sm:$0xff]
        %v671 = vld [vmem:[#allocation6 + $0x7f8] sm:$0xff]
        %v672 = vld [vmem:[#allocation8] sm:$0xf]
        %v674 = vperm.slane %v672, 0
        %v675 = vperm.slane %v672, 1
        %v676 = vperm.slane %v672, 2
        %v677 = vperm.slane %v672, 3
        %v746 = vunpack.c.l.b16 %v352
        %v747 = vunpack.c.h.b16 %v352
        %v748 = vunpack.c.l.b16 %v353
        %v749 = vunpack.c.h.b16 %v353
        %v750 = vunpack.c.l.b16 %v354
        %v751 = vunpack.c.h.b16 %v354
        %v752 = vunpack.c.l.b16 %v355
        %v753 = vunpack.c.h.b16 %v355
        %v754 = vunpack.c.l.b16 %v356
        %v755 = vunpack.c.h.b16 %v356
        %v756 = vunpack.c.l.b16 %v357
        %v757 = vunpack.c.h.b16 %v357
        %v758 = vunpack.c.l.b16 %v358
        %v759 = vunpack.c.h.b16 %v358
        %v760 = vunpack.c.l.b16 %v359
        %v761 = vunpack.c.h.b16 %v359
        %v762 = vunpack.c.l.b16 %v360
        %v763 = vunpack.c.h.b16 %v360
        %v764 = vunpack.c.l.b16 %v361
        %v765 = vunpack.c.h.b16 %v361
        %v766 = vunpack.c.l.b16 %v362
        %v767 = vunpack.c.h.b16 %v362
        %v768 = vunpack.c.l.b16 %v363
        %v769 = vunpack.c.h.b16 %v363
        %v770 = vunpack.c.l.b16 %v364
        %v771 = vunpack.c.h.b16 %v364
        %v772 = vunpack.c.l.b16 %v365
        %v773 = vunpack.c.h.b16 %v365
        %v774 = vunpack.c.l.b16 %v366
        %v775 = vunpack.c.h.b16 %v366
        %v776 = vunpack.c.l.b16 %v367
        %v777 = vunpack.c.h.b16 %v367
        %v778 = vunpack.c.l.b16 %v368
        %v779 = vunpack.c.h.b16 %v368
        %v780 = vunpack.c.l.b16 %v369
        %v781 = vunpack.c.h.b16 %v369
        %v782 = vunpack.c.l.b16 %v370
        %v783 = vunpack.c.h.b16 %v370
        %v784 = vunpack.c.l.b16 %v371
        %v785 = vunpack.c.h.b16 %v371
        %v786 = vunpack.c.l.b16 %v372
        %v787 = vunpack.c.h.b16 %v372
        %v788 = vunpack.c.l.b16 %v373
        %v789 = vunpack.c.h.b16 %v373
        %v790 = vunpack.c.l.b16 %v374
        %v791 = vunpack.c.h.b16 %v374
        %v792 = vunpack.c.l.b16 %v375
        %v793 = vunpack.c.h.b16 %v375
        %v794 = vunpack.c.l.b16 %v376
        %v795 = vunpack.c.h.b16 %v376
        %v796 = vunpack.c.l.b16 %v377
        %v797 = vunpack.c.h.b16 %v377
        %v798 = vunpack.c.l.b16 %v378
        %v799 = vunpack.c.h.b16 %v378
        %v800 = vunpack.c.l.b16 %v379
        %v801 = vunpack.c.h.b16 %v379
        %v802 = vunpack.c.l.b16 %v380
        %v803 = vunpack.c.h.b16 %v380
        %v804 = vunpack.c.l.b16 %v381
        %v805 = vunpack.c.h.b16 %v381
        %v806 = vunpack.c.l.b16 %v382
        %v807 = vunpack.c.h.b16 %v382
        %v808 = vunpack.c.l.b16 %v383
        %v809 = vunpack.c.h.b16 %v383
        %v810 = vunpack.c.l.b16 %v384
        %v811 = vunpack.c.h.b16 %v384
        %v812 = vunpack.c.l.b16 %v385
        %v813 = vunpack.c.h.b16 %v385
        %v814 = vunpack.c.l.b16 %v386
        %v815 = vunpack.c.h.b16 %v386
        %v816 = vunpack.c.l.b16 %v387
        %v817 = vunpack.c.h.b16 %v387
        %v818 = vunpack.c.l.b16 %v388
        %v819 = vunpack.c.h.b16 %v388
        %v820 = vunpack.c.l.b16 %v389
        %v821 = vunpack.c.h.b16 %v389
        %v822 = vunpack.c.l.b16 %v390
        %v823 = vunpack.c.h.b16 %v390
        %v824 = vunpack.c.l.b16 %v391
        %v825 = vunpack.c.h.b16 %v391
        %v826 = vunpack.c.l.b16 %v392
        %v827 = vunpack.c.h.b16 %v392
        %v828 = vunpack.c.l.b16 %v393
        %v829 = vunpack.c.h.b16 %v393
        %v830 = vunpack.c.l.b16 %v394
        %v831 = vunpack.c.h.b16 %v394
        %v832 = vunpack.c.l.b16 %v395
        %v833 = vunpack.c.h.b16 %v395
        %v834 = vunpack.c.l.b16 %v396
        %v835 = vunpack.c.h.b16 %v396
        %v836 = vunpack.c.l.b16 %v397
        %v837 = vunpack.c.h.b16 %v397
        %v838 = vunpack.c.l.b16 %v398
        %v839 = vunpack.c.h.b16 %v398
        %v840 = vunpack.c.l.b16 %v399
        %v841 = vunpack.c.h.b16 %v399
        %v842 = vunpack.c.l.b16 %v400
        %v843 = vunpack.c.h.b16 %v400
        %v844 = vunpack.c.l.b16 %v401
        %v845 = vunpack.c.h.b16 %v401
        %v846 = vunpack.c.l.b16 %v402
        %v847 = vunpack.c.h.b16 %v402
        %v848 = vunpack.c.l.b16 %v403
        %v849 = vunpack.c.h.b16 %v403
        %v850 = vunpack.c.l.b16 %v404
        %v851 = vunpack.c.h.b16 %v404
        %v852 = vunpack.c.l.b16 %v405
        %v853 = vunpack.c.h.b16 %v405
        %v854 = vunpack.c.l.b16 %v406
        %v855 = vunpack.c.h.b16 %v406
        %v856 = vunpack.c.l.b16 %v407
        %v857 = vunpack.c.h.b16 %v407
        %v858 = vunpack.c.l.b16 %v408
        %v859 = vunpack.c.h.b16 %v408
        %v860 = vunpack.c.l.b16 %v409
        %v861 = vunpack.c.h.b16 %v409
        %v862 = vunpack.c.l.b16 %v410
        %v863 = vunpack.c.h.b16 %v410
        %v864 = vunpack.c.l.b16 %v411
        %v865 = vunpack.c.h.b16 %v411
        %v866 = vunpack.c.l.b16 %v412
        %v867 = vunpack.c.h.b16 %v412
        %v868 = vunpack.c.l.b16 %v413
        %v869 = vunpack.c.h.b16 %v413
        %v870 = vunpack.c.l.b16 %v414
        %v871 = vunpack.c.h.b16 %v414
        %v872 = vunpack.c.l.b16 %v415
        %v873 = vunpack.c.h.b16 %v415
        %v874 = vpack.c.b16 %v754, %v746
        %v875 = vpack.c.b16 %v755, %v747
        %v876 = vpack.c.b16 %v756, %v748
        %v877 = vpack.c.b16 %v757, %v749
        %v878 = vpack.c.b16 %v758, %v750
        %v879 = vpack.c.b16 %v759, %v751
        %v880 = vpack.c.b16 %v760, %v752
        %v881 = vpack.c.b16 %v761, %v753
        %v882 = vpack.c.b16 %v770, %v762
        %v883 = vpack.c.b16 %v771, %v763
        %v884 = vpack.c.b16 %v772, %v764
        %v885 = vpack.c.b16 %v773, %v765
        %v886 = vpack.c.b16 %v774, %v766
        %v887 = vpack.c.b16 %v775, %v767
        %v888 = vpack.c.b16 %v776, %v768
        %v889 = vpack.c.b16 %v777, %v769
        %v890 = vpack.c.b16 %v786, %v778
        %v891 = vpack.c.b16 %v787, %v779
        %v892 = vpack.c.b16 %v788, %v780
        %v893 = vpack.c.b16 %v789, %v781
        %v894 = vpack.c.b16 %v790, %v782
        %v895 = vpack.c.b16 %v791, %v783
        %v896 = vpack.c.b16 %v792, %v784
        %v897 = vpack.c.b16 %v793, %v785
        %v898 = vpack.c.b16 %v802, %v794
        %v899 = vpack.c.b16 %v803, %v795
        %v900 = vpack.c.b16 %v804, %v796
        %v901 = vpack.c.b16 %v805, %v797
        %v902 = vpack.c.b16 %v806, %v798
        %v903 = vpack.c.b16 %v807, %v799
        %v904 = vpack.c.b16 %v808, %v800
        %v905 = vpack.c.b16 %v809, %v801
        %v906 = vpack.c.b16 %v818, %v810
        %v907 = vpack.c.b16 %v819, %v811
        %v908 = vpack.c.b16 %v820, %v812
        %v909 = vpack.c.b16 %v821, %v813
        %v910 = vpack.c.b16 %v822, %v814
        %v911 = vpack.c.b16 %v823, %v815
        %v912 = vpack.c.b16 %v824, %v816
        %v913 = vpack.c.b16 %v825, %v817
        %v914 = vpack.c.b16 %v834, %v826
        %v915 = vpack.c.b16 %v835, %v827
        %v916 = vpack.c.b16 %v836, %v828
        %v917 = vpack.c.b16 %v837, %v829
        %v918 = vpack.c.b16 %v838, %v830
        %v919 = vpack.c.b16 %v839, %v831
        %v920 = vpack.c.b16 %v840, %v832
        %v921 = vpack.c.b16 %v841, %v833
        %v922 = vpack.c.b16 %v850, %v842
        %v923 = vpack.c.b16 %v851, %v843
        %v924 = vpack.c.b16 %v852, %v844
        %v925 = vpack.c.b16 %v853, %v845
        %v926 = vpack.c.b16 %v854, %v846
        %v927 = vpack.c.b16 %v855, %v847
        %v928 = vpack.c.b16 %v856, %v848
        %v929 = vpack.c.b16 %v857, %v849
        %v930 = vpack.c.b16 %v866, %v858
        %v931 = vpack.c.b16 %v867, %v859
        %v932 = vpack.c.b16 %v868, %v860
        %v933 = vpack.c.b16 %v869, %v861
        %v934 = vpack.c.b16 %v870, %v862
        %v935 = vpack.c.b16 %v871, %v863
        %v936 = vpack.c.b16 %v872, %v864
        %v937 = vpack.c.b16 %v873, %v865
        %v1258 = vunpack.c.l.b16 %v416
        %v1259 = vunpack.c.h.b16 %v416
        %v1260 = vunpack.c.l.b16 %v417
        %v1261 = vunpack.c.h.b16 %v417
        %v1262 = vunpack.c.l.b16 %v418
        %v1263 = vunpack.c.h.b16 %v418
        %v1264 = vunpack.c.l.b16 %v419
        %v1265 = vunpack.c.h.b16 %v419
        %v1266 = vunpack.c.l.b16 %v420
        %v1267 = vunpack.c.h.b16 %v420
        %v1268 = vunpack.c.l.b16 %v421
        %v1269 = vunpack.c.h.b16 %v421
        %v1270 = vunpack.c.l.b16 %v422
        %v1271 = vunpack.c.h.b16 %v422
        %v1272 = vunpack.c.l.b16 %v423
        %v1273 = vunpack.c.h.b16 %v423
        %v1274 = vunpack.c.l.b16 %v424
        %v1275 = vunpack.c.h.b16 %v424
        %v1276 = vunpack.c.l.b16 %v425
        %v1277 = vunpack.c.h.b16 %v425
        %v1278 = vunpack.c.l.b16 %v426
        %v1279 = vunpack.c.h.b16 %v426
        %v1280 = vunpack.c.l.b16 %v427
        %v1281 = vunpack.c.h.b16 %v427
        %v1282 = vunpack.c.l.b16 %v428
        %v1283 = vunpack.c.h.b16 %v428
        %v1284 = vunpack.c.l.b16 %v429
        %v1285 = vunpack.c.h.b16 %v429
        %v1286 = vunpack.c.l.b16 %v430
        %v1287 = vunpack.c.h.b16 %v430
        %v1288 = vunpack.c.l.b16 %v431
        %v1289 = vunpack.c.h.b16 %v431
        %v1290 = vunpack.c.l.b16 %v432
        %v1291 = vunpack.c.h.b16 %v432
        %v1292 = vunpack.c.l.b16 %v433
        %v1293 = vunpack.c.h.b16 %v433
        %v1294 = vunpack.c.l.b16 %v434
        %v1295 = vunpack.c.h.b16 %v434
        %v1296 = vunpack.c.l.b16 %v435
        %v1297 = vunpack.c.h.b16 %v435
        %v1298 = vunpack.c.l.b16 %v436
        %v1299 = vunpack.c.h.b16 %v436
        %v1300 = vunpack.c.l.b16 %v437
        %v1301 = vunpack.c.h.b16 %v437
        %v1302 = vunpack.c.l.b16 %v438
        %v1303 = vunpack.c.h.b16 %v438
        %v1304 = vunpack.c.l.b16 %v439
        %v1305 = vunpack.c.h.b16 %v439
        %v1306 = vunpack.c.l.b16 %v440
        %v1307 = vunpack.c.h.b16 %v440
        %v1308 = vunpack.c.l.b16 %v441
        %v1309 = vunpack.c.h.b16 %v441
        %v1310 = vunpack.c.l.b16 %v442
        %v1311 = vunpack.c.h.b16 %v442
        %v1312 = vunpack.c.l.b16 %v443
        %v1313 = vunpack.c.h.b16 %v443
        %v1314 = vunpack.c.l.b16 %v444
        %v1315 = vunpack.c.h.b16 %v444
        %v1316 = vunpack.c.l.b16 %v445
        %v1317 = vunpack.c.h.b16 %v445
        %v1318 = vunpack.c.l.b16 %v446
        %v1319 = vunpack.c.h.b16 %v446
        %v1320 = vunpack.c.l.b16 %v447
        %v1321 = vunpack.c.h.b16 %v447
        %v1322 = vunpack.c.l.b16 %v448
        %v1323 = vunpack.c.h.b16 %v448
        %v1324 = vunpack.c.l.b16 %v449
        %v1325 = vunpack.c.h.b16 %v449
        %v1326 = vunpack.c.l.b16 %v450
        %v1327 = vunpack.c.h.b16 %v450
        %v1328 = vunpack.c.l.b16 %v451
        %v1329 = vunpack.c.h.b16 %v451
        %v1330 = vunpack.c.l.b16 %v452
        %v1331 = vunpack.c.h.b16 %v452
        %v1332 = vunpack.c.l.b16 %v453
        %v1333 = vunpack.c.h.b16 %v453
        %v1334 = vunpack.c.l.b16 %v454
        %v1335 = vunpack.c.h.b16 %v454
        %v1336 = vunpack.c.l.b16 %v455
        %v1337 = vunpack.c.h.b16 %v455
        %v1338 = vunpack.c.l.b16 %v456
        %v1339 = vunpack.c.h.b16 %v456
        %v1340 = vunpack.c.l.b16 %v457
        %v1341 = vunpack.c.h.b16 %v457
        %v1342 = vunpack.c.l.b16 %v458
        %v1343 = vunpack.c.h.b16 %v458
        %v1344 = vunpack.c.l.b16 %v459
        %v1345 = vunpack.c.h.b16 %v459
        %v1346 = vunpack.c.l.b16 %v460
        %v1347 = vunpack.c.h.b16 %v460
        %v1348 = vunpack.c.l.b16 %v461
        %v1349 = vunpack.c.h.b16 %v461
        %v1350 = vunpack.c.l.b16 %v462
        %v1351 = vunpack.c.h.b16 %v462
        %v1352 = vunpack.c.l.b16 %v463
        %v1353 = vunpack.c.h.b16 %v463
        %v1354 = vunpack.c.l.b16 %v464
        %v1355 = vunpack.c.h.b16 %v464
        %v1356 = vunpack.c.l.b16 %v465
        %v1357 = vunpack.c.h.b16 %v465
        %v1358 = vunpack.c.l.b16 %v466
        %v1359 = vunpack.c.h.b16 %v466
        %v1360 = vunpack.c.l.b16 %v467
        %v1361 = vunpack.c.h.b16 %v467
        %v1362 = vunpack.c.l.b16 %v468
        %v1363 = vunpack.c.h.b16 %v468
        %v1364 = vunpack.c.l.b16 %v469
        %v1365 = vunpack.c.h.b16 %v469
        %v1366 = vunpack.c.l.b16 %v470
        %v1367 = vunpack.c.h.b16 %v470
        %v1368 = vunpack.c.l.b16 %v471
        %v1369 = vunpack.c.h.b16 %v471
        %v1370 = vunpack.c.l.b16 %v472
        %v1371 = vunpack.c.h.b16 %v472
        %v1372 = vunpack.c.l.b16 %v473
        %v1373 = vunpack.c.h.b16 %v473
        %v1374 = vunpack.c.l.b16 %v474
        %v1375 = vunpack.c.h.b16 %v474
        %v1376 = vunpack.c.l.b16 %v475
        %v1377 = vunpack.c.h.b16 %v475
        %v1378 = vunpack.c.l.b16 %v476
        %v1379 = vunpack.c.h.b16 %v476
        %v1380 = vunpack.c.l.b16 %v477
        %v1381 = vunpack.c.h.b16 %v477
        %v1382 = vunpack.c.l.b16 %v478
        %v1383 = vunpack.c.h.b16 %v478
        %v1384 = vunpack.c.l.b16 %v479
        %v1385 = vunpack.c.h.b16 %v479
        %v1386 = vunpack.c.l.b16 %v480
        %v1387 = vunpack.c.h.b16 %v480
        %v1388 = vunpack.c.l.b16 %v481
        %v1389 = vunpack.c.h.b16 %v481
        %v1390 = vunpack.c.l.b16 %v482
        %v1391 = vunpack.c.h.b16 %v482
        %v1392 = vunpack.c.l.b16 %v483
        %v1393 = vunpack.c.h.b16 %v483
        %v1394 = vunpack.c.l.b16 %v484
        %v1395 = vunpack.c.h.b16 %v484
        %v1396 = vunpack.c.l.b16 %v485
        %v1397 = vunpack.c.h.b16 %v485
        %v1398 = vunpack.c.l.b16 %v486
        %v1399 = vunpack.c.h.b16 %v486
        %v1400 = vunpack.c.l.b16 %v487
        %v1401 = vunpack.c.h.b16 %v487
        %v1402 = vunpack.c.l.b16 %v488
        %v1403 = vunpack.c.h.b16 %v488
        %v1404 = vunpack.c.l.b16 %v489
        %v1405 = vunpack.c.h.b16 %v489
        %v1406 = vunpack.c.l.b16 %v490
        %v1407 = vunpack.c.h.b16 %v490
        %v1408 = vunpack.c.l.b16 %v491
        %v1409 = vunpack.c.h.b16 %v491
        %v1410 = vunpack.c.l.b16 %v492
        %v1411 = vunpack.c.h.b16 %v492
        %v1412 = vunpack.c.l.b16 %v493
        %v1413 = vunpack.c.h.b16 %v493
        %v1414 = vunpack.c.l.b16 %v494
        %v1415 = vunpack.c.h.b16 %v494
        %v1416 = vunpack.c.l.b16 %v495
        %v1417 = vunpack.c.h.b16 %v495
        %v1418 = vunpack.c.l.b16 %v496
        %v1419 = vunpack.c.h.b16 %v496
        %v1420 = vunpack.c.l.b16 %v497
        %v1421 = vunpack.c.h.b16 %v497
        %v1422 = vunpack.c.l.b16 %v498
        %v1423 = vunpack.c.h.b16 %v498
        %v1424 = vunpack.c.l.b16 %v499
        %v1425 = vunpack.c.h.b16 %v499
        %v1426 = vunpack.c.l.b16 %v500
        %v1427 = vunpack.c.h.b16 %v500
        %v1428 = vunpack.c.l.b16 %v501
        %v1429 = vunpack.c.h.b16 %v501
        %v1430 = vunpack.c.l.b16 %v502
        %v1431 = vunpack.c.h.b16 %v502
        %v1432 = vunpack.c.l.b16 %v503
        %v1433 = vunpack.c.h.b16 %v503
        %v1434 = vunpack.c.l.b16 %v504
        %v1435 = vunpack.c.h.b16 %v504
        %v1436 = vunpack.c.l.b16 %v505
        %v1437 = vunpack.c.h.b16 %v505
        %v1438 = vunpack.c.l.b16 %v506
        %v1439 = vunpack.c.h.b16 %v506
        %v1440 = vunpack.c.l.b16 %v507
        %v1441 = vunpack.c.h.b16 %v507
        %v1442 = vunpack.c.l.b16 %v508
        %v1443 = vunpack.c.h.b16 %v508
        %v1444 = vunpack.c.l.b16 %v509
        %v1445 = vunpack.c.h.b16 %v509
        %v1446 = vunpack.c.l.b16 %v510
        %v1447 = vunpack.c.h.b16 %v510
        %v1448 = vunpack.c.l.b16 %v511
        %v1449 = vunpack.c.h.b16 %v511
        %v1450 = vunpack.c.l.b16 %v512
        %v1451 = vunpack.c.h.b16 %v512
        %v1452 = vunpack.c.l.b16 %v513
        %v1453 = vunpack.c.h.b16 %v513
        %v1454 = vunpack.c.l.b16 %v514
        %v1455 = vunpack.c.h.b16 %v514
        %v1456 = vunpack.c.l.b16 %v515
        %v1457 = vunpack.c.h.b16 %v515
        %v1458 = vunpack.c.l.b16 %v516
        %v1459 = vunpack.c.h.b16 %v516
        %v1460 = vunpack.c.l.b16 %v517
        %v1461 = vunpack.c.h.b16 %v517
        %v1462 = vunpack.c.l.b16 %v518
        %v1463 = vunpack.c.h.b16 %v518
        %v1464 = vunpack.c.l.b16 %v519
        %v1465 = vunpack.c.h.b16 %v519
        %v1466 = vunpack.c.l.b16 %v520
        %v1467 = vunpack.c.h.b16 %v520
        %v1468 = vunpack.c.l.b16 %v521
        %v1469 = vunpack.c.h.b16 %v521
        %v1470 = vunpack.c.l.b16 %v522
        %v1471 = vunpack.c.h.b16 %v522
        %v1472 = vunpack.c.l.b16 %v523
        %v1473 = vunpack.c.h.b16 %v523
        %v1474 = vunpack.c.l.b16 %v524
        %v1475 = vunpack.c.h.b16 %v524
        %v1476 = vunpack.c.l.b16 %v525
        %v1477 = vunpack.c.h.b16 %v525
        %v1478 = vunpack.c.l.b16 %v526
        %v1479 = vunpack.c.h.b16 %v526
        %v1480 = vunpack.c.l.b16 %v527
        %v1481 = vunpack.c.h.b16 %v527
        %v1482 = vunpack.c.l.b16 %v528
        %v1483 = vunpack.c.h.b16 %v528
        %v1484 = vunpack.c.l.b16 %v529
        %v1485 = vunpack.c.h.b16 %v529
        %v1486 = vunpack.c.l.b16 %v530
        %v1487 = vunpack.c.h.b16 %v530
        %v1488 = vunpack.c.l.b16 %v531
        %v1489 = vunpack.c.h.b16 %v531
        %v1490 = vunpack.c.l.b16 %v532
        %v1491 = vunpack.c.h.b16 %v532
        %v1492 = vunpack.c.l.b16 %v533
        %v1493 = vunpack.c.h.b16 %v533
        %v1494 = vunpack.c.l.b16 %v534
        %v1495 = vunpack.c.h.b16 %v534
        %v1496 = vunpack.c.l.b16 %v535
        %v1497 = vunpack.c.h.b16 %v535
        %v1498 = vunpack.c.l.b16 %v536
        %v1499 = vunpack.c.h.b16 %v536
        %v1500 = vunpack.c.l.b16 %v537
        %v1501 = vunpack.c.h.b16 %v537
        %v1502 = vunpack.c.l.b16 %v538
        %v1503 = vunpack.c.h.b16 %v538
        %v1504 = vunpack.c.l.b16 %v539
        %v1505 = vunpack.c.h.b16 %v539
        %v1506 = vunpack.c.l.b16 %v540
        %v1507 = vunpack.c.h.b16 %v540
        %v1508 = vunpack.c.l.b16 %v541
        %v1509 = vunpack.c.h.b16 %v541
        %v1510 = vunpack.c.l.b16 %v542
        %v1511 = vunpack.c.h.b16 %v542
        %v1512 = vunpack.c.l.b16 %v543
        %v1513 = vunpack.c.h.b16 %v543
        %v1514 = vunpack.c.l.b16 %v544
        %v1515 = vunpack.c.h.b16 %v544
        %v1516 = vunpack.c.l.b16 %v545
        %v1517 = vunpack.c.h.b16 %v545
        %v1518 = vunpack.c.l.b16 %v546
        %v1519 = vunpack.c.h.b16 %v546
        %v1520 = vunpack.c.l.b16 %v547
        %v1521 = vunpack.c.h.b16 %v547
        %v1522 = vunpack.c.l.b16 %v548
        %v1523 = vunpack.c.h.b16 %v548
        %v1524 = vunpack.c.l.b16 %v549
        %v1525 = vunpack.c.h.b16 %v549
        %v1526 = vunpack.c.l.b16 %v550
        %v1527 = vunpack.c.h.b16 %v550
        %v1528 = vunpack.c.l.b16 %v551
        %v1529 = vunpack.c.h.b16 %v551
        %v1530 = vunpack.c.l.b16 %v552
        %v1531 = vunpack.c.h.b16 %v552
        %v1532 = vunpack.c.l.b16 %v553
        %v1533 = vunpack.c.h.b16 %v553
        %v1534 = vunpack.c.l.b16 %v554
        %v1535 = vunpack.c.h.b16 %v554
        %v1536 = vunpack.c.l.b16 %v555
        %v1537 = vunpack.c.h.b16 %v555
        %v1538 = vunpack.c.l.b16 %v556
        %v1539 = vunpack.c.h.b16 %v556
        %v1540 = vunpack.c.l.b16 %v557
        %v1541 = vunpack.c.h.b16 %v557
        %v1542 = vunpack.c.l.b16 %v558
        %v1543 = vunpack.c.h.b16 %v558
        %v1544 = vunpack.c.l.b16 %v559
        %v1545 = vunpack.c.h.b16 %v559
        %v1546 = vunpack.c.l.b16 %v560
        %v1547 = vunpack.c.h.b16 %v560
        %v1548 = vunpack.c.l.b16 %v561
        %v1549 = vunpack.c.h.b16 %v561
        %v1550 = vunpack.c.l.b16 %v562
        %v1551 = vunpack.c.h.b16 %v562
        %v1552 = vunpack.c.l.b16 %v563
        %v1553 = vunpack.c.h.b16 %v563
        %v1554 = vunpack.c.l.b16 %v564
        %v1555 = vunpack.c.h.b16 %v564
        %v1556 = vunpack.c.l.b16 %v565
        %v1557 = vunpack.c.h.b16 %v565
        %v1558 = vunpack.c.l.b16 %v566
        %v1559 = vunpack.c.h.b16 %v566
        %v1560 = vunpack.c.l.b16 %v567
        %v1561 = vunpack.c.h.b16 %v567
        %v1562 = vunpack.c.l.b16 %v568
        %v1563 = vunpack.c.h.b16 %v568
        %v1564 = vunpack.c.l.b16 %v569
        %v1565 = vunpack.c.h.b16 %v569
        %v1566 = vunpack.c.l.b16 %v570
        %v1567 = vunpack.c.h.b16 %v570
        %v1568 = vunpack.c.l.b16 %v571
        %v1569 = vunpack.c.h.b16 %v571
        %v1570 = vunpack.c.l.b16 %v572
        %v1571 = vunpack.c.h.b16 %v572
        %v1572 = vunpack.c.l.b16 %v573
        %v1573 = vunpack.c.h.b16 %v573
        %v1574 = vunpack.c.l.b16 %v574
        %v1575 = vunpack.c.h.b16 %v574
        %v1576 = vunpack.c.l.b16 %v575
        %v1577 = vunpack.c.h.b16 %v575
        %v1578 = vunpack.c.l.b16 %v576
        %v1579 = vunpack.c.h.b16 %v576
        %v1580 = vunpack.c.l.b16 %v577
        %v1581 = vunpack.c.h.b16 %v577
        %v1582 = vunpack.c.l.b16 %v578
        %v1583 = vunpack.c.h.b16 %v578
        %v1584 = vunpack.c.l.b16 %v579
        %v1585 = vunpack.c.h.b16 %v579
        %v1586 = vunpack.c.l.b16 %v580
        %v1587 = vunpack.c.h.b16 %v580
        %v1588 = vunpack.c.l.b16 %v581
        %v1589 = vunpack.c.h.b16 %v581
        %v1590 = vunpack.c.l.b16 %v582
        %v1591 = vunpack.c.h.b16 %v582
        %v1592 = vunpack.c.l.b16 %v583
        %v1593 = vunpack.c.h.b16 %v583
        %v1594 = vunpack.c.l.b16 %v584
        %v1595 = vunpack.c.h.b16 %v584
        %v1596 = vunpack.c.l.b16 %v585
        %v1597 = vunpack.c.h.b16 %v585
        %v1598 = vunpack.c.l.b16 %v586
        %v1599 = vunpack.c.h.b16 %v586
        %v1600 = vunpack.c.l.b16 %v587
        %v1601 = vunpack.c.h.b16 %v587
        %v1602 = vunpack.c.l.b16 %v588
        %v1603 = vunpack.c.h.b16 %v588
        %v1604 = vunpack.c.l.b16 %v589
        %v1605 = vunpack.c.h.b16 %v589
        %v1606 = vunpack.c.l.b16 %v590
        %v1607 = vunpack.c.h.b16 %v590
        %v1608 = vunpack.c.l.b16 %v591
        %v1609 = vunpack.c.h.b16 %v591
        %v1610 = vunpack.c.l.b16 %v592
        %v1611 = vunpack.c.h.b16 %v592
        %v1612 = vunpack.c.l.b16 %v593
        %v1613 = vunpack.c.h.b16 %v593
        %v1614 = vunpack.c.l.b16 %v594
        %v1615 = vunpack.c.h.b16 %v594
        %v1616 = vunpack.c.l.b16 %v595
        %v1617 = vunpack.c.h.b16 %v595
        %v1618 = vunpack.c.l.b16 %v596
        %v1619 = vunpack.c.h.b16 %v596
        %v1620 = vunpack.c.l.b16 %v597
        %v1621 = vunpack.c.h.b16 %v597
        %v1622 = vunpack.c.l.b16 %v598
        %v1623 = vunpack.c.h.b16 %v598
        %v1624 = vunpack.c.l.b16 %v599
        %v1625 = vunpack.c.h.b16 %v599
        %v1626 = vunpack.c.l.b16 %v600
        %v1627 = vunpack.c.h.b16 %v600
        %v1628 = vunpack.c.l.b16 %v601
        %v1629 = vunpack.c.h.b16 %v601
        %v1630 = vunpack.c.l.b16 %v602
        %v1631 = vunpack.c.h.b16 %v602
        %v1632 = vunpack.c.l.b16 %v603
        %v1633 = vunpack.c.h.b16 %v603
        %v1634 = vunpack.c.l.b16 %v604
        %v1635 = vunpack.c.h.b16 %v604
        %v1636 = vunpack.c.l.b16 %v605
        %v1637 = vunpack.c.h.b16 %v605
        %v1638 = vunpack.c.l.b16 %v606
        %v1639 = vunpack.c.h.b16 %v606
        %v1640 = vunpack.c.l.b16 %v607
        %v1641 = vunpack.c.h.b16 %v607
        %v1642 = vunpack.c.l.b16 %v608
        %v1643 = vunpack.c.h.b16 %v608
        %v1644 = vunpack.c.l.b16 %v609
        %v1645 = vunpack.c.h.b16 %v609
        %v1646 = vunpack.c.l.b16 %v610
        %v1647 = vunpack.c.h.b16 %v610
        %v1648 = vunpack.c.l.b16 %v611
        %v1649 = vunpack.c.h.b16 %v611
        %v1650 = vunpack.c.l.b16 %v612
        %v1651 = vunpack.c.h.b16 %v612
        %v1652 = vunpack.c.l.b16 %v613
        %v1653 = vunpack.c.h.b16 %v613
        %v1654 = vunpack.c.l.b16 %v614
        %v1655 = vunpack.c.h.b16 %v614
        %v1656 = vunpack.c.l.b16 %v615
        %v1657 = vunpack.c.h.b16 %v615
        %v1658 = vunpack.c.l.b16 %v616
        %v1659 = vunpack.c.h.b16 %v616
        %v1660 = vunpack.c.l.b16 %v617
        %v1661 = vunpack.c.h.b16 %v617
        %v1662 = vunpack.c.l.b16 %v618
        %v1663 = vunpack.c.h.b16 %v618
        %v1664 = vunpack.c.l.b16 %v619
        %v1665 = vunpack.c.h.b16 %v619
        %v1666 = vunpack.c.l.b16 %v620
        %v1667 = vunpack.c.h.b16 %v620
        %v1668 = vunpack.c.l.b16 %v621
        %v1669 = vunpack.c.h.b16 %v621
        %v1670 = vunpack.c.l.b16 %v622
        %v1671 = vunpack.c.h.b16 %v622
        %v1672 = vunpack.c.l.b16 %v623
        %v1673 = vunpack.c.h.b16 %v623
        %v1674 = vunpack.c.l.b16 %v624
        %v1675 = vunpack.c.h.b16 %v624
        %v1676 = vunpack.c.l.b16 %v625
        %v1677 = vunpack.c.h.b16 %v625
        %v1678 = vunpack.c.l.b16 %v626
        %v1679 = vunpack.c.h.b16 %v626
        %v1680 = vunpack.c.l.b16 %v627
        %v1681 = vunpack.c.h.b16 %v627
        %v1682 = vunpack.c.l.b16 %v628
        %v1683 = vunpack.c.h.b16 %v628
        %v1684 = vunpack.c.l.b16 %v629
        %v1685 = vunpack.c.h.b16 %v629
        %v1686 = vunpack.c.l.b16 %v630
        %v1687 = vunpack.c.h.b16 %v630
        %v1688 = vunpack.c.l.b16 %v631
        %v1689 = vunpack.c.h.b16 %v631
        %v1690 = vunpack.c.l.b16 %v632
        %v1691 = vunpack.c.h.b16 %v632
        %v1692 = vunpack.c.l.b16 %v633
        %v1693 = vunpack.c.h.b16 %v633
        %v1694 = vunpack.c.l.b16 %v634
        %v1695 = vunpack.c.h.b16 %v634
        %v1696 = vunpack.c.l.b16 %v635
        %v1697 = vunpack.c.h.b16 %v635
        %v1698 = vunpack.c.l.b16 %v636
        %v1699 = vunpack.c.h.b16 %v636
        %v1700 = vunpack.c.l.b16 %v637
        %v1701 = vunpack.c.h.b16 %v637
        %v1702 = vunpack.c.l.b16 %v638
        %v1703 = vunpack.c.h.b16 %v638
        %v1704 = vunpack.c.l.b16 %v639
        %v1705 = vunpack.c.h.b16 %v639
        %v1706 = vunpack.c.l.b16 %v640
        %v1707 = vunpack.c.h.b16 %v640
        %v1708 = vunpack.c.l.b16 %v641
        %v1709 = vunpack.c.h.b16 %v641
        %v1710 = vunpack.c.l.b16 %v642
        %v1711 = vunpack.c.h.b16 %v642
        %v1712 = vunpack.c.l.b16 %v643
        %v1713 = vunpack.c.h.b16 %v643
        %v1714 = vunpack.c.l.b16 %v644
        %v1715 = vunpack.c.h.b16 %v644
        %v1716 = vunpack.c.l.b16 %v645
        %v1717 = vunpack.c.h.b16 %v645
        %v1718 = vunpack.c.l.b16 %v646
        %v1719 = vunpack.c.h.b16 %v646
        %v1720 = vunpack.c.l.b16 %v647
        %v1721 = vunpack.c.h.b16 %v647
        %v1722 = vunpack.c.l.b16 %v648
        %v1723 = vunpack.c.h.b16 %v648
        %v1724 = vunpack.c.l.b16 %v649
        %v1725 = vunpack.c.h.b16 %v649
        %v1726 = vunpack.c.l.b16 %v650
        %v1727 = vunpack.c.h.b16 %v650
        %v1728 = vunpack.c.l.b16 %v651
        %v1729 = vunpack.c.h.b16 %v651
        %v1730 = vunpack.c.l.b16 %v652
        %v1731 = vunpack.c.h.b16 %v652
        %v1732 = vunpack.c.l.b16 %v653
        %v1733 = vunpack.c.h.b16 %v653
        %v1734 = vunpack.c.l.b16 %v654
        %v1735 = vunpack.c.h.b16 %v654
        %v1736 = vunpack.c.l.b16 %v655
        %v1737 = vunpack.c.h.b16 %v655
        %v1738 = vunpack.c.l.b16 %v656
        %v1739 = vunpack.c.h.b16 %v656
        %v1740 = vunpack.c.l.b16 %v657
        %v1741 = vunpack.c.h.b16 %v657
        %v1742 = vunpack.c.l.b16 %v658
        %v1743 = vunpack.c.h.b16 %v658
        %v1744 = vunpack.c.l.b16 %v659
        %v1745 = vunpack.c.h.b16 %v659
        %v1746 = vunpack.c.l.b16 %v660
        %v1747 = vunpack.c.h.b16 %v660
        %v1748 = vunpack.c.l.b16 %v661
        %v1749 = vunpack.c.h.b16 %v661
        %v1750 = vunpack.c.l.b16 %v662
        %v1751 = vunpack.c.h.b16 %v662
        %v1752 = vunpack.c.l.b16 %v663
        %v1753 = vunpack.c.h.b16 %v663
        %v1754 = vunpack.c.l.b16 %v664
        %v1755 = vunpack.c.h.b16 %v664
        %v1756 = vunpack.c.l.b16 %v665
        %v1757 = vunpack.c.h.b16 %v665
        %v1758 = vunpack.c.l.b16 %v666
        %v1759 = vunpack.c.h.b16 %v666
        %v1760 = vunpack.c.l.b16 %v667
        %v1761 = vunpack.c.h.b16 %v667
        %v1762 = vunpack.c.l.b16 %v668
        %v1763 = vunpack.c.h.b16 %v668
        %v1764 = vunpack.c.l.b16 %v669
        %v1765 = vunpack.c.h.b16 %v669
        %v1766 = vunpack.c.l.b16 %v670
        %v1767 = vunpack.c.h.b16 %v670
        %v1768 = vunpack.c.l.b16 %v671
        %v1769 = vunpack.c.h.b16 %v671
        %v1770 = vpack.c.b16 %v1262, %v1258
        %v1771 = vpack.c.b16 %v1263, %v1259
        %v1772 = vpack.c.b16 %v1264, %v1260
        %v1773 = vpack.c.b16 %v1265, %v1261
        %v1774 = vpack.c.b16 %v1270, %v1266
        %v1775 = vpack.c.b16 %v1271, %v1267
        %v1776 = vpack.c.b16 %v1272, %v1268
        %v1777 = vpack.c.b16 %v1273, %v1269
        %v1778 = vpack.c.b16 %v1278, %v1274
        %v1779 = vpack.c.b16 %v1279, %v1275
        %v1780 = vpack.c.b16 %v1280, %v1276
        %v1781 = vpack.c.b16 %v1281, %v1277
        %v1782 = vpack.c.b16 %v1286, %v1282
        %v1783 = vpack.c.b16 %v1287, %v1283
        %v1784 = vpack.c.b16 %v1288, %v1284
        %v1785 = vpack.c.b16 %v1289, %v1285
        %v1786 = vpack.c.b16 %v1294, %v1290
        %v1787 = vpack.c.b16 %v1295, %v1291
        %v1788 = vpack.c.b16 %v1296, %v1292
        %v1789 = vpack.c.b16 %v1297, %v1293
        %v1790 = vpack.c.b16 %v1302, %v1298
        %v1791 = vpack.c.b16 %v1303, %v1299
        %v1792 = vpack.c.b16 %v1304, %v1300
        %v1793 = vpack.c.b16 %v1305, %v1301
        %v1794 = vpack.c.b16 %v1310, %v1306
        %v1795 = vpack.c.b16 %v1311, %v1307
        %v1796 = vpack.c.b16 %v1312, %v1308
        %v1797 = vpack.c.b16 %v1313, %v1309
        %v1798 = vpack.c.b16 %v1318, %v1314
        %v1799 = vpack.c.b16 %v1319, %v1315
        %v1800 = vpack.c.b16 %v1320, %v1316
        %v1801 = vpack.c.b16 %v1321, %v1317
        %v1802 = vpack.c.b16 %v1326, %v1322
        %v1803 = vpack.c.b16 %v1327, %v1323
        %v1804 = vpack.c.b16 %v1328, %v1324
        %v1805 = vpack.c.b16 %v1329, %v1325
        %v1806 = vpack.c.b16 %v1334, %v1330
        %v1807 = vpack.c.b16 %v1335, %v1331
        %v1808 = vpack.c.b16 %v1336, %v1332
        %v1809 = vpack.c.b16 %v1337, %v1333
        %v1810 = vpack.c.b16 %v1342, %v1338
        %v1811 = vpack.c.b16 %v1343, %v1339
        %v1812 = vpack.c.b16 %v1344, %v1340
        %v1813 = vpack.c.b16 %v1345, %v1341
        %v1814 = vpack.c.b16 %v1350, %v1346
        %v1815 = vpack.c.b16 %v1351, %v1347
        %v1816 = vpack.c.b16 %v1352, %v1348
        %v1817 = vpack.c.b16 %v1353, %v1349
        %v1818 = vpack.c.b16 %v1358, %v1354
        %v1819 = vpack.c.b16 %v1359, %v1355
        %v1820 = vpack.c.b16 %v1360, %v1356
        %v1821 = vpack.c.b16 %v1361, %v1357
        %v1822 = vpack.c.b16 %v1366, %v1362
        %v1823 = vpack.c.b16 %v1367, %v1363
        %v1824 = vpack.c.b16 %v1368, %v1364
        %v1825 = vpack.c.b16 %v1369, %v1365
        %v1826 = vpack.c.b16 %v1374, %v1370
        %v1827 = vpack.c.b16 %v1375, %v1371
        %v1828 = vpack.c.b16 %v1376, %v1372
        %v1829 = vpack.c.b16 %v1377, %v1373
        %v1830 = vpack.c.b16 %v1382, %v1378
        %v1831 = vpack.c.b16 %v1383, %v1379
        %v1832 = vpack.c.b16 %v1384, %v1380
        %v1833 = vpack.c.b16 %v1385, %v1381
        %v1834 = vpack.c.b16 %v1390, %v1386
        %v1835 = vpack.c.b16 %v1391, %v1387
        %v1836 = vpack.c.b16 %v1392, %v1388
        %v1837 = vpack.c.b16 %v1393, %v1389
        %v1838 = vpack.c.b16 %v1398, %v1394
        %v1839 = vpack.c.b16 %v1399, %v1395
        %v1840 = vpack.c.b16 %v1400, %v1396
        %v1841 = vpack.c.b16 %v1401, %v1397
        %v1842 = vpack.c.b16 %v1406, %v1402
        %v1843 = vpack.c.b16 %v1407, %v1403
        %v1844 = vpack.c.b16 %v1408, %v1404
        %v1845 = vpack.c.b16 %v1409, %v1405
        %v1846 = vpack.c.b16 %v1414, %v1410
        %v1847 = vpack.c.b16 %v1415, %v1411
        %v1848 = vpack.c.b16 %v1416, %v1412
        %v1849 = vpack.c.b16 %v1417, %v1413
        %v1850 = vpack.c.b16 %v1422, %v1418
        %v1851 = vpack.c.b16 %v1423, %v1419
        %v1852 = vpack.c.b16 %v1424, %v1420
        %v1853 = vpack.c.b16 %v1425, %v1421
        %v1854 = vpack.c.b16 %v1430, %v1426
        %v1855 = vpack.c.b16 %v1431, %v1427
        %v1856 = vpack.c.b16 %v1432, %v1428
        %v1857 = vpack.c.b16 %v1433, %v1429
        %v1858 = vpack.c.b16 %v1438, %v1434
        %v1859 = vpack.c.b16 %v1439, %v1435
        %v1860 = vpack.c.b16 %v1440, %v1436
        %v1861 = vpack.c.b16 %v1441, %v1437
        %v1862 = vpack.c.b16 %v1446, %v1442
        %v1863 = vpack.c.b16 %v1447, %v1443
        %v1864 = vpack.c.b16 %v1448, %v1444
        %v1865 = vpack.c.b16 %v1449, %v1445
        %v1866 = vpack.c.b16 %v1454, %v1450
        %v1867 = vpack.c.b16 %v1455, %v1451
        %v1868 = vpack.c.b16 %v1456, %v1452
        %v1869 = vpack.c.b16 %v1457, %v1453
        %v1870 = vpack.c.b16 %v1462, %v1458
        %v1871 = vpack.c.b16 %v1463, %v1459
        %v1872 = vpack.c.b16 %v1464, %v1460
        %v1873 = vpack.c.b16 %v1465, %v1461
        %v1874 = vpack.c.b16 %v1470, %v1466
        %v1875 = vpack.c.b16 %v1471, %v1467
        %v1876 = vpack.c.b16 %v1472, %v1468
        %v1877 = vpack.c.b16 %v1473, %v1469
        %v1878 = vpack.c.b16 %v1478, %v1474
        %v1879 = vpack.c.b16 %v1479, %v1475
        %v1880 = vpack.c.b16 %v1480, %v1476
        %v1881 = vpack.c.b16 %v1481, %v1477
        %v1882 = vpack.c.b16 %v1486, %v1482
        %v1883 = vpack.c.b16 %v1487, %v1483
        %v1884 = vpack.c.b16 %v1488, %v1484
        %v1885 = vpack.c.b16 %v1489, %v1485
        %v1886 = vpack.c.b16 %v1494, %v1490
        %v1887 = vpack.c.b16 %v1495, %v1491
        %v1888 = vpack.c.b16 %v1496, %v1492
        %v1889 = vpack.c.b16 %v1497, %v1493
        %v1890 = vpack.c.b16 %v1502, %v1498
        %v1891 = vpack.c.b16 %v1503, %v1499
        %v1892 = vpack.c.b16 %v1504, %v1500
        %v1893 = vpack.c.b16 %v1505, %v1501
        %v1894 = vpack.c.b16 %v1510, %v1506
        %v1895 = vpack.c.b16 %v1511, %v1507
        %v1896 = vpack.c.b16 %v1512, %v1508
        %v1897 = vpack.c.b16 %v1513, %v1509
        %v1898 = vpack.c.b16 %v1518, %v1514
        %v1899 = vpack.c.b16 %v1519, %v1515
        %v1900 = vpack.c.b16 %v1520, %v1516
        %v1901 = vpack.c.b16 %v1521, %v1517
        %v1902 = vpack.c.b16 %v1526, %v1522
        %v1903 = vpack.c.b16 %v1527, %v1523
        %v1904 = vpack.c.b16 %v1528, %v1524
        %v1905 = vpack.c.b16 %v1529, %v1525
        %v1906 = vpack.c.b16 %v1534, %v1530
        %v1907 = vpack.c.b16 %v1535, %v1531
        %v1908 = vpack.c.b16 %v1536, %v1532
        %v1909 = vpack.c.b16 %v1537, %v1533
        %v1910 = vpack.c.b16 %v1542, %v1538
        %v1911 = vpack.c.b16 %v1543, %v1539
        %v1912 = vpack.c.b16 %v1544, %v1540
        %v1913 = vpack.c.b16 %v1545, %v1541
        %v1914 = vpack.c.b16 %v1550, %v1546
        %v1915 = vpack.c.b16 %v1551, %v1547
        %v1916 = vpack.c.b16 %v1552, %v1548
        %v1917 = vpack.c.b16 %v1553, %v1549
        %v1918 = vpack.c.b16 %v1558, %v1554
        %v1919 = vpack.c.b16 %v1559, %v1555
        %v1920 = vpack.c.b16 %v1560, %v1556
        %v1921 = vpack.c.b16 %v1561, %v1557
        %v1922 = vpack.c.b16 %v1566, %v1562
        %v1923 = vpack.c.b16 %v1567, %v1563
        %v1924 = vpack.c.b16 %v1568, %v1564
        %v1925 = vpack.c.b16 %v1569, %v1565
        %v1926 = vpack.c.b16 %v1574, %v1570
        %v1927 = vpack.c.b16 %v1575, %v1571
        %v1928 = vpack.c.b16 %v1576, %v1572
        %v1929 = vpack.c.b16 %v1577, %v1573
        %v1930 = vpack.c.b16 %v1582, %v1578
        %v1931 = vpack.c.b16 %v1583, %v1579
        %v1932 = vpack.c.b16 %v1584, %v1580
        %v1933 = vpack.c.b16 %v1585, %v1581
        %v1934 = vpack.c.b16 %v1590, %v1586
        %v1935 = vpack.c.b16 %v1591, %v1587
        %v1936 = vpack.c.b16 %v1592, %v1588
        %v1937 = vpack.c.b16 %v1593, %v1589
        %v1938 = vpack.c.b16 %v1598, %v1594
        %v1939 = vpack.c.b16 %v1599, %v1595
        %v1940 = vpack.c.b16 %v1600, %v1596
        %v1941 = vpack.c.b16 %v1601, %v1597
        %v1942 = vpack.c.b16 %v1606, %v1602
        %v1943 = vpack.c.b16 %v1607, %v1603
        %v1944 = vpack.c.b16 %v1608, %v1604
        %v1945 = vpack.c.b16 %v1609, %v1605
        %v1946 = vpack.c.b16 %v1614, %v1610
        %v1947 = vpack.c.b16 %v1615, %v1611
        %v1948 = vpack.c.b16 %v1616, %v1612
        %v1949 = vpack.c.b16 %v1617, %v1613
        %v1950 = vpack.c.b16 %v1622, %v1618
        %v1951 = vpack.c.b16 %v1623, %v1619
        %v1952 = vpack.c.b16 %v1624, %v1620
        %v1953 = vpack.c.b16 %v1625, %v1621
        %v1954 = vpack.c.b16 %v1630, %v1626
        %v1955 = vpack.c.b16 %v1631, %v1627
        %v1956 = vpack.c.b16 %v1632, %v1628
        %v1957 = vpack.c.b16 %v1633, %v1629
        %v1958 = vpack.c.b16 %v1638, %v1634
        %v1959 = vpack.c.b16 %v1639, %v1635
        %v1960 = vpack.c.b16 %v1640, %v1636
        %v1961 = vpack.c.b16 %v1641, %v1637
        %v1962 = vpack.c.b16 %v1646, %v1642
        %v1963 = vpack.c.b16 %v1647, %v1643
        %v1964 = vpack.c.b16 %v1648, %v1644
        %v1965 = vpack.c.b16 %v1649, %v1645
        %v1966 = vpack.c.b16 %v1654, %v1650
        %v1967 = vpack.c.b16 %v1655, %v1651
        %v1968 = vpack.c.b16 %v1656, %v1652
        %v1969 = vpack.c.b16 %v1657, %v1653
        %v1970 = vpack.c.b16 %v1662, %v1658
        %v1971 = vpack.c.b16 %v1663, %v1659
        %v1972 = vpack.c.b16 %v1664, %v1660
        %v1973 = vpack.c.b16 %v1665, %v1661
        %v1974 = vpack.c.b16 %v1670, %v1666
        %v1975 = vpack.c.b16 %v1671, %v1667
        %v1976 = vpack.c.b16 %v1672, %v1668
        %v1977 = vpack.c.b16 %v1673, %v1669
        %v1978 = vpack.c.b16 %v1678, %v1674
        %v1979 = vpack.c.b16 %v1679, %v1675
        %v1980 = vpack.c.b16 %v1680, %v1676
        %v1981 = vpack.c.b16 %v1681, %v1677
        %v1982 = vpack.c.b16 %v1686, %v1682
        %v1983 = vpack.c.b16 %v1687, %v1683
        %v1984 = vpack.c.b16 %v1688, %v1684
        %v1985 = vpack.c.b16 %v1689, %v1685
        %v1986 = vpack.c.b16 %v1694, %v1690
        %v1987 = vpack.c.b16 %v1695, %v1691
        %v1988 = vpack.c.b16 %v1696, %v1692
        %v1989 = vpack.c.b16 %v1697, %v1693
        %v1990 = vpack.c.b16 %v1702, %v1698
        %v1991 = vpack.c.b16 %v1703, %v1699
        %v1992 = vpack.c.b16 %v1704, %v1700
        %v1993 = vpack.c.b16 %v1705, %v1701
        %v1994 = vpack.c.b16 %v1710, %v1706
        %v1995 = vpack.c.b16 %v1711, %v1707
        %v1996 = vpack.c.b16 %v1712, %v1708
        %v1997 = vpack.c.b16 %v1713, %v1709
        %v1998 = vpack.c.b16 %v1718, %v1714
        %v1999 = vpack.c.b16 %v1719, %v1715
        %v2000 = vpack.c.b16 %v1720, %v1716
        %v2001 = vpack.c.b16 %v1721, %v1717
        %v2002 = vpack.c.b16 %v1726, %v1722
        %v2003 = vpack.c.b16 %v1727, %v1723
        %v2004 = vpack.c.b16 %v1728, %v1724
        %v2005 = vpack.c.b16 %v1729, %v1725
        %v2006 = vpack.c.b16 %v1734, %v1730
        %v2007 = vpack.c.b16 %v1735, %v1731
        %v2008 = vpack.c.b16 %v1736, %v1732
        %v2009 = vpack.c.b16 %v1737, %v1733
        %v2010 = vpack.c.b16 %v1742, %v1738
        %v2011 = vpack.c.b16 %v1743, %v1739
        %v2012 = vpack.c.b16 %v1744, %v1740
        %v2013 = vpack.c.b16 %v1745, %v1741
        %v2014 = vpack.c.b16 %v1750, %v1746
        %v2015 = vpack.c.b16 %v1751, %v1747
        %v2016 = vpack.c.b16 %v1752, %v1748
        %v2017 = vpack.c.b16 %v1753, %v1749
        %v2018 = vpack.c.b16 %v1758, %v1754
        %v2019 = vpack.c.b16 %v1759, %v1755
        %v2020 = vpack.c.b16 %v1760, %v1756
        %v2021 = vpack.c.b16 %v1761, %v1757
        %v2022 = vpack.c.b16 %v1766, %v1762
        %v2023 = vpack.c.b16 %v1767, %v1763
        %v2024 = vpack.c.b16 %v1768, %v1764
        %v2025 = vpack.c.b16 %v1769, %v1765
        %2282 = vmatpush.bf16.msra.mxu0 %v1798
        %2283 = vmatpush.bf16.msra.mxu0 %v1794
        %2284 = vmatpush.bf16.msra.mxu0 %v1790
        %2285 = vmatpush.bf16.msra.mxu0 %v1786
        %2286 = vmatpush.bf16.msra.mxu0 %v1782
        %2287 = vmatpush.bf16.msra.mxu0 %v1778
        %2288 = vmatpush.bf16.msra.mxu0 %v1774
        %2289 = vmatpush.bf16.msra.mxu0 %v1770
        %2290 = vmatmul.bf16.gmra.mxu0 %v874
        %v2291 = vpop.f32.mrf.mxu0
        %v2292 = vadd.f32 %v674, %v2291
        %v2293 = vpop.f32.mrf.mxu0
        %v2294 = vadd.f32 %v674, %v2293
        %2295 = vmatmul.bf16.gmra.mxu0 %v882
        %v2296 = vpop.f32.mrf.mxu0
        %v2297 = vadd.f32 %v674, %v2296
        %v2298 = vpop.f32.mrf.mxu0
        %v2299 = vadd.f32 %v674, %v2298
        %2300 = vmatmul.bf16.gmra.mxu0 %v890
        %v2301 = vpop.f32.mrf.mxu0
        %v2302 = vadd.f32 %v674, %v2301
        %v2303 = vpop.f32.mrf.mxu0
        %v2304 = vadd.f32 %v674, %v2303
        %2305 = vmatmul.bf16.gmra.mxu0 %v898
        %v2306 = vpop.f32.mrf.mxu0
        %v2307 = vadd.f32 %v674, %v2306
        %v2308 = vpop.f32.mrf.mxu0
        %v2309 = vadd.f32 %v674, %v2308
        %2310 = vmatmul.bf16.gmra.mxu0 %v906
        %v2311 = vpop.f32.mrf.mxu0
        %v2312 = vadd.f32 %v674, %v2311
        %v2313 = vpop.f32.mrf.mxu0
        %v2314 = vadd.f32 %v674, %v2313
        %2315 = vmatmul.bf16.gmra.mxu0 %v914
        %v2316 = vpop.f32.mrf.mxu0
        %v2317 = vadd.f32 %v674, %v2316
        %v2318 = vpop.f32.mrf.mxu0
        %v2319 = vadd.f32 %v674, %v2318
        %2320 = vmatmul.bf16.gmra.mxu0 %v922
        %v2321 = vpop.f32.mrf.mxu0
        %v2322 = vadd.f32 %v674, %v2321
        %v2323 = vpop.f32.mrf.mxu0
        %v2324 = vadd.f32 %v674, %v2323
        %2325 = vmatmul.bf16.gmra.mxu0 %v930
        %v2326 = vpop.f32.mrf.mxu0
        %v2327 = vadd.f32 %v674, %v2326
        %v2328 = vpop.f32.mrf.mxu0
        %v2329 = vadd.f32 %v674, %v2328
        %2330 = vdwg.mxu0
        %2331 = vmatpush.bf16.msra.mxu0 %v1830
        %2332 = vmatpush.bf16.msra.mxu0 %v1826
        %2333 = vmatpush.bf16.msra.mxu0 %v1822
        %2334 = vmatpush.bf16.msra.mxu0 %v1818
        %2335 = vmatpush.bf16.msra.mxu0 %v1814
        %2336 = vmatpush.bf16.msra.mxu0 %v1810
        %2337 = vmatpush.bf16.msra.mxu0 %v1806
        %2338 = vmatpush.bf16.msra.mxu0 %v1802
        %2339 = vmatmul.bf16.gmra.mxu0 %v875
        %v2340 = vpop.f32.mrf.mxu0
        %v2341 = vadd.f32 %v2292, %v2340
        %v2342 = vpop.f32.mrf.mxu0
        %v2343 = vadd.f32 %v2294, %v2342
        %2344 = vmatmul.bf16.gmra.mxu0 %v883
        %v2345 = vpop.f32.mrf.mxu0
        %v2346 = vadd.f32 %v2297, %v2345
        %v2347 = vpop.f32.mrf.mxu0
        %v2348 = vadd.f32 %v2299, %v2347
        %2349 = vmatmul.bf16.gmra.mxu0 %v891
        %v2350 = vpop.f32.mrf.mxu0
        %v2351 = vadd.f32 %v2302, %v2350
        %v2352 = vpop.f32.mrf.mxu0
        %v2353 = vadd.f32 %v2304, %v2352
        %2354 = vmatmul.bf16.gmra.mxu0 %v899
        %v2355 = vpop.f32.mrf.mxu0
        %v2356 = vadd.f32 %v2307, %v2355
        %v2357 = vpop.f32.mrf.mxu0
        %v2358 = vadd.f32 %v2309, %v2357
        %2359 = vmatmul.bf16.gmra.mxu0 %v907
        %v2360 = vpop.f32.mrf.mxu0
        %v2361 = vadd.f32 %v2312, %v2360
        %v2362 = vpop.f32.mrf.mxu0
        %v2363 = vadd.f32 %v2314, %v2362
        %2364 = vmatmul.bf16.gmra.mxu0 %v915
        %v2365 = vpop.f32.mrf.mxu0
        %v2366 = vadd.f32 %v2317, %v2365
        %v2367 = vpop.f32.mrf.mxu0
        %v2368 = vadd.f32 %v2319, %v2367
        %2369 = vmatmul.bf16.gmra.mxu0 %v923
        %v2370 = vpop.f32.mrf.mxu0
        %v2371 = vadd.f32 %v2322, %v2370
        %v2372 = vpop.f32.mrf.mxu0
        %v2373 = vadd.f32 %v2324, %v2372
        %2374 = vmatmul.bf16.gmra.mxu0 %v931
        %v2375 = vpop.f32.mrf.mxu0
        %v2376 = vadd.f32 %v2327, %v2375
        %v2377 = vpop.f32.mrf.mxu0
        %v2378 = vadd.f32 %v2329, %v2377
        %2379 = vdwg.mxu0
        %2380 = vmatpush.bf16.msra.mxu0 %v1862
        %2381 = vmatpush.bf16.msra.mxu0 %v1858
        %2382 = vmatpush.bf16.msra.mxu0 %v1854
        %2383 = vmatpush.bf16.msra.mxu0 %v1850
        %2384 = vmatpush.bf16.msra.mxu0 %v1846
        %2385 = vmatpush.bf16.msra.mxu0 %v1842
        %2386 = vmatpush.bf16.msra.mxu0 %v1838
        %2387 = vmatpush.bf16.msra.mxu0 %v1834
        %2388 = vmatmul.bf16.gmra.mxu0 %v876
        %v2389 = vpop.f32.mrf.mxu0
        %v2390 = vadd.f32 %v2341, %v2389
        %v2391 = vpop.f32.mrf.mxu0
        %v2392 = vadd.f32 %v2343, %v2391
        %2393 = vmatmul.bf16.gmra.mxu0 %v884
        %v2394 = vpop.f32.mrf.mxu0
        %v2395 = vadd.f32 %v2346, %v2394
        %v2396 = vpop.f32.mrf.mxu0
        %v2397 = vadd.f32 %v2348, %v2396
        %2398 = vmatmul.bf16.gmra.mxu0 %v892
        %v2399 = vpop.f32.mrf.mxu0
        %v2400 = vadd.f32 %v2351, %v2399
        %v2401 = vpop.f32.mrf.mxu0
        %v2402 = vadd.f32 %v2353, %v2401
        %2403 = vmatmul.bf16.gmra.mxu0 %v900
        %v2404 = vpop.f32.mrf.mxu0
        %v2405 = vadd.f32 %v2356, %v2404
        %v2406 = vpop.f32.mrf.mxu0
        %v2407 = vadd.f32 %v2358, %v2406
        %2408 = vmatmul.bf16.gmra.mxu0 %v908
        %v2409 = vpop.f32.mrf.mxu0
        %v2410 = vadd.f32 %v2361, %v2409
        %v2411 = vpop.f32.mrf.mxu0
        %v2412 = vadd.f32 %v2363, %v2411
        %2413 = vmatmul.bf16.gmra.mxu0 %v916
        %v2414 = vpop.f32.mrf.mxu0
        %v2415 = vadd.f32 %v2366, %v2414
        %v2416 = vpop.f32.mrf.mxu0
        %v2417 = vadd.f32 %v2368, %v2416
        %2418 = vmatmul.bf16.gmra.mxu0 %v924
        %v2419 = vpop.f32.mrf.mxu0
        %v2420 = vadd.f32 %v2371, %v2419
        %v2421 = vpop.f32.mrf.mxu0
        %v2422 = vadd.f32 %v2373, %v2421
        %2423 = vmatmul.bf16.gmra.mxu0 %v932
        %v2424 = vpop.f32.mrf.mxu0
        %v2425 = vadd.f32 %v2376, %v2424
        %v2426 = vpop.f32.mrf.mxu0
        %v2427 = vadd.f32 %v2378, %v2426
        %2428 = vdwg.mxu0
        %2429 = vmatpush.bf16.msra.mxu0 %v1894
        %2430 = vmatpush.bf16.msra.mxu0 %v1890
        %2431 = vmatpush.bf16.msra.mxu0 %v1886
        %2432 = vmatpush.bf16.msra.mxu0 %v1882
        %2433 = vmatpush.bf16.msra.mxu0 %v1878
        %2434 = vmatpush.bf16.msra.mxu0 %v1874
        %2435 = vmatpush.bf16.msra.mxu0 %v1870
        %2436 = vmatpush.bf16.msra.mxu0 %v1866
        %2437 = vmatmul.bf16.gmra.mxu0 %v877
        %v2438 = vpop.f32.mrf.mxu0
        %v2439 = vadd.f32 %v2390, %v2438
        %v2440 = vpop.f32.mrf.mxu0
        %v2441 = vadd.f32 %v2392, %v2440
        %2442 = vmatmul.bf16.gmra.mxu0 %v885
        %v2443 = vpop.f32.mrf.mxu0
        %v2444 = vadd.f32 %v2395, %v2443
        %v2445 = vpop.f32.mrf.mxu0
        %v2446 = vadd.f32 %v2397, %v2445
        %2447 = vmatmul.bf16.gmra.mxu0 %v893
        %v2448 = vpop.f32.mrf.mxu0
        %v2449 = vadd.f32 %v2400, %v2448
        %v2450 = vpop.f32.mrf.mxu0
        %v2451 = vadd.f32 %v2402, %v2450
        %2452 = vmatmul.bf16.gmra.mxu0 %v901
        %v2453 = vpop.f32.mrf.mxu0
        %v2454 = vadd.f32 %v2405, %v2453
        %v2455 = vpop.f32.mrf.mxu0
        %v2456 = vadd.f32 %v2407, %v2455
        %2457 = vmatmul.bf16.gmra.mxu0 %v909
        %v2458 = vpop.f32.mrf.mxu0
        %v2459 = vadd.f32 %v2410, %v2458
        %v2460 = vpop.f32.mrf.mxu0
        %v2461 = vadd.f32 %v2412, %v2460
        %2462 = vmatmul.bf16.gmra.mxu0 %v917
        %v2463 = vpop.f32.mrf.mxu0
        %v2464 = vadd.f32 %v2415, %v2463
        %v2465 = vpop.f32.mrf.mxu0
        %v2466 = vadd.f32 %v2417, %v2465
        %2467 = vmatmul.bf16.gmra.mxu0 %v925
        %v2468 = vpop.f32.mrf.mxu0
        %v2469 = vadd.f32 %v2420, %v2468
        %v2470 = vpop.f32.mrf.mxu0
        %v2471 = vadd.f32 %v2422, %v2470
        %2472 = vmatmul.bf16.gmra.mxu0 %v933
        %v2473 = vpop.f32.mrf.mxu0
        %v2474 = vadd.f32 %v2425, %v2473
        %v2475 = vpop.f32.mrf.mxu0
        %v2476 = vadd.f32 %v2427, %v2475
        %2477 = vdwg.mxu0
        %2478 = vmatpush.bf16.msra.mxu0 %v1926
        %2479 = vmatpush.bf16.msra.mxu0 %v1922
        %2480 = vmatpush.bf16.msra.mxu0 %v1918
        %2481 = vmatpush.bf16.msra.mxu0 %v1914
        %2482 = vmatpush.bf16.msra.mxu0 %v1910
        %2483 = vmatpush.bf16.msra.mxu0 %v1906
        %2484 = vmatpush.bf16.msra.mxu0 %v1902
        %2485 = vmatpush.bf16.msra.mxu0 %v1898
        %2486 = vmatmul.bf16.gmra.mxu0 %v878
        %v2487 = vpop.f32.mrf.mxu0
        %v2488 = vadd.f32 %v2439, %v2487
        %v2489 = vpop.f32.mrf.mxu0
        %v2490 = vadd.f32 %v2441, %v2489
        %2491 = vmatmul.bf16.gmra.mxu0 %v886
        %v2492 = vpop.f32.mrf.mxu0
        %v2493 = vadd.f32 %v2444, %v2492
        %v2494 = vpop.f32.mrf.mxu0
        %v2495 = vadd.f32 %v2446, %v2494
        %2496 = vmatmul.bf16.gmra.mxu0 %v894
        %v2497 = vpop.f32.mrf.mxu0
        %v2498 = vadd.f32 %v2449, %v2497
        %v2499 = vpop.f32.mrf.mxu0
        %v2500 = vadd.f32 %v2451, %v2499
        %2501 = vmatmul.bf16.gmra.mxu0 %v902
        %v2502 = vpop.f32.mrf.mxu0
        %v2503 = vadd.f32 %v2454, %v2502
        %v2504 = vpop.f32.mrf.mxu0
        %v2505 = vadd.f32 %v2456, %v2504
        %2506 = vmatmul.bf16.gmra.mxu0 %v910
        %v2507 = vpop.f32.mrf.mxu0
        %v2508 = vadd.f32 %v2459, %v2507
        %v2509 = vpop.f32.mrf.mxu0
        %v2510 = vadd.f32 %v2461, %v2509
        %2511 = vmatmul.bf16.gmra.mxu0 %v918
        %v2512 = vpop.f32.mrf.mxu0
        %v2513 = vadd.f32 %v2464, %v2512
        %v2514 = vpop.f32.mrf.mxu0
        %v2515 = vadd.f32 %v2466, %v2514
        %2516 = vmatmul.bf16.gmra.mxu0 %v926
        %v2517 = vpop.f32.mrf.mxu0
        %v2518 = vadd.f32 %v2469, %v2517
        %v2519 = vpop.f32.mrf.mxu0
        %v2520 = vadd.f32 %v2471, %v2519
        %2521 = vmatmul.bf16.gmra.mxu0 %v934
        %v2522 = vpop.f32.mrf.mxu0
        %v2523 = vadd.f32 %v2474, %v2522
        %v2524 = vpop.f32.mrf.mxu0
        %v2525 = vadd.f32 %v2476, %v2524
        %2526 = vdwg.mxu0
        %2527 = vmatpush.bf16.msra.mxu0 %v1958
        %2528 = vmatpush.bf16.msra.mxu0 %v1954
        %2529 = vmatpush.bf16.msra.mxu0 %v1950
        %2530 = vmatpush.bf16.msra.mxu0 %v1946
        %2531 = vmatpush.bf16.msra.mxu0 %v1942
        %2532 = vmatpush.bf16.msra.mxu0 %v1938
        %2533 = vmatpush.bf16.msra.mxu0 %v1934
        %2534 = vmatpush.bf16.msra.mxu0 %v1930
        %2535 = vmatmul.bf16.gmra.mxu0 %v879
        %v2536 = vpop.f32.mrf.mxu0
        %v2537 = vadd.f32 %v2488, %v2536
        %v2538 = vpop.f32.mrf.mxu0
        %v2539 = vadd.f32 %v2490, %v2538
        %2540 = vmatmul.bf16.gmra.mxu0 %v887
        %v2541 = vpop.f32.mrf.mxu0
        %v2542 = vadd.f32 %v2493, %v2541
        %v2543 = vpop.f32.mrf.mxu0
        %v2544 = vadd.f32 %v2495, %v2543
        %2545 = vmatmul.bf16.gmra.mxu0 %v895
        %v2546 = vpop.f32.mrf.mxu0
        %v2547 = vadd.f32 %v2498, %v2546
        %v2548 = vpop.f32.mrf.mxu0
        %v2549 = vadd.f32 %v2500, %v2548
        %2550 = vmatmul.bf16.gmra.mxu0 %v903
        %v2551 = vpop.f32.mrf.mxu0
        %v2552 = vadd.f32 %v2503, %v2551
        %v2553 = vpop.f32.mrf.mxu0
        %v2554 = vadd.f32 %v2505, %v2553
        %2555 = vmatmul.bf16.gmra.mxu0 %v911
        %v2556 = vpop.f32.mrf.mxu0
        %v2557 = vadd.f32 %v2508, %v2556
        %v2558 = vpop.f32.mrf.mxu0
        %v2559 = vadd.f32 %v2510, %v2558
        %2560 = vmatmul.bf16.gmra.mxu0 %v919
        %v2561 = vpop.f32.mrf.mxu0
        %v2562 = vadd.f32 %v2513, %v2561
        %v2563 = vpop.f32.mrf.mxu0
        %v2564 = vadd.f32 %v2515, %v2563
        %2565 = vmatmul.bf16.gmra.mxu0 %v927
        %v2566 = vpop.f32.mrf.mxu0
        %v2567 = vadd.f32 %v2518, %v2566
        %v2568 = vpop.f32.mrf.mxu0
        %v2569 = vadd.f32 %v2520, %v2568
        %2570 = vmatmul.bf16.gmra.mxu0 %v935
        %v2571 = vpop.f32.mrf.mxu0
        %v2572 = vadd.f32 %v2523, %v2571
        %v2573 = vpop.f32.mrf.mxu0
        %v2574 = vadd.f32 %v2525, %v2573
        %2575 = vdwg.mxu0
        %2576 = vmatpush.bf16.msra.mxu0 %v1990
        %2577 = vmatpush.bf16.msra.mxu0 %v1986
        %2578 = vmatpush.bf16.msra.mxu0 %v1982
        %2579 = vmatpush.bf16.msra.mxu0 %v1978
        %2580 = vmatpush.bf16.msra.mxu0 %v1974
        %2581 = vmatpush.bf16.msra.mxu0 %v1970
        %2582 = vmatpush.bf16.msra.mxu0 %v1966
        %2583 = vmatpush.bf16.msra.mxu0 %v1962
        %2584 = vmatmul.bf16.gmra.mxu0 %v880
        %v2585 = vpop.f32.mrf.mxu0
        %v2586 = vadd.f32 %v2537, %v2585
        %v2587 = vpop.f32.mrf.mxu0
        %v2588 = vadd.f32 %v2539, %v2587
        %2589 = vmatmul.bf16.gmra.mxu0 %v888
        %v2590 = vpop.f32.mrf.mxu0
        %v2591 = vadd.f32 %v2542, %v2590
        %v2592 = vpop.f32.mrf.mxu0
        %v2593 = vadd.f32 %v2544, %v2592
        %2594 = vmatmul.bf16.gmra.mxu0 %v896
        %v2595 = vpop.f32.mrf.mxu0
        %v2596 = vadd.f32 %v2547, %v2595
        %v2597 = vpop.f32.mrf.mxu0
        %v2598 = vadd.f32 %v2549, %v2597
        %2599 = vmatmul.bf16.gmra.mxu0 %v904
        %v2600 = vpop.f32.mrf.mxu0
        %v2601 = vadd.f32 %v2552, %v2600
        %v2602 = vpop.f32.mrf.mxu0
        %v2603 = vadd.f32 %v2554, %v2602
        %2604 = vmatmul.bf16.gmra.mxu0 %v912
        %v2605 = vpop.f32.mrf.mxu0
        %v2606 = vadd.f32 %v2557, %v2605
        %v2607 = vpop.f32.mrf.mxu0
        %v2608 = vadd.f32 %v2559, %v2607
        %2609 = vmatmul.bf16.gmra.mxu0 %v920
        %v2610 = vpop.f32.mrf.mxu0
        %v2611 = vadd.f32 %v2562, %v2610
        %v2612 = vpop.f32.mrf.mxu0
        %v2613 = vadd.f32 %v2564, %v2612
        %2614 = vmatmul.bf16.gmra.mxu0 %v928
        %v2615 = vpop.f32.mrf.mxu0
        %v2616 = vadd.f32 %v2567, %v2615
        %v2617 = vpop.f32.mrf.mxu0
        %v2618 = vadd.f32 %v2569, %v2617
        %2619 = vmatmul.bf16.gmra.mxu0 %v936
        %v2620 = vpop.f32.mrf.mxu0
        %v2621 = vadd.f32 %v2572, %v2620
        %v2622 = vpop.f32.mrf.mxu0
        %v2623 = vadd.f32 %v2574, %v2622
        %2624 = vdwg.mxu0
        %2625 = vmatpush.bf16.msra.mxu0 %v2022
        %2626 = vmatpush.bf16.msra.mxu0 %v2018
        %2627 = vmatpush.bf16.msra.mxu0 %v2014
        %2628 = vmatpush.bf16.msra.mxu0 %v2010
        %2629 = vmatpush.bf16.msra.mxu0 %v2006
        %2630 = vmatpush.bf16.msra.mxu0 %v2002
        %2631 = vmatpush.bf16.msra.mxu0 %v1998
        %2632 = vmatpush.bf16.msra.mxu0 %v1994
        %2633 = vmatmul.bf16.gmra.mxu0 %v881
        %v2634 = vpop.f32.mrf.mxu0
        %v2635 = vadd.f32 %v2586, %v2634
        %v2636 = vpop.f32.mrf.mxu0
        %v2637 = vadd.f32 %v2588, %v2636
        %2638 = vmatmul.bf16.gmra.mxu0 %v889
        %v2639 = vpop.f32.mrf.mxu0
        %v2640 = vadd.f32 %v2591, %v2639
        %v2641 = vpop.f32.mrf.mxu0
        %v2642 = vadd.f32 %v2593, %v2641
        %2643 = vmatmul.bf16.gmra.mxu0 %v897
        %v2644 = vpop.f32.mrf.mxu0
        %v2645 = vadd.f32 %v2596, %v2644
        %v2646 = vpop.f32.mrf.mxu0
        %v2647 = vadd.f32 %v2598, %v2646
        %2648 = vmatmul.bf16.gmra.mxu0 %v905
        %v2649 = vpop.f32.mrf.mxu0
        %v2650 = vadd.f32 %v2601, %v2649
        %v2651 = vpop.f32.mrf.mxu0
        %v2652 = vadd.f32 %v2603, %v2651
        %2653 = vmatmul.bf16.gmra.mxu0 %v913
        %v2654 = vpop.f32.mrf.mxu0
        %v2655 = vadd.f32 %v2606, %v2654
        %v2656 = vpop.f32.mrf.mxu0
        %v2657 = vadd.f32 %v2608, %v2656
        %2658 = vmatmul.bf16.gmra.mxu0 %v921
        %v2659 = vpop.f32.mrf.mxu0
        %v2660 = vadd.f32 %v2611, %v2659
        %v2661 = vpop.f32.mrf.mxu0
        %v2662 = vadd.f32 %v2613, %v2661
        %2663 = vmatmul.bf16.gmra.mxu0 %v929
        %v2664 = vpop.f32.mrf.mxu0
        %v2665 = vadd.f32 %v2616, %v2664
        %v2666 = vpop.f32.mrf.mxu0
        %v2667 = vadd.f32 %v2618, %v2666
        %2668 = vmatmul.bf16.gmra.mxu0 %v937
        %v2669 = vpop.f32.mrf.mxu0
        %v2670 = vadd.f32 %v2621, %v2669
        %v2671 = vpop.f32.mrf.mxu0
        %v2672 = vadd.f32 %v2623, %v2671
        %2673 = vdwg.mxu0
        %2674 = vmatpush.bf16.msra.mxu0 %v1799
        %2675 = vmatpush.bf16.msra.mxu0 %v1795
        %2676 = vmatpush.bf16.msra.mxu0 %v1791
        %2677 = vmatpush.bf16.msra.mxu0 %v1787
        %2678 = vmatpush.bf16.msra.mxu0 %v1783
        %2679 = vmatpush.bf16.msra.mxu0 %v1779
        %2680 = vmatpush.bf16.msra.mxu0 %v1775
        %2681 = vmatpush.bf16.msra.mxu0 %v1771
        %2682 = vmatmul.bf16.gmra.mxu0 %v874
        %v2683 = vpop.f32.mrf.mxu0
        %v2684 = vadd.f32 %v675, %v2683
        %v2685 = vpop.f32.mrf.mxu0
        %v2686 = vadd.f32 %v675, %v2685
        %2687 = vmatmul.bf16.gmra.mxu0 %v882
        %v2688 = vpop.f32.mrf.mxu0
        %v2689 = vadd.f32 %v675, %v2688
        %v2690 = vpop.f32.mrf.mxu0
        %v2691 = vadd.f32 %v675, %v2690
        %2692 = vmatmul.bf16.gmra.mxu0 %v890
        %v2693 = vpop.f32.mrf.mxu0
        %v2694 = vadd.f32 %v675, %v2693
        %v2695 = vpop.f32.mrf.mxu0
        %v2696 = vadd.f32 %v675, %v2695
        %2697 = vmatmul.bf16.gmra.mxu0 %v898
        %v2698 = vpop.f32.mrf.mxu0
        %v2699 = vadd.f32 %v675, %v2698
        %v2700 = vpop.f32.mrf.mxu0
        %v2701 = vadd.f32 %v675, %v2700
        %2702 = vmatmul.bf16.gmra.mxu0 %v906
        %v2703 = vpop.f32.mrf.mxu0
        %v2704 = vadd.f32 %v675, %v2703
        %v2705 = vpop.f32.mrf.mxu0
        %v2706 = vadd.f32 %v675, %v2705
        %2707 = vmatmul.bf16.gmra.mxu0 %v914
        %v2708 = vpop.f32.mrf.mxu0
        %v2709 = vadd.f32 %v675, %v2708
        %v2710 = vpop.f32.mrf.mxu0
        %v2711 = vadd.f32 %v675, %v2710
        %2712 = vmatmul.bf16.gmra.mxu0 %v922
        %v2713 = vpop.f32.mrf.mxu0
        %v2714 = vadd.f32 %v675, %v2713
        %v2715 = vpop.f32.mrf.mxu0
        %v2716 = vadd.f32 %v675, %v2715
        %2717 = vmatmul.bf16.gmra.mxu0 %v930
        %v2718 = vpop.f32.mrf.mxu0
        %v2719 = vadd.f32 %v675, %v2718
        %v2720 = vpop.f32.mrf.mxu0
        %v2721 = vadd.f32 %v675, %v2720
        %2722 = vdwg.mxu0
        %2723 = vmatpush.bf16.msra.mxu0 %v1831
        %2724 = vmatpush.bf16.msra.mxu0 %v1827
        %2725 = vmatpush.bf16.msra.mxu0 %v1823
        %2726 = vmatpush.bf16.msra.mxu0 %v1819
        %2727 = vmatpush.bf16.msra.mxu0 %v1815
        %2728 = vmatpush.bf16.msra.mxu0 %v1811
        %2729 = vmatpush.bf16.msra.mxu0 %v1807
        %2730 = vmatpush.bf16.msra.mxu0 %v1803
        %2731 = vmatmul.bf16.gmra.mxu0 %v875
        %v2732 = vpop.f32.mrf.mxu0
        %v2733 = vadd.f32 %v2684, %v2732
        %v2734 = vpop.f32.mrf.mxu0
        %v2735 = vadd.f32 %v2686, %v2734
        %2736 = vmatmul.bf16.gmra.mxu0 %v883
        %v2737 = vpop.f32.mrf.mxu0
        %v2738 = vadd.f32 %v2689, %v2737
        %v2739 = vpop.f32.mrf.mxu0
        %v2740 = vadd.f32 %v2691, %v2739
        %2741 = vmatmul.bf16.gmra.mxu0 %v891
        %v2742 = vpop.f32.mrf.mxu0
        %v2743 = vadd.f32 %v2694, %v2742
        %v2744 = vpop.f32.mrf.mxu0
        %v2745 = vadd.f32 %v2696, %v2744
        %2746 = vmatmul.bf16.gmra.mxu0 %v899
        %v2747 = vpop.f32.mrf.mxu0
        %v2748 = vadd.f32 %v2699, %v2747
        %v2749 = vpop.f32.mrf.mxu0
        %v2750 = vadd.f32 %v2701, %v2749
        %2751 = vmatmul.bf16.gmra.mxu0 %v907
        %v2752 = vpop.f32.mrf.mxu0
        %v2753 = vadd.f32 %v2704, %v2752
        %v2754 = vpop.f32.mrf.mxu0
        %v2755 = vadd.f32 %v2706, %v2754
        %2756 = vmatmul.bf16.gmra.mxu0 %v915
        %v2757 = vpop.f32.mrf.mxu0
        %v2758 = vadd.f32 %v2709, %v2757
        %v2759 = vpop.f32.mrf.mxu0
        %v2760 = vadd.f32 %v2711, %v2759
        %2761 = vmatmul.bf16.gmra.mxu0 %v923
        %v2762 = vpop.f32.mrf.mxu0
        %v2763 = vadd.f32 %v2714, %v2762
        %v2764 = vpop.f32.mrf.mxu0
        %v2765 = vadd.f32 %v2716, %v2764
        %2766 = vmatmul.bf16.gmra.mxu0 %v931
        %v2767 = vpop.f32.mrf.mxu0
        %v2768 = vadd.f32 %v2719, %v2767
        %v2769 = vpop.f32.mrf.mxu0
        %v2770 = vadd.f32 %v2721, %v2769
        %2771 = vdwg.mxu0
        %2772 = vmatpush.bf16.msra.mxu0 %v1863
        %2773 = vmatpush.bf16.msra.mxu0 %v1859
        %2774 = vmatpush.bf16.msra.mxu0 %v1855
        %2775 = vmatpush.bf16.msra.mxu0 %v1851
        %2776 = vmatpush.bf16.msra.mxu0 %v1847
        %2777 = vmatpush.bf16.msra.mxu0 %v1843
        %2778 = vmatpush.bf16.msra.mxu0 %v1839
        %2779 = vmatpush.bf16.msra.mxu0 %v1835
        %2780 = vmatmul.bf16.gmra.mxu0 %v876
        %v2781 = vpop.f32.mrf.mxu0
        %v2782 = vadd.f32 %v2733, %v2781
        %v2783 = vpop.f32.mrf.mxu0
        %v2784 = vadd.f32 %v2735, %v2783
        %2785 = vmatmul.bf16.gmra.mxu0 %v884
        %v2786 = vpop.f32.mrf.mxu0
        %v2787 = vadd.f32 %v2738, %v2786
        %v2788 = vpop.f32.mrf.mxu0
        %v2789 = vadd.f32 %v2740, %v2788
        %2790 = vmatmul.bf16.gmra.mxu0 %v892
        %v2791 = vpop.f32.mrf.mxu0
        %v2792 = vadd.f32 %v2743, %v2791
        %v2793 = vpop.f32.mrf.mxu0
        %v2794 = vadd.f32 %v2745, %v2793
        %2795 = vmatmul.bf16.gmra.mxu0 %v900
        %v2796 = vpop.f32.mrf.mxu0
        %v2797 = vadd.f32 %v2748, %v2796
        %v2798 = vpop.f32.mrf.mxu0
        %v2799 = vadd.f32 %v2750, %v2798
        %2800 = vmatmul.bf16.gmra.mxu0 %v908
        %v2801 = vpop.f32.mrf.mxu0
        %v2802 = vadd.f32 %v2753, %v2801
        %v2803 = vpop.f32.mrf.mxu0
        %v2804 = vadd.f32 %v2755, %v2803
        %2805 = vmatmul.bf16.gmra.mxu0 %v916
        %v2806 = vpop.f32.mrf.mxu0
        %v2807 = vadd.f32 %v2758, %v2806
        %v2808 = vpop.f32.mrf.mxu0
        %v2809 = vadd.f32 %v2760, %v2808
        %2810 = vmatmul.bf16.gmra.mxu0 %v924
        %v2811 = vpop.f32.mrf.mxu0
        %v2812 = vadd.f32 %v2763, %v2811
        %v2813 = vpop.f32.mrf.mxu0
        %v2814 = vadd.f32 %v2765, %v2813
        %2815 = vmatmul.bf16.gmra.mxu0 %v932
        %v2816 = vpop.f32.mrf.mxu0
        %v2817 = vadd.f32 %v2768, %v2816
        %v2818 = vpop.f32.mrf.mxu0
        %v2819 = vadd.f32 %v2770, %v2818
        %2820 = vdwg.mxu0
        %2821 = vmatpush.bf16.msra.mxu0 %v1895
        %2822 = vmatpush.bf16.msra.mxu0 %v1891
        %2823 = vmatpush.bf16.msra.mxu0 %v1887
        %2824 = vmatpush.bf16.msra.mxu0 %v1883
        %2825 = vmatpush.bf16.msra.mxu0 %v1879
        %2826 = vmatpush.bf16.msra.mxu0 %v1875
        %2827 = vmatpush.bf16.msra.mxu0 %v1871
        %2828 = vmatpush.bf16.msra.mxu0 %v1867
        %2829 = vmatmul.bf16.gmra.mxu0 %v877
        %v2830 = vpop.f32.mrf.mxu0
        %v2831 = vadd.f32 %v2782, %v2830
        %v2832 = vpop.f32.mrf.mxu0
        %v2833 = vadd.f32 %v2784, %v2832
        %2834 = vmatmul.bf16.gmra.mxu0 %v885
        %v2835 = vpop.f32.mrf.mxu0
        %v2836 = vadd.f32 %v2787, %v2835
        %v2837 = vpop.f32.mrf.mxu0
        %v2838 = vadd.f32 %v2789, %v2837
        %2839 = vmatmul.bf16.gmra.mxu0 %v893
        %v2840 = vpop.f32.mrf.mxu0
        %v2841 = vadd.f32 %v2792, %v2840
        %v2842 = vpop.f32.mrf.mxu0
        %v2843 = vadd.f32 %v2794, %v2842
        %2844 = vmatmul.bf16.gmra.mxu0 %v901
        %v2845 = vpop.f32.mrf.mxu0
        %v2846 = vadd.f32 %v2797, %v2845
        %v2847 = vpop.f32.mrf.mxu0
        %v2848 = vadd.f32 %v2799, %v2847
        %2849 = vmatmul.bf16.gmra.mxu0 %v909
        %v2850 = vpop.f32.mrf.mxu0
        %v2851 = vadd.f32 %v2802, %v2850
        %v2852 = vpop.f32.mrf.mxu0
        %v2853 = vadd.f32 %v2804, %v2852
        %2854 = vmatmul.bf16.gmra.mxu0 %v917
        %v2855 = vpop.f32.mrf.mxu0
        %v2856 = vadd.f32 %v2807, %v2855
        %v2857 = vpop.f32.mrf.mxu0
        %v2858 = vadd.f32 %v2809, %v2857
        %2859 = vmatmul.bf16.gmra.mxu0 %v925
        %v2860 = vpop.f32.mrf.mxu0
        %v2861 = vadd.f32 %v2812, %v2860
        %v2862 = vpop.f32.mrf.mxu0
        %v2863 = vadd.f32 %v2814, %v2862
        %2864 = vmatmul.bf16.gmra.mxu0 %v933
        %v2865 = vpop.f32.mrf.mxu0
        %v2866 = vadd.f32 %v2817, %v2865
        %v2867 = vpop.f32.mrf.mxu0
        %v2868 = vadd.f32 %v2819, %v2867
        %2869 = vdwg.mxu0
        %2870 = vmatpush.bf16.msra.mxu0 %v1927
        %2871 = vmatpush.bf16.msra.mxu0 %v1923
        %2872 = vmatpush.bf16.msra.mxu0 %v1919
        %2873 = vmatpush.bf16.msra.mxu0 %v1915
        %2874 = vmatpush.bf16.msra.mxu0 %v1911
        %2875 = vmatpush.bf16.msra.mxu0 %v1907
        %2876 = vmatpush.bf16.msra.mxu0 %v1903
        %2877 = vmatpush.bf16.msra.mxu0 %v1899
        %2878 = vmatmul.bf16.gmra.mxu0 %v878
        %v2879 = vpop.f32.mrf.mxu0
        %v2880 = vadd.f32 %v2831, %v2879
        %v2881 = vpop.f32.mrf.mxu0
        %v2882 = vadd.f32 %v2833, %v2881
        %2883 = vmatmul.bf16.gmra.mxu0 %v886
        %v2884 = vpop.f32.mrf.mxu0
        %v2885 = vadd.f32 %v2836, %v2884
        %v2886 = vpop.f32.mrf.mxu0
        %v2887 = vadd.f32 %v2838, %v2886
        %2888 = vmatmul.bf16.gmra.mxu0 %v894
        %v2889 = vpop.f32.mrf.mxu0
        %v2890 = vadd.f32 %v2841, %v2889
        %v2891 = vpop.f32.mrf.mxu0
        %v2892 = vadd.f32 %v2843, %v2891
        %2893 = vmatmul.bf16.gmra.mxu0 %v902
        %v2894 = vpop.f32.mrf.mxu0
        %v2895 = vadd.f32 %v2846, %v2894
        %v2896 = vpop.f32.mrf.mxu0
        %v2897 = vadd.f32 %v2848, %v2896
        %2898 = vmatmul.bf16.gmra.mxu0 %v910
        %v2899 = vpop.f32.mrf.mxu0
        %v2900 = vadd.f32 %v2851, %v2899
        %v2901 = vpop.f32.mrf.mxu0
        %v2902 = vadd.f32 %v2853, %v2901
        %2903 = vmatmul.bf16.gmra.mxu0 %v918
        %v2904 = vpop.f32.mrf.mxu0
        %v2905 = vadd.f32 %v2856, %v2904
        %v2906 = vpop.f32.mrf.mxu0
        %v2907 = vadd.f32 %v2858, %v2906
        %2908 = vmatmul.bf16.gmra.mxu0 %v926
        %v2909 = vpop.f32.mrf.mxu0
        %v2910 = vadd.f32 %v2861, %v2909
        %v2911 = vpop.f32.mrf.mxu0
        %v2912 = vadd.f32 %v2863, %v2911
        %2913 = vmatmul.bf16.gmra.mxu0 %v934
        %v2914 = vpop.f32.mrf.mxu0
        %v2915 = vadd.f32 %v2866, %v2914
        %v2916 = vpop.f32.mrf.mxu0
        %v2917 = vadd.f32 %v2868, %v2916
        %2918 = vdwg.mxu0
        %2919 = vmatpush.bf16.msra.mxu0 %v1959
        %2920 = vmatpush.bf16.msra.mxu0 %v1955
        %2921 = vmatpush.bf16.msra.mxu0 %v1951
        %2922 = vmatpush.bf16.msra.mxu0 %v1947
        %2923 = vmatpush.bf16.msra.mxu0 %v1943
        %2924 = vmatpush.bf16.msra.mxu0 %v1939
        %2925 = vmatpush.bf16.msra.mxu0 %v1935
        %2926 = vmatpush.bf16.msra.mxu0 %v1931
        %2927 = vmatmul.bf16.gmra.mxu0 %v879
        %v2928 = vpop.f32.mrf.mxu0
        %v2929 = vadd.f32 %v2880, %v2928
        %v2930 = vpop.f32.mrf.mxu0
        %v2931 = vadd.f32 %v2882, %v2930
        %2932 = vmatmul.bf16.gmra.mxu0 %v887
        %v2933 = vpop.f32.mrf.mxu0
        %v2934 = vadd.f32 %v2885, %v2933
        %v2935 = vpop.f32.mrf.mxu0
        %v2936 = vadd.f32 %v2887, %v2935
        %2937 = vmatmul.bf16.gmra.mxu0 %v895
        %v2938 = vpop.f32.mrf.mxu0
        %v2939 = vadd.f32 %v2890, %v2938
        %v2940 = vpop.f32.mrf.mxu0
        %v2941 = vadd.f32 %v2892, %v2940
        %2942 = vmatmul.bf16.gmra.mxu0 %v903
        %v2943 = vpop.f32.mrf.mxu0
        %v2944 = vadd.f32 %v2895, %v2943
        %v2945 = vpop.f32.mrf.mxu0
        %v2946 = vadd.f32 %v2897, %v2945
        %2947 = vmatmul.bf16.gmra.mxu0 %v911
        %v2948 = vpop.f32.mrf.mxu0
        %v2949 = vadd.f32 %v2900, %v2948
        %v2950 = vpop.f32.mrf.mxu0
        %v2951 = vadd.f32 %v2902, %v2950
        %2952 = vmatmul.bf16.gmra.mxu0 %v919
        %v2953 = vpop.f32.mrf.mxu0
        %v2954 = vadd.f32 %v2905, %v2953
        %v2955 = vpop.f32.mrf.mxu0
        %v2956 = vadd.f32 %v2907, %v2955
        %2957 = vmatmul.bf16.gmra.mxu0 %v927
        %v2958 = vpop.f32.mrf.mxu0
        %v2959 = vadd.f32 %v2910, %v2958
        %v2960 = vpop.f32.mrf.mxu0
        %v2961 = vadd.f32 %v2912, %v2960
        %2962 = vmatmul.bf16.gmra.mxu0 %v935
        %v2963 = vpop.f32.mrf.mxu0
        %v2964 = vadd.f32 %v2915, %v2963
        %v2965 = vpop.f32.mrf.mxu0
        %v2966 = vadd.f32 %v2917, %v2965
        %2967 = vdwg.mxu0
        %2968 = vmatpush.bf16.msra.mxu0 %v1991
        %2969 = vmatpush.bf16.msra.mxu0 %v1987
        %2970 = vmatpush.bf16.msra.mxu0 %v1983
        %2971 = vmatpush.bf16.msra.mxu0 %v1979
        %2972 = vmatpush.bf16.msra.mxu0 %v1975
        %2973 = vmatpush.bf16.msra.mxu0 %v1971
        %2974 = vmatpush.bf16.msra.mxu0 %v1967
        %2975 = vmatpush.bf16.msra.mxu0 %v1963
        %2976 = vmatmul.bf16.gmra.mxu0 %v880
        %v2977 = vpop.f32.mrf.mxu0
        %v2978 = vadd.f32 %v2929, %v2977
        %v2979 = vpop.f32.mrf.mxu0
        %v2980 = vadd.f32 %v2931, %v2979
        %2981 = vmatmul.bf16.gmra.mxu0 %v888
        %v2982 = vpop.f32.mrf.mxu0
        %v2983 = vadd.f32 %v2934, %v2982
        %v2984 = vpop.f32.mrf.mxu0
        %v2985 = vadd.f32 %v2936, %v2984
        %2986 = vmatmul.bf16.gmra.mxu0 %v896
        %v2987 = vpop.f32.mrf.mxu0
        %v2988 = vadd.f32 %v2939, %v2987
        %v2989 = vpop.f32.mrf.mxu0
        %v2990 = vadd.f32 %v2941, %v2989
        %2991 = vmatmul.bf16.gmra.mxu0 %v904
        %v2992 = vpop.f32.mrf.mxu0
        %v2993 = vadd.f32 %v2944, %v2992
        %v2994 = vpop.f32.mrf.mxu0
        %v2995 = vadd.f32 %v2946, %v2994
        %2996 = vmatmul.bf16.gmra.mxu0 %v912
        %v2997 = vpop.f32.mrf.mxu0
        %v2998 = vadd.f32 %v2949, %v2997
        %v2999 = vpop.f32.mrf.mxu0
        %v3000 = vadd.f32 %v2951, %v2999
        %3001 = vmatmul.bf16.gmra.mxu0 %v920
        %v3002 = vpop.f32.mrf.mxu0
        %v3003 = vadd.f32 %v2954, %v3002
        %v3004 = vpop.f32.mrf.mxu0
        %v3005 = vadd.f32 %v2956, %v3004
        %3006 = vmatmul.bf16.gmra.mxu0 %v928
        %v3007 = vpop.f32.mrf.mxu0
        %v3008 = vadd.f32 %v2959, %v3007
        %v3009 = vpop.f32.mrf.mxu0
        %v3010 = vadd.f32 %v2961, %v3009
        %3011 = vmatmul.bf16.gmra.mxu0 %v936
        %v3012 = vpop.f32.mrf.mxu0
        %v3013 = vadd.f32 %v2964, %v3012
        %v3014 = vpop.f32.mrf.mxu0
        %v3015 = vadd.f32 %v2966, %v3014
        %3016 = vdwg.mxu0
        %3017 = vmatpush.bf16.msra.mxu0 %v2023
        %3018 = vmatpush.bf16.msra.mxu0 %v2019
        %3019 = vmatpush.bf16.msra.mxu0 %v2015
        %3020 = vmatpush.bf16.msra.mxu0 %v2011
        %3021 = vmatpush.bf16.msra.mxu0 %v2007
        %3022 = vmatpush.bf16.msra.mxu0 %v2003
        %3023 = vmatpush.bf16.msra.mxu0 %v1999
        %3024 = vmatpush.bf16.msra.mxu0 %v1995
        %3025 = vmatmul.bf16.gmra.mxu0 %v881
        %v3026 = vpop.f32.mrf.mxu0
        %v3027 = vadd.f32 %v2978, %v3026
        %v3028 = vpop.f32.mrf.mxu0
        %v3029 = vadd.f32 %v2980, %v3028
        %3030 = vmatmul.bf16.gmra.mxu0 %v889
        %v3031 = vpop.f32.mrf.mxu0
        %v3032 = vadd.f32 %v2983, %v3031
        %v3033 = vpop.f32.mrf.mxu0
        %v3034 = vadd.f32 %v2985, %v3033
        %3035 = vmatmul.bf16.gmra.mxu0 %v897
        %v3036 = vpop.f32.mrf.mxu0
        %v3037 = vadd.f32 %v2988, %v3036
        %v3038 = vpop.f32.mrf.mxu0
        %v3039 = vadd.f32 %v2990, %v3038
        %3040 = vmatmul.bf16.gmra.mxu0 %v905
        %v3041 = vpop.f32.mrf.mxu0
        %v3042 = vadd.f32 %v2993, %v3041
        %v3043 = vpop.f32.mrf.mxu0
        %v3044 = vadd.f32 %v2995, %v3043
        %3045 = vmatmul.bf16.gmra.mxu0 %v913
        %v3046 = vpop.f32.mrf.mxu0
        %v3047 = vadd.f32 %v2998, %v3046
        %v3048 = vpop.f32.mrf.mxu0
        %v3049 = vadd.f32 %v3000, %v3048
        %3050 = vmatmul.bf16.gmra.mxu0 %v921
        %v3051 = vpop.f32.mrf.mxu0
        %v3052 = vadd.f32 %v3003, %v3051
        %v3053 = vpop.f32.mrf.mxu0
        %v3054 = vadd.f32 %v3005, %v3053
        %3055 = vmatmul.bf16.gmra.mxu0 %v929
        %v3056 = vpop.f32.mrf.mxu0
        %v3057 = vadd.f32 %v3008, %v3056
        %v3058 = vpop.f32.mrf.mxu0
        %v3059 = vadd.f32 %v3010, %v3058
        %3060 = vmatmul.bf16.gmra.mxu0 %v937
        %v3061 = vpop.f32.mrf.mxu0
        %v3062 = vadd.f32 %v3013, %v3061
        %v3063 = vpop.f32.mrf.mxu0
        %v3064 = vadd.f32 %v3015, %v3063
        %3065 = vdwg.mxu0
        %3066 = vmatpush.bf16.msra.mxu0 %v1800
        %3067 = vmatpush.bf16.msra.mxu0 %v1796
        %3068 = vmatpush.bf16.msra.mxu0 %v1792
        %3069 = vmatpush.bf16.msra.mxu0 %v1788
        %3070 = vmatpush.bf16.msra.mxu0 %v1784
        %3071 = vmatpush.bf16.msra.mxu0 %v1780
        %3072 = vmatpush.bf16.msra.mxu0 %v1776
        %3073 = vmatpush.bf16.msra.mxu0 %v1772
        %3074 = vmatmul.bf16.gmra.mxu0 %v874
        %v3075 = vpop.f32.mrf.mxu0
        %v3076 = vadd.f32 %v676, %v3075
        %v3077 = vpop.f32.mrf.mxu0
        %v3078 = vadd.f32 %v676, %v3077
        %3079 = vmatmul.bf16.gmra.mxu0 %v882
        %v3080 = vpop.f32.mrf.mxu0
        %v3081 = vadd.f32 %v676, %v3080
        %v3082 = vpop.f32.mrf.mxu0
        %v3083 = vadd.f32 %v676, %v3082
        %3084 = vmatmul.bf16.gmra.mxu0 %v890
        %v3085 = vpop.f32.mrf.mxu0
        %v3086 = vadd.f32 %v676, %v3085
        %v3087 = vpop.f32.mrf.mxu0
        %v3088 = vadd.f32 %v676, %v3087
        %3089 = vmatmul.bf16.gmra.mxu0 %v898
        %v3090 = vpop.f32.mrf.mxu0
        %v3091 = vadd.f32 %v676, %v3090
        %v3092 = vpop.f32.mrf.mxu0
        %v3093 = vadd.f32 %v676, %v3092
        %3094 = vmatmul.bf16.gmra.mxu0 %v906
        %v3095 = vpop.f32.mrf.mxu0
        %v3096 = vadd.f32 %v676, %v3095
        %v3097 = vpop.f32.mrf.mxu0
        %v3098 = vadd.f32 %v676, %v3097
        %3099 = vmatmul.bf16.gmra.mxu0 %v914
        %v3100 = vpop.f32.mrf.mxu0
        %v3101 = vadd.f32 %v676, %v3100
        %v3102 = vpop.f32.mrf.mxu0
        %v3103 = vadd.f32 %v676, %v3102
        %3104 = vmatmul.bf16.gmra.mxu0 %v922
        %v3105 = vpop.f32.mrf.mxu0
        %v3106 = vadd.f32 %v676, %v3105
        %v3107 = vpop.f32.mrf.mxu0
        %v3108 = vadd.f32 %v676, %v3107
        %3109 = vmatmul.bf16.gmra.mxu0 %v930
        %v3110 = vpop.f32.mrf.mxu0
        %v3111 = vadd.f32 %v676, %v3110
        %v3112 = vpop.f32.mrf.mxu0
        %v3113 = vadd.f32 %v676, %v3112
        %3114 = vdwg.mxu0
        %3115 = vmatpush.bf16.msra.mxu0 %v1832
        %3116 = vmatpush.bf16.msra.mxu0 %v1828
        %3117 = vmatpush.bf16.msra.mxu0 %v1824
        %3118 = vmatpush.bf16.msra.mxu0 %v1820
        %3119 = vmatpush.bf16.msra.mxu0 %v1816
        %3120 = vmatpush.bf16.msra.mxu0 %v1812
        %3121 = vmatpush.bf16.msra.mxu0 %v1808
        %3122 = vmatpush.bf16.msra.mxu0 %v1804
        %3123 = vmatmul.bf16.gmra.mxu0 %v875
        %v3124 = vpop.f32.mrf.mxu0
        %v3125 = vadd.f32 %v3076, %v3124
        %v3126 = vpop.f32.mrf.mxu0
        %v3127 = vadd.f32 %v3078, %v3126
        %3128 = vmatmul.bf16.gmra.mxu0 %v883
        %v3129 = vpop.f32.mrf.mxu0
        %v3130 = vadd.f32 %v3081, %v3129
        %v3131 = vpop.f32.mrf.mxu0
        %v3132 = vadd.f32 %v3083, %v3131
        %3133 = vmatmul.bf16.gmra.mxu0 %v891
        %v3134 = vpop.f32.mrf.mxu0
        %v3135 = vadd.f32 %v3086, %v3134
        %v3136 = vpop.f32.mrf.mxu0
        %v3137 = vadd.f32 %v3088, %v3136
        %3138 = vmatmul.bf16.gmra.mxu0 %v899
        %v3139 = vpop.f32.mrf.mxu0
        %v3140 = vadd.f32 %v3091, %v3139
        %v3141 = vpop.f32.mrf.mxu0
        %v3142 = vadd.f32 %v3093, %v3141
        %3143 = vmatmul.bf16.gmra.mxu0 %v907
        %v3144 = vpop.f32.mrf.mxu0
        %v3145 = vadd.f32 %v3096, %v3144
        %v3146 = vpop.f32.mrf.mxu0
        %v3147 = vadd.f32 %v3098, %v3146
        %3148 = vmatmul.bf16.gmra.mxu0 %v915
        %v3149 = vpop.f32.mrf.mxu0
        %v3150 = vadd.f32 %v3101, %v3149
        %v3151 = vpop.f32.mrf.mxu0
        %v3152 = vadd.f32 %v3103, %v3151
        %3153 = vmatmul.bf16.gmra.mxu0 %v923
        %v3154 = vpop.f32.mrf.mxu0
        %v3155 = vadd.f32 %v3106, %v3154
        %v3156 = vpop.f32.mrf.mxu0
        %v3157 = vadd.f32 %v3108, %v3156
        %3158 = vmatmul.bf16.gmra.mxu0 %v931
        %v3159 = vpop.f32.mrf.mxu0
        %v3160 = vadd.f32 %v3111, %v3159
        %v3161 = vpop.f32.mrf.mxu0
        %v3162 = vadd.f32 %v3113, %v3161
        %3163 = vdwg.mxu0
        %3164 = vmatpush.bf16.msra.mxu0 %v1864
        %3165 = vmatpush.bf16.msra.mxu0 %v1860
        %3166 = vmatpush.bf16.msra.mxu0 %v1856
        %3167 = vmatpush.bf16.msra.mxu0 %v1852
        %3168 = vmatpush.bf16.msra.mxu0 %v1848
        %3169 = vmatpush.bf16.msra.mxu0 %v1844
        %3170 = vmatpush.bf16.msra.mxu0 %v1840
        %3171 = vmatpush.bf16.msra.mxu0 %v1836
        %3172 = vmatmul.bf16.gmra.mxu0 %v876
        %v3173 = vpop.f32.mrf.mxu0
        %v3174 = vadd.f32 %v3125, %v3173
        %v3175 = vpop.f32.mrf.mxu0
        %v3176 = vadd.f32 %v3127, %v3175
        %3177 = vmatmul.bf16.gmra.mxu0 %v884
        %v3178 = vpop.f32.mrf.mxu0
        %v3179 = vadd.f32 %v3130, %v3178
        %v3180 = vpop.f32.mrf.mxu0
        %v3181 = vadd.f32 %v3132, %v3180
        %3182 = vmatmul.bf16.gmra.mxu0 %v892
        %v3183 = vpop.f32.mrf.mxu0
        %v3184 = vadd.f32 %v3135, %v3183
        %v3185 = vpop.f32.mrf.mxu0
        %v3186 = vadd.f32 %v3137, %v3185
        %3187 = vmatmul.bf16.gmra.mxu0 %v900
        %v3188 = vpop.f32.mrf.mxu0
        %v3189 = vadd.f32 %v3140, %v3188
        %v3190 = vpop.f32.mrf.mxu0
        %v3191 = vadd.f32 %v3142, %v3190
        %3192 = vmatmul.bf16.gmra.mxu0 %v908
        %v3193 = vpop.f32.mrf.mxu0
        %v3194 = vadd.f32 %v3145, %v3193
        %v3195 = vpop.f32.mrf.mxu0
        %v3196 = vadd.f32 %v3147, %v3195
        %3197 = vmatmul.bf16.gmra.mxu0 %v916
        %v3198 = vpop.f32.mrf.mxu0
        %v3199 = vadd.f32 %v3150, %v3198
        %v3200 = vpop.f32.mrf.mxu0
        %v3201 = vadd.f32 %v3152, %v3200
        %3202 = vmatmul.bf16.gmra.mxu0 %v924
        %v3203 = vpop.f32.mrf.mxu0
        %v3204 = vadd.f32 %v3155, %v3203
        %v3205 = vpop.f32.mrf.mxu0
        %v3206 = vadd.f32 %v3157, %v3205
        %3207 = vmatmul.bf16.gmra.mxu0 %v932
        %v3208 = vpop.f32.mrf.mxu0
        %v3209 = vadd.f32 %v3160, %v3208
        %v3210 = vpop.f32.mrf.mxu0
        %v3211 = vadd.f32 %v3162, %v3210
        %3212 = vdwg.mxu0
        %3213 = vmatpush.bf16.msra.mxu0 %v1896
        %3214 = vmatpush.bf16.msra.mxu0 %v1892
        %3215 = vmatpush.bf16.msra.mxu0 %v1888
        %3216 = vmatpush.bf16.msra.mxu0 %v1884
        %3217 = vmatpush.bf16.msra.mxu0 %v1880
        %3218 = vmatpush.bf16.msra.mxu0 %v1876
        %3219 = vmatpush.bf16.msra.mxu0 %v1872
        %3220 = vmatpush.bf16.msra.mxu0 %v1868
        %3221 = vmatmul.bf16.gmra.mxu0 %v877
        %v3222 = vpop.f32.mrf.mxu0
        %v3223 = vadd.f32 %v3174, %v3222
        %v3224 = vpop.f32.mrf.mxu0
        %v3225 = vadd.f32 %v3176, %v3224
        %3226 = vmatmul.bf16.gmra.mxu0 %v885
        %v3227 = vpop.f32.mrf.mxu0
        %v3228 = vadd.f32 %v3179, %v3227
        %v3229 = vpop.f32.mrf.mxu0
        %v3230 = vadd.f32 %v3181, %v3229
        %3231 = vmatmul.bf16.gmra.mxu0 %v893
        %v3232 = vpop.f32.mrf.mxu0
        %v3233 = vadd.f32 %v3184, %v3232
        %v3234 = vpop.f32.mrf.mxu0
        %v3235 = vadd.f32 %v3186, %v3234
        %3236 = vmatmul.bf16.gmra.mxu0 %v901
        %v3237 = vpop.f32.mrf.mxu0
        %v3238 = vadd.f32 %v3189, %v3237
        %v3239 = vpop.f32.mrf.mxu0
        %v3240 = vadd.f32 %v3191, %v3239
        %3241 = vmatmul.bf16.gmra.mxu0 %v909
        %v3242 = vpop.f32.mrf.mxu0
        %v3243 = vadd.f32 %v3194, %v3242
        %v3244 = vpop.f32.mrf.mxu0
        %v3245 = vadd.f32 %v3196, %v3244
        %3246 = vmatmul.bf16.gmra.mxu0 %v917
        %v3247 = vpop.f32.mrf.mxu0
        %v3248 = vadd.f32 %v3199, %v3247
        %v3249 = vpop.f32.mrf.mxu0
        %v3250 = vadd.f32 %v3201, %v3249
        %3251 = vmatmul.bf16.gmra.mxu0 %v925
        %v3252 = vpop.f32.mrf.mxu0
        %v3253 = vadd.f32 %v3204, %v3252
        %v3254 = vpop.f32.mrf.mxu0
        %v3255 = vadd.f32 %v3206, %v3254
        %3256 = vmatmul.bf16.gmra.mxu0 %v933
        %v3257 = vpop.f32.mrf.mxu0
        %v3258 = vadd.f32 %v3209, %v3257
        %v3259 = vpop.f32.mrf.mxu0
        %v3260 = vadd.f32 %v3211, %v3259
        %3261 = vdwg.mxu0
        %3262 = vmatpush.bf16.msra.mxu0 %v1928
        %3263 = vmatpush.bf16.msra.mxu0 %v1924
        %3264 = vmatpush.bf16.msra.mxu0 %v1920
        %3265 = vmatpush.bf16.msra.mxu0 %v1916
        %3266 = vmatpush.bf16.msra.mxu0 %v1912
        %3267 = vmatpush.bf16.msra.mxu0 %v1908
        %3268 = vmatpush.bf16.msra.mxu0 %v1904
        %3269 = vmatpush.bf16.msra.mxu0 %v1900
        %3270 = vmatmul.bf16.gmra.mxu0 %v878
        %v3271 = vpop.f32.mrf.mxu0
        %v3272 = vadd.f32 %v3223, %v3271
        %v3273 = vpop.f32.mrf.mxu0
        %v3274 = vadd.f32 %v3225, %v3273
        %3275 = vmatmul.bf16.gmra.mxu0 %v886
        %v3276 = vpop.f32.mrf.mxu0
        %v3277 = vadd.f32 %v3228, %v3276
        %v3278 = vpop.f32.mrf.mxu0
        %v3279 = vadd.f32 %v3230, %v3278
        %3280 = vmatmul.bf16.gmra.mxu0 %v894
        %v3281 = vpop.f32.mrf.mxu0
        %v3282 = vadd.f32 %v3233, %v3281
        %v3283 = vpop.f32.mrf.mxu0
        %v3284 = vadd.f32 %v3235, %v3283
        %3285 = vmatmul.bf16.gmra.mxu0 %v902
        %v3286 = vpop.f32.mrf.mxu0
        %v3287 = vadd.f32 %v3238, %v3286
        %v3288 = vpop.f32.mrf.mxu0
        %v3289 = vadd.f32 %v3240, %v3288
        %3290 = vmatmul.bf16.gmra.mxu0 %v910
        %v3291 = vpop.f32.mrf.mxu0
        %v3292 = vadd.f32 %v3243, %v3291
        %v3293 = vpop.f32.mrf.mxu0
        %v3294 = vadd.f32 %v3245, %v3293
        %3295 = vmatmul.bf16.gmra.mxu0 %v918
        %v3296 = vpop.f32.mrf.mxu0
        %v3297 = vadd.f32 %v3248, %v3296
        %v3298 = vpop.f32.mrf.mxu0
        %v3299 = vadd.f32 %v3250, %v3298
        %3300 = vmatmul.bf16.gmra.mxu0 %v926
        %v3301 = vpop.f32.mrf.mxu0
        %v3302 = vadd.f32 %v3253, %v3301
        %v3303 = vpop.f32.mrf.mxu0
        %v3304 = vadd.f32 %v3255, %v3303
        %3305 = vmatmul.bf16.gmra.mxu0 %v934
        %v3306 = vpop.f32.mrf.mxu0
        %v3307 = vadd.f32 %v3258, %v3306
        %v3308 = vpop.f32.mrf.mxu0
        %v3309 = vadd.f32 %v3260, %v3308
        %3310 = vdwg.mxu0
        %3311 = vmatpush.bf16.msra.mxu0 %v1960
        %3312 = vmatpush.bf16.msra.mxu0 %v1956
        %3313 = vmatpush.bf16.msra.mxu0 %v1952
        %3314 = vmatpush.bf16.msra.mxu0 %v1948
        %3315 = vmatpush.bf16.msra.mxu0 %v1944
        %3316 = vmatpush.bf16.msra.mxu0 %v1940
        %3317 = vmatpush.bf16.msra.mxu0 %v1936
        %3318 = vmatpush.bf16.msra.mxu0 %v1932
        %3319 = vmatmul.bf16.gmra.mxu0 %v879
        %v3320 = vpop.f32.mrf.mxu0
        %v3321 = vadd.f32 %v3272, %v3320
        %v3322 = vpop.f32.mrf.mxu0
        %v3323 = vadd.f32 %v3274, %v3322
        %3324 = vmatmul.bf16.gmra.mxu0 %v887
        %v3325 = vpop.f32.mrf.mxu0
        %v3326 = vadd.f32 %v3277, %v3325
        %v3327 = vpop.f32.mrf.mxu0
        %v3328 = vadd.f32 %v3279, %v3327
        %3329 = vmatmul.bf16.gmra.mxu0 %v895
        %v3330 = vpop.f32.mrf.mxu0
        %v3331 = vadd.f32 %v3282, %v3330
        %v3332 = vpop.f32.mrf.mxu0
        %v3333 = vadd.f32 %v3284, %v3332
        %3334 = vmatmul.bf16.gmra.mxu0 %v903
        %v3335 = vpop.f32.mrf.mxu0
        %v3336 = vadd.f32 %v3287, %v3335
        %v3337 = vpop.f32.mrf.mxu0
        %v3338 = vadd.f32 %v3289, %v3337
        %3339 = vmatmul.bf16.gmra.mxu0 %v911
        %v3340 = vpop.f32.mrf.mxu0
        %v3341 = vadd.f32 %v3292, %v3340
        %v3342 = vpop.f32.mrf.mxu0
        %v3343 = vadd.f32 %v3294, %v3342
        %3344 = vmatmul.bf16.gmra.mxu0 %v919
        %v3345 = vpop.f32.mrf.mxu0
        %v3346 = vadd.f32 %v3297, %v3345
        %v3347 = vpop.f32.mrf.mxu0
        %v3348 = vadd.f32 %v3299, %v3347
        %3349 = vmatmul.bf16.gmra.mxu0 %v927
        %v3350 = vpop.f32.mrf.mxu0
        %v3351 = vadd.f32 %v3302, %v3350
        %v3352 = vpop.f32.mrf.mxu0
        %v3353 = vadd.f32 %v3304, %v3352
        %3354 = vmatmul.bf16.gmra.mxu0 %v935
        %v3355 = vpop.f32.mrf.mxu0
        %v3356 = vadd.f32 %v3307, %v3355
        %v3357 = vpop.f32.mrf.mxu0
        %v3358 = vadd.f32 %v3309, %v3357
        %3359 = vdwg.mxu0
        %3360 = vmatpush.bf16.msra.mxu0 %v1992
        %3361 = vmatpush.bf16.msra.mxu0 %v1988
        %3362 = vmatpush.bf16.msra.mxu0 %v1984
        %3363 = vmatpush.bf16.msra.mxu0 %v1980
        %3364 = vmatpush.bf16.msra.mxu0 %v1976
        %3365 = vmatpush.bf16.msra.mxu0 %v1972
        %3366 = vmatpush.bf16.msra.mxu0 %v1968
        %3367 = vmatpush.bf16.msra.mxu0 %v1964
        %3368 = vmatmul.bf16.gmra.mxu0 %v880
        %v3369 = vpop.f32.mrf.mxu0
        %v3370 = vadd.f32 %v3321, %v3369
        %v3371 = vpop.f32.mrf.mxu0
        %v3372 = vadd.f32 %v3323, %v3371
        %3373 = vmatmul.bf16.gmra.mxu0 %v888
        %v3374 = vpop.f32.mrf.mxu0
        %v3375 = vadd.f32 %v3326, %v3374
        %v3376 = vpop.f32.mrf.mxu0
        %v3377 = vadd.f32 %v3328, %v3376
        %3378 = vmatmul.bf16.gmra.mxu0 %v896
        %v3379 = vpop.f32.mrf.mxu0
        %v3380 = vadd.f32 %v3331, %v3379
        %v3381 = vpop.f32.mrf.mxu0
        %v3382 = vadd.f32 %v3333, %v3381
        %3383 = vmatmul.bf16.gmra.mxu0 %v904
        %v3384 = vpop.f32.mrf.mxu0
        %v3385 = vadd.f32 %v3336, %v3384
        %v3386 = vpop.f32.mrf.mxu0
        %v3387 = vadd.f32 %v3338, %v3386
        %3388 = vmatmul.bf16.gmra.mxu0 %v912
        %v3389 = vpop.f32.mrf.mxu0
        %v3390 = vadd.f32 %v3341, %v3389
        %v3391 = vpop.f32.mrf.mxu0
        %v3392 = vadd.f32 %v3343, %v3391
        %3393 = vmatmul.bf16.gmra.mxu0 %v920
        %v3394 = vpop.f32.mrf.mxu0
        %v3395 = vadd.f32 %v3346, %v3394
        %v3396 = vpop.f32.mrf.mxu0
        %v3397 = vadd.f32 %v3348, %v3396
        %3398 = vmatmul.bf16.gmra.mxu0 %v928
        %v3399 = vpop.f32.mrf.mxu0
        %v3400 = vadd.f32 %v3351, %v3399
        %v3401 = vpop.f32.mrf.mxu0
        %v3402 = vadd.f32 %v3353, %v3401
        %3403 = vmatmul.bf16.gmra.mxu0 %v936
        %v3404 = vpop.f32.mrf.mxu0
        %v3405 = vadd.f32 %v3356, %v3404
        %v3406 = vpop.f32.mrf.mxu0
        %v3407 = vadd.f32 %v3358, %v3406
        %3408 = vdwg.mxu0
        %3409 = vmatpush.bf16.msra.mxu0 %v2024
        %3410 = vmatpush.bf16.msra.mxu0 %v2020
        %3411 = vmatpush.bf16.msra.mxu0 %v2016
        %3412 = vmatpush.bf16.msra.mxu0 %v2012
        %3413 = vmatpush.bf16.msra.mxu0 %v2008
        %3414 = vmatpush.bf16.msra.mxu0 %v2004
        %3415 = vmatpush.bf16.msra.mxu0 %v2000
        %3416 = vmatpush.bf16.msra.mxu0 %v1996
        %3417 = vmatmul.bf16.gmra.mxu0 %v881
        %v3418 = vpop.f32.mrf.mxu0
        %v3419 = vadd.f32 %v3370, %v3418
        %v3420 = vpop.f32.mrf.mxu0
        %v3421 = vadd.f32 %v3372, %v3420
        %3422 = vmatmul.bf16.gmra.mxu0 %v889
        %v3423 = vpop.f32.mrf.mxu0
        %v3424 = vadd.f32 %v3375, %v3423
        %v3425 = vpop.f32.mrf.mxu0
        %v3426 = vadd.f32 %v3377, %v3425
        %3427 = vmatmul.bf16.gmra.mxu0 %v897
        %v3428 = vpop.f32.mrf.mxu0
        %v3429 = vadd.f32 %v3380, %v3428
        %v3430 = vpop.f32.mrf.mxu0
        %v3431 = vadd.f32 %v3382, %v3430
        %3432 = vmatmul.bf16.gmra.mxu0 %v905
        %v3433 = vpop.f32.mrf.mxu0
        %v3434 = vadd.f32 %v3385, %v3433
        %v3435 = vpop.f32.mrf.mxu0
        %v3436 = vadd.f32 %v3387, %v3435
        %3437 = vmatmul.bf16.gmra.mxu0 %v913
        %v3438 = vpop.f32.mrf.mxu0
        %v3439 = vadd.f32 %v3390, %v3438
        %v3440 = vpop.f32.mrf.mxu0
        %v3441 = vadd.f32 %v3392, %v3440
        %3442 = vmatmul.bf16.gmra.mxu0 %v921
        %v3443 = vpop.f32.mrf.mxu0
        %v3444 = vadd.f32 %v3395, %v3443
        %v3445 = vpop.f32.mrf.mxu0
        %v3446 = vadd.f32 %v3397, %v3445
        %3447 = vmatmul.bf16.gmra.mxu0 %v929
        %v3448 = vpop.f32.mrf.mxu0
        %v3449 = vadd.f32 %v3400, %v3448
        %v3450 = vpop.f32.mrf.mxu0
        %v3451 = vadd.f32 %v3402, %v3450
        %3452 = vmatmul.bf16.gmra.mxu0 %v937
        %v3453 = vpop.f32.mrf.mxu0
        %v3454 = vadd.f32 %v3405, %v3453
        %v3455 = vpop.f32.mrf.mxu0
        %v3456 = vadd.f32 %v3407, %v3455
        %3457 = vdwg.mxu0
        %3458 = vmatpush.bf16.msra.mxu0 %v1801
        %3459 = vmatpush.bf16.msra.mxu0 %v1797
        %3460 = vmatpush.bf16.msra.mxu0 %v1793
        %3461 = vmatpush.bf16.msra.mxu0 %v1789
        %3462 = vmatpush.bf16.msra.mxu0 %v1785
        %3463 = vmatpush.bf16.msra.mxu0 %v1781
        %3464 = vmatpush.bf16.msra.mxu0 %v1777
        %3465 = vmatpush.bf16.msra.mxu0 %v1773
        %3466 = vmatmul.bf16.gmra.mxu0 %v874
        %v3467 = vpop.f32.mrf.mxu0
        %v3468 = vadd.f32 %v677, %v3467
        %v3469 = vpop.f32.mrf.mxu0
        %v3470 = vadd.f32 %v677, %v3469
        %3471 = vmatmul.bf16.gmra.mxu0 %v882
        %v3472 = vpop.f32.mrf.mxu0
        %v3473 = vadd.f32 %v677, %v3472
        %v3474 = vpop.f32.mrf.mxu0
        %v3475 = vadd.f32 %v677, %v3474
        %3476 = vmatmul.bf16.gmra.mxu0 %v890
        %v3477 = vpop.f32.mrf.mxu0
        %v3478 = vadd.f32 %v677, %v3477
        %v3479 = vpop.f32.mrf.mxu0
        %v3480 = vadd.f32 %v677, %v3479
        %3481 = vmatmul.bf16.gmra.mxu0 %v898
        %v3482 = vpop.f32.mrf.mxu0
        %v3483 = vadd.f32 %v677, %v3482
        %v3484 = vpop.f32.mrf.mxu0
        %v3485 = vadd.f32 %v677, %v3484
        %3486 = vmatmul.bf16.gmra.mxu0 %v906
        %v3487 = vpop.f32.mrf.mxu0
        %v3488 = vadd.f32 %v677, %v3487
        %v3489 = vpop.f32.mrf.mxu0
        %v3490 = vadd.f32 %v677, %v3489
        %3491 = vmatmul.bf16.gmra.mxu0 %v914
        %v3492 = vpop.f32.mrf.mxu0
        %v3493 = vadd.f32 %v677, %v3492
        %v3494 = vpop.f32.mrf.mxu0
        %v3495 = vadd.f32 %v677, %v3494
        %3496 = vmatmul.bf16.gmra.mxu0 %v922
        %v3497 = vpop.f32.mrf.mxu0
        %v3498 = vadd.f32 %v677, %v3497
        %v3499 = vpop.f32.mrf.mxu0
        %v3500 = vadd.f32 %v677, %v3499
        %3501 = vmatmul.bf16.gmra.mxu0 %v930
        %v3502 = vpop.f32.mrf.mxu0
        %v3503 = vadd.f32 %v677, %v3502
        %v3504 = vpop.f32.mrf.mxu0
        %v3505 = vadd.f32 %v677, %v3504
        %3506 = vdwg.mxu0
        %3507 = vmatpush.bf16.msra.mxu0 %v1833
        %3508 = vmatpush.bf16.msra.mxu0 %v1829
        %3509 = vmatpush.bf16.msra.mxu0 %v1825
        %3510 = vmatpush.bf16.msra.mxu0 %v1821
        %3511 = vmatpush.bf16.msra.mxu0 %v1817
        %3512 = vmatpush.bf16.msra.mxu0 %v1813
        %3513 = vmatpush.bf16.msra.mxu0 %v1809
        %3514 = vmatpush.bf16.msra.mxu0 %v1805
        %3515 = vmatmul.bf16.gmra.mxu0 %v875
        %v3516 = vpop.f32.mrf.mxu0
        %v3517 = vadd.f32 %v3468, %v3516
        %v3518 = vpop.f32.mrf.mxu0
        %v3519 = vadd.f32 %v3470, %v3518
        %3520 = vmatmul.bf16.gmra.mxu0 %v883
        %v3521 = vpop.f32.mrf.mxu0
        %v3522 = vadd.f32 %v3473, %v3521
        %v3523 = vpop.f32.mrf.mxu0
        %v3524 = vadd.f32 %v3475, %v3523
        %3525 = vmatmul.bf16.gmra.mxu0 %v891
        %v3526 = vpop.f32.mrf.mxu0
        %v3527 = vadd.f32 %v3478, %v3526
        %v3528 = vpop.f32.mrf.mxu0
        %v3529 = vadd.f32 %v3480, %v3528
        %3530 = vmatmul.bf16.gmra.mxu0 %v899
        %v3531 = vpop.f32.mrf.mxu0
        %v3532 = vadd.f32 %v3483, %v3531
        %v3533 = vpop.f32.mrf.mxu0
        %v3534 = vadd.f32 %v3485, %v3533
        %3535 = vmatmul.bf16.gmra.mxu0 %v907
        %v3536 = vpop.f32.mrf.mxu0
        %v3537 = vadd.f32 %v3488, %v3536
        %v3538 = vpop.f32.mrf.mxu0
        %v3539 = vadd.f32 %v3490, %v3538
        %3540 = vmatmul.bf16.gmra.mxu0 %v915
        %v3541 = vpop.f32.mrf.mxu0
        %v3542 = vadd.f32 %v3493, %v3541
        %v3543 = vpop.f32.mrf.mxu0
        %v3544 = vadd.f32 %v3495, %v3543
        %3545 = vmatmul.bf16.gmra.mxu0 %v923
        %v3546 = vpop.f32.mrf.mxu0
        %v3547 = vadd.f32 %v3498, %v3546
        %v3548 = vpop.f32.mrf.mxu0
        %v3549 = vadd.f32 %v3500, %v3548
        %3550 = vmatmul.bf16.gmra.mxu0 %v931
        %v3551 = vpop.f32.mrf.mxu0
        %v3552 = vadd.f32 %v3503, %v3551
        %v3553 = vpop.f32.mrf.mxu0
        %v3554 = vadd.f32 %v3505, %v3553
        %3555 = vdwg.mxu0
        %3556 = vmatpush.bf16.msra.mxu0 %v1865
        %3557 = vmatpush.bf16.msra.mxu0 %v1861
        %3558 = vmatpush.bf16.msra.mxu0 %v1857
        %3559 = vmatpush.bf16.msra.mxu0 %v1853
        %3560 = vmatpush.bf16.msra.mxu0 %v1849
        %3561 = vmatpush.bf16.msra.mxu0 %v1845
        %3562 = vmatpush.bf16.msra.mxu0 %v1841
        %3563 = vmatpush.bf16.msra.mxu0 %v1837
        %3564 = vmatmul.bf16.gmra.mxu0 %v876
        %v3565 = vpop.f32.mrf.mxu0
        %v3566 = vadd.f32 %v3517, %v3565
        %v3567 = vpop.f32.mrf.mxu0
        %v3568 = vadd.f32 %v3519, %v3567
        %3569 = vmatmul.bf16.gmra.mxu0 %v884
        %v3570 = vpop.f32.mrf.mxu0
        %v3571 = vadd.f32 %v3522, %v3570
        %v3572 = vpop.f32.mrf.mxu0
        %v3573 = vadd.f32 %v3524, %v3572
        %3574 = vmatmul.bf16.gmra.mxu0 %v892
        %v3575 = vpop.f32.mrf.mxu0
        %v3576 = vadd.f32 %v3527, %v3575
        %v3577 = vpop.f32.mrf.mxu0
        %v3578 = vadd.f32 %v3529, %v3577
        %3579 = vmatmul.bf16.gmra.mxu0 %v900
        %v3580 = vpop.f32.mrf.mxu0
        %v3581 = vadd.f32 %v3532, %v3580
        %v3582 = vpop.f32.mrf.mxu0
        %v3583 = vadd.f32 %v3534, %v3582
        %3584 = vmatmul.bf16.gmra.mxu0 %v908
        %v3585 = vpop.f32.mrf.mxu0
        %v3586 = vadd.f32 %v3537, %v3585
        %v3587 = vpop.f32.mrf.mxu0
        %v3588 = vadd.f32 %v3539, %v3587
        %3589 = vmatmul.bf16.gmra.mxu0 %v916
        %v3590 = vpop.f32.mrf.mxu0
        %v3591 = vadd.f32 %v3542, %v3590
        %v3592 = vpop.f32.mrf.mxu0
        %v3593 = vadd.f32 %v3544, %v3592
        %3594 = vmatmul.bf16.gmra.mxu0 %v924
        %v3595 = vpop.f32.mrf.mxu0
        %v3596 = vadd.f32 %v3547, %v3595
        %v3597 = vpop.f32.mrf.mxu0
        %v3598 = vadd.f32 %v3549, %v3597
        %3599 = vmatmul.bf16.gmra.mxu0 %v932
        %v3600 = vpop.f32.mrf.mxu0
        %v3601 = vadd.f32 %v3552, %v3600
        %v3602 = vpop.f32.mrf.mxu0
        %v3603 = vadd.f32 %v3554, %v3602
        %3604 = vdwg.mxu0
        %3605 = vmatpush.bf16.msra.mxu0 %v1897
        %3606 = vmatpush.bf16.msra.mxu0 %v1893
        %3607 = vmatpush.bf16.msra.mxu0 %v1889
        %3608 = vmatpush.bf16.msra.mxu0 %v1885
        %3609 = vmatpush.bf16.msra.mxu0 %v1881
        %3610 = vmatpush.bf16.msra.mxu0 %v1877
        %3611 = vmatpush.bf16.msra.mxu0 %v1873
        %3612 = vmatpush.bf16.msra.mxu0 %v1869
        %3613 = vmatmul.bf16.gmra.mxu0 %v877
        %v3614 = vpop.f32.mrf.mxu0
        %v3615 = vadd.f32 %v3566, %v3614
        %v3616 = vpop.f32.mrf.mxu0
        %v3617 = vadd.f32 %v3568, %v3616
        %3618 = vmatmul.bf16.gmra.mxu0 %v885
        %v3619 = vpop.f32.mrf.mxu0
        %v3620 = vadd.f32 %v3571, %v3619
        %v3621 = vpop.f32.mrf.mxu0
        %v3622 = vadd.f32 %v3573, %v3621
        %3623 = vmatmul.bf16.gmra.mxu0 %v893
        %v3624 = vpop.f32.mrf.mxu0
        %v3625 = vadd.f32 %v3576, %v3624
        %v3626 = vpop.f32.mrf.mxu0
        %v3627 = vadd.f32 %v3578, %v3626
        %3628 = vmatmul.bf16.gmra.mxu0 %v901
        %v3629 = vpop.f32.mrf.mxu0
        %v3630 = vadd.f32 %v3581, %v3629
        %v3631 = vpop.f32.mrf.mxu0
        %v3632 = vadd.f32 %v3583, %v3631
        %3633 = vmatmul.bf16.gmra.mxu0 %v909
        %v3634 = vpop.f32.mrf.mxu0
        %v3635 = vadd.f32 %v3586, %v3634
        %v3636 = vpop.f32.mrf.mxu0
        %v3637 = vadd.f32 %v3588, %v3636
        %3638 = vmatmul.bf16.gmra.mxu0 %v917
        %v3639 = vpop.f32.mrf.mxu0
        %v3640 = vadd.f32 %v3591, %v3639
        %v3641 = vpop.f32.mrf.mxu0
        %v3642 = vadd.f32 %v3593, %v3641
        %3643 = vmatmul.bf16.gmra.mxu0 %v925
        %v3644 = vpop.f32.mrf.mxu0
        %v3645 = vadd.f32 %v3596, %v3644
        %v3646 = vpop.f32.mrf.mxu0
        %v3647 = vadd.f32 %v3598, %v3646
        %3648 = vmatmul.bf16.gmra.mxu0 %v933
        %v3649 = vpop.f32.mrf.mxu0
        %v3650 = vadd.f32 %v3601, %v3649
        %v3651 = vpop.f32.mrf.mxu0
        %v3652 = vadd.f32 %v3603, %v3651
        %3653 = vdwg.mxu0
        %3654 = vmatpush.bf16.msra.mxu0 %v1929
        %3655 = vmatpush.bf16.msra.mxu0 %v1925
        %3656 = vmatpush.bf16.msra.mxu0 %v1921
        %3657 = vmatpush.bf16.msra.mxu0 %v1917
        %3658 = vmatpush.bf16.msra.mxu0 %v1913
        %3659 = vmatpush.bf16.msra.mxu0 %v1909
        %3660 = vmatpush.bf16.msra.mxu0 %v1905
        %3661 = vmatpush.bf16.msra.mxu0 %v1901
        %3662 = vmatmul.bf16.gmra.mxu0 %v878
        %v3663 = vpop.f32.mrf.mxu0
        %v3664 = vadd.f32 %v3615, %v3663
        %v3665 = vpop.f32.mrf.mxu0
        %v3666 = vadd.f32 %v3617, %v3665
        %3667 = vmatmul.bf16.gmra.mxu0 %v886
        %v3668 = vpop.f32.mrf.mxu0
        %v3669 = vadd.f32 %v3620, %v3668
        %v3670 = vpop.f32.mrf.mxu0
        %v3671 = vadd.f32 %v3622, %v3670
        %3672 = vmatmul.bf16.gmra.mxu0 %v894
        %v3673 = vpop.f32.mrf.mxu0
        %v3674 = vadd.f32 %v3625, %v3673
        %v3675 = vpop.f32.mrf.mxu0
        %v3676 = vadd.f32 %v3627, %v3675
        %3677 = vmatmul.bf16.gmra.mxu0 %v902
        %v3678 = vpop.f32.mrf.mxu0
        %v3679 = vadd.f32 %v3630, %v3678
        %v3680 = vpop.f32.mrf.mxu0
        %v3681 = vadd.f32 %v3632, %v3680
        %3682 = vmatmul.bf16.gmra.mxu0 %v910
        %v3683 = vpop.f32.mrf.mxu0
        %v3684 = vadd.f32 %v3635, %v3683
        %v3685 = vpop.f32.mrf.mxu0
        %v3686 = vadd.f32 %v3637, %v3685
        %3687 = vmatmul.bf16.gmra.mxu0 %v918
        %v3688 = vpop.f32.mrf.mxu0
        %v3689 = vadd.f32 %v3640, %v3688
        %v3690 = vpop.f32.mrf.mxu0
        %v3691 = vadd.f32 %v3642, %v3690
        %3692 = vmatmul.bf16.gmra.mxu0 %v926
        %v3693 = vpop.f32.mrf.mxu0
        %v3694 = vadd.f32 %v3645, %v3693
        %v3695 = vpop.f32.mrf.mxu0
        %v3696 = vadd.f32 %v3647, %v3695
        %3697 = vmatmul.bf16.gmra.mxu0 %v934
        %v3698 = vpop.f32.mrf.mxu0
        %v3699 = vadd.f32 %v3650, %v3698
        %v3700 = vpop.f32.mrf.mxu0
        %v3701 = vadd.f32 %v3652, %v3700
        %3702 = vdwg.mxu0
        %3703 = vmatpush.bf16.msra.mxu0 %v1961
        %3704 = vmatpush.bf16.msra.mxu0 %v1957
        %3705 = vmatpush.bf16.msra.mxu0 %v1953
        %3706 = vmatpush.bf16.msra.mxu0 %v1949
        %3707 = vmatpush.bf16.msra.mxu0 %v1945
        %3708 = vmatpush.bf16.msra.mxu0 %v1941
        %3709 = vmatpush.bf16.msra.mxu0 %v1937
        %3710 = vmatpush.bf16.msra.mxu0 %v1933
        %3711 = vmatmul.bf16.gmra.mxu0 %v879
        %v3712 = vpop.f32.mrf.mxu0
        %v3713 = vadd.f32 %v3664, %v3712
        %v3714 = vpop.f32.mrf.mxu0
        %v3715 = vadd.f32 %v3666, %v3714
        %3716 = vmatmul.bf16.gmra.mxu0 %v887
        %v3717 = vpop.f32.mrf.mxu0
        %v3718 = vadd.f32 %v3669, %v3717
        %v3719 = vpop.f32.mrf.mxu0
        %v3720 = vadd.f32 %v3671, %v3719
        %3721 = vmatmul.bf16.gmra.mxu0 %v895
        %v3722 = vpop.f32.mrf.mxu0
        %v3723 = vadd.f32 %v3674, %v3722
        %v3724 = vpop.f32.mrf.mxu0
        %v3725 = vadd.f32 %v3676, %v3724
        %3726 = vmatmul.bf16.gmra.mxu0 %v903
        %v3727 = vpop.f32.mrf.mxu0
        %v3728 = vadd.f32 %v3679, %v3727
        %v3729 = vpop.f32.mrf.mxu0
        %v3730 = vadd.f32 %v3681, %v3729
        %3731 = vmatmul.bf16.gmra.mxu0 %v911
        %v3732 = vpop.f32.mrf.mxu0
        %v3733 = vadd.f32 %v3684, %v3732
        %v3734 = vpop.f32.mrf.mxu0
        %v3735 = vadd.f32 %v3686, %v3734
        %3736 = vmatmul.bf16.gmra.mxu0 %v919
        %v3737 = vpop.f32.mrf.mxu0
        %v3738 = vadd.f32 %v3689, %v3737
        %v3739 = vpop.f32.mrf.mxu0
        %v3740 = vadd.f32 %v3691, %v3739
        %3741 = vmatmul.bf16.gmra.mxu0 %v927
        %v3742 = vpop.f32.mrf.mxu0
        %v3743 = vadd.f32 %v3694, %v3742
        %v3744 = vpop.f32.mrf.mxu0
        %v3745 = vadd.f32 %v3696, %v3744
        %3746 = vmatmul.bf16.gmra.mxu0 %v935
        %v3747 = vpop.f32.mrf.mxu0
        %v3748 = vadd.f32 %v3699, %v3747
        %v3749 = vpop.f32.mrf.mxu0
        %v3750 = vadd.f32 %v3701, %v3749
        %3751 = vdwg.mxu0
        %3752 = vmatpush.bf16.msra.mxu0 %v1993
        %3753 = vmatpush.bf16.msra.mxu0 %v1989
        %3754 = vmatpush.bf16.msra.mxu0 %v1985
        %3755 = vmatpush.bf16.msra.mxu0 %v1981
        %3756 = vmatpush.bf16.msra.mxu0 %v1977
        %3757 = vmatpush.bf16.msra.mxu0 %v1973
        %3758 = vmatpush.bf16.msra.mxu0 %v1969
        %3759 = vmatpush.bf16.msra.mxu0 %v1965
        %3760 = vmatmul.bf16.gmra.mxu0 %v880
        %v3761 = vpop.f32.mrf.mxu0
        %v3762 = vadd.f32 %v3713, %v3761
        %v3763 = vpop.f32.mrf.mxu0
        %v3764 = vadd.f32 %v3715, %v3763
        %3765 = vmatmul.bf16.gmra.mxu0 %v888
        %v3766 = vpop.f32.mrf.mxu0
        %v3767 = vadd.f32 %v3718, %v3766
        %v3768 = vpop.f32.mrf.mxu0
        %v3769 = vadd.f32 %v3720, %v3768
        %3770 = vmatmul.bf16.gmra.mxu0 %v896
        %v3771 = vpop.f32.mrf.mxu0
        %v3772 = vadd.f32 %v3723, %v3771
        %v3773 = vpop.f32.mrf.mxu0
        %v3774 = vadd.f32 %v3725, %v3773
        %3775 = vmatmul.bf16.gmra.mxu0 %v904
        %v3776 = vpop.f32.mrf.mxu0
        %v3777 = vadd.f32 %v3728, %v3776
        %v3778 = vpop.f32.mrf.mxu0
        %v3779 = vadd.f32 %v3730, %v3778
        %3780 = vmatmul.bf16.gmra.mxu0 %v912
        %v3781 = vpop.f32.mrf.mxu0
        %v3782 = vadd.f32 %v3733, %v3781
        %v3783 = vpop.f32.mrf.mxu0
        %v3784 = vadd.f32 %v3735, %v3783
        %3785 = vmatmul.bf16.gmra.mxu0 %v920
        %v3786 = vpop.f32.mrf.mxu0
        %v3787 = vadd.f32 %v3738, %v3786
        %v3788 = vpop.f32.mrf.mxu0
        %v3789 = vadd.f32 %v3740, %v3788
        %3790 = vmatmul.bf16.gmra.mxu0 %v928
        %v3791 = vpop.f32.mrf.mxu0
        %v3792 = vadd.f32 %v3743, %v3791
        %v3793 = vpop.f32.mrf.mxu0
        %v3794 = vadd.f32 %v3745, %v3793
        %3795 = vmatmul.bf16.gmra.mxu0 %v936
        %v3796 = vpop.f32.mrf.mxu0
        %v3797 = vadd.f32 %v3748, %v3796
        %v3798 = vpop.f32.mrf.mxu0
        %v3799 = vadd.f32 %v3750, %v3798
        %3800 = vdwg.mxu0
        %3801 = vmatpush.bf16.msra.mxu0 %v2025
        %3802 = vmatpush.bf16.msra.mxu0 %v2021
        %3803 = vmatpush.bf16.msra.mxu0 %v2017
        %3804 = vmatpush.bf16.msra.mxu0 %v2013
        %3805 = vmatpush.bf16.msra.mxu0 %v2009
        %3806 = vmatpush.bf16.msra.mxu0 %v2005
        %3807 = vmatpush.bf16.msra.mxu0 %v2001
        %3808 = vmatpush.bf16.msra.mxu0 %v1997
        %3809 = vmatmul.bf16.gmra.mxu0 %v881
        %v3810 = vpop.f32.mrf.mxu0
        %v3811 = vadd.f32 %v3762, %v3810
        %v3812 = vpop.f32.mrf.mxu0
        %v3813 = vadd.f32 %v3764, %v3812
        %3814 = vmatmul.bf16.gmra.mxu0 %v889
        %v3815 = vpop.f32.mrf.mxu0
        %v3816 = vadd.f32 %v3767, %v3815
        %v3817 = vpop.f32.mrf.mxu0
        %v3818 = vadd.f32 %v3769, %v3817
        %3819 = vmatmul.bf16.gmra.mxu0 %v897
        %v3820 = vpop.f32.mrf.mxu0
        %v3821 = vadd.f32 %v3772, %v3820
        %v3822 = vpop.f32.mrf.mxu0
        %v3823 = vadd.f32 %v3774, %v3822
        %3824 = vmatmul.bf16.gmra.mxu0 %v905
        %v3825 = vpop.f32.mrf.mxu0
        %v3826 = vadd.f32 %v3777, %v3825
        %v3827 = vpop.f32.mrf.mxu0
        %v3828 = vadd.f32 %v3779, %v3827
        %3829 = vmatmul.bf16.gmra.mxu0 %v913
        %v3830 = vpop.f32.mrf.mxu0
        %v3831 = vadd.f32 %v3782, %v3830
        %v3832 = vpop.f32.mrf.mxu0
        %v3833 = vadd.f32 %v3784, %v3832
        %3834 = vmatmul.bf16.gmra.mxu0 %v921
        %v3835 = vpop.f32.mrf.mxu0
        %v3836 = vadd.f32 %v3787, %v3835
        %v3837 = vpop.f32.mrf.mxu0
        %v3838 = vadd.f32 %v3789, %v3837
        %3839 = vmatmul.bf16.gmra.mxu0 %v929
        %v3840 = vpop.f32.mrf.mxu0
        %v3841 = vadd.f32 %v3792, %v3840
        %v3842 = vpop.f32.mrf.mxu0
        %v3843 = vadd.f32 %v3794, %v3842
        %3844 = vmatmul.bf16.gmra.mxu0 %v937
        %v3845 = vpop.f32.mrf.mxu0
        %v3846 = vadd.f32 %v3797, %v3845
        %v3847 = vpop.f32.mrf.mxu0
        %v3848 = vadd.f32 %v3799, %v3847
        %3849 = vdwg.mxu0
        %vm3850 = vcmp.gt.f32.partialorder %v2635, 0.0
        %vm3851 = vcmp.gt.f32.partialorder %v3027, 0.0
        %vm3852 = vcmp.gt.f32.partialorder %v3419, 0.0
        %vm3853 = vcmp.gt.f32.partialorder %v3811, 0.0
        %vm3854 = vcmp.gt.f32.partialorder %v2637, 0.0
        %vm3855 = vcmp.gt.f32.partialorder %v3029, 0.0
        %vm3856 = vcmp.gt.f32.partialorder %v3421, 0.0
        %vm3857 = vcmp.gt.f32.partialorder %v3813, 0.0
        %vm3858 = vcmp.gt.f32.partialorder %v2640, 0.0
        %vm3859 = vcmp.gt.f32.partialorder %v3032, 0.0
        %vm3860 = vcmp.gt.f32.partialorder %v3424, 0.0
        %vm3861 = vcmp.gt.f32.partialorder %v3816, 0.0
        %vm3862 = vcmp.gt.f32.partialorder %v2642, 0.0
        %vm3863 = vcmp.gt.f32.partialorder %v3034, 0.0
        %vm3864 = vcmp.gt.f32.partialorder %v3426, 0.0
        %vm3865 = vcmp.gt.f32.partialorder %v3818, 0.0
        %vm3866 = vcmp.gt.f32.partialorder %v2645, 0.0
        %vm3867 = vcmp.gt.f32.partialorder %v3037, 0.0
        %vm3868 = vcmp.gt.f32.partialorder %v3429, 0.0
        %vm3869 = vcmp.gt.f32.partialorder %v3821, 0.0
        %vm3870 = vcmp.gt.f32.partialorder %v2647, 0.0
        %vm3871 = vcmp.gt.f32.partialorder %v3039, 0.0
        %vm3872 = vcmp.gt.f32.partialorder %v3431, 0.0
        %vm3873 = vcmp.gt.f32.partialorder %v3823, 0.0
        %vm3874 = vcmp.gt.f32.partialorder %v2650, 0.0
        %vm3875 = vcmp.gt.f32.partialorder %v3042, 0.0
        %vm3876 = vcmp.gt.f32.partialorder %v3434, 0.0
        %vm3877 = vcmp.gt.f32.partialorder %v3826, 0.0
        %vm3878 = vcmp.gt.f32.partialorder %v2652, 0.0
        %vm3879 = vcmp.gt.f32.partialorder %v3044, 0.0
        %vm3880 = vcmp.gt.f32.partialorder %v3436, 0.0
        %vm3881 = vcmp.gt.f32.partialorder %v3828, 0.0
        %vm3882 = vcmp.gt.f32.partialorder %v2655, 0.0
        %vm3883 = vcmp.gt.f32.partialorder %v3047, 0.0
        %vm3884 = vcmp.gt.f32.partialorder %v3439, 0.0
        %vm3885 = vcmp.gt.f32.partialorder %v3831, 0.0
        %vm3886 = vcmp.gt.f32.partialorder %v2657, 0.0
        %vm3887 = vcmp.gt.f32.partialorder %v3049, 0.0
        %vm3888 = vcmp.gt.f32.partialorder %v3441, 0.0
        %vm3889 = vcmp.gt.f32.partialorder %v3833, 0.0
        %vm3890 = vcmp.gt.f32.partialorder %v2660, 0.0
        %vm3891 = vcmp.gt.f32.partialorder %v3052, 0.0
        %vm3892 = vcmp.gt.f32.partialorder %v3444, 0.0
        %vm3893 = vcmp.gt.f32.partialorder %v3836, 0.0
        %vm3894 = vcmp.gt.f32.partialorder %v2662, 0.0
        %vm3895 = vcmp.gt.f32.partialorder %v3054, 0.0
        %vm3896 = vcmp.gt.f32.partialorder %v3446, 0.0
        %vm3897 = vcmp.gt.f32.partialorder %v3838, 0.0
        %vm3898 = vcmp.gt.f32.partialorder %v2665, 0.0
        %vm3899 = vcmp.gt.f32.partialorder %v3057, 0.0
        %vm3900 = vcmp.gt.f32.partialorder %v3449, 0.0
        %vm3901 = vcmp.gt.f32.partialorder %v3841, 0.0
        %vm3902 = vcmp.gt.f32.partialorder %v2667, 0.0
        %vm3903 = vcmp.gt.f32.partialorder %v3059, 0.0
        %vm3904 = vcmp.gt.f32.partialorder %v3451, 0.0
        %vm3905 = vcmp.gt.f32.partialorder %v3843, 0.0
        %vm3906 = vcmp.gt.f32.partialorder %v2670, 0.0
        %vm3907 = vcmp.gt.f32.partialorder %v3062, 0.0
        %vm3908 = vcmp.gt.f32.partialorder %v3454, 0.0
        %vm3909 = vcmp.gt.f32.partialorder %v3846, 0.0
        %vm3910 = vcmp.gt.f32.partialorder %v2672, 0.0
        %vm3911 = vcmp.gt.f32.partialorder %v3064, 0.0
        %vm3912 = vcmp.gt.f32.partialorder %v3456, 0.0
        %vm3913 = vcmp.gt.f32.partialorder %v3848, 0.0
        %v3914 = vmul.f32 %v2635, 0.2
        %v3915 = vmul.f32 %v3027, 0.2
        %v3916 = vmul.f32 %v3419, 0.2
        %v3917 = vmul.f32 %v3811, 0.2
        %v3918 = vmul.f32 %v2637, 0.2
        %v3919 = vmul.f32 %v3029, 0.2
        %v3920 = vmul.f32 %v3421, 0.2
        %v3921 = vmul.f32 %v3813, 0.2
        %v3922 = vmul.f32 %v2640, 0.2
        %v3923 = vmul.f32 %v3032, 0.2
        %v3924 = vmul.f32 %v3424, 0.2
        %v3925 = vmul.f32 %v3816, 0.2
        %v3926 = vmul.f32 %v2642, 0.2
        %v3927 = vmul.f32 %v3034, 0.2
        %v3928 = vmul.f32 %v3426, 0.2
        %v3929 = vmul.f32 %v3818, 0.2
        %v3930 = vmul.f32 %v2645, 0.2
        %v3931 = vmul.f32 %v3037, 0.2
        %v3932 = vmul.f32 %v3429, 0.2
        %v3933 = vmul.f32 %v3821, 0.2
        %v3934 = vmul.f32 %v2647, 0.2
        %v3935 = vmul.f32 %v3039, 0.2
        %v3936 = vmul.f32 %v3431, 0.2
        %v3937 = vmul.f32 %v3823, 0.2
        %v3938 = vmul.f32 %v2650, 0.2
        %v3939 = vmul.f32 %v3042, 0.2
        %v3940 = vmul.f32 %v3434, 0.2
        %v3941 = vmul.f32 %v3826, 0.2
        %v3942 = vmul.f32 %v2652, 0.2
        %v3943 = vmul.f32 %v3044, 0.2
        %v3944 = vmul.f32 %v3436, 0.2
        %v3945 = vmul.f32 %v3828, 0.2
        %v3946 = vmul.f32 %v2655, 0.2
        %v3947 = vmul.f32 %v3047, 0.2
        %v3948 = vmul.f32 %v3439, 0.2
        %v3949 = vmul.f32 %v3831, 0.2
        %v3950 = vmul.f32 %v2657, 0.2
        %v3951 = vmul.f32 %v3049, 0.2
        %v3952 = vmul.f32 %v3441, 0.2
        %v3953 = vmul.f32 %v3833, 0.2
        %v3954 = vmul.f32 %v2660, 0.2
        %v3955 = vmul.f32 %v3052, 0.2
        %v3956 = vmul.f32 %v3444, 0.2
        %v3957 = vmul.f32 %v3836, 0.2
        %v3958 = vmul.f32 %v2662, 0.2
        %v3959 = vmul.f32 %v3054, 0.2
        %v3960 = vmul.f32 %v3446, 0.2
        %v3961 = vmul.f32 %v3838, 0.2
        %v3962 = vmul.f32 %v2665, 0.2
        %v3963 = vmul.f32 %v3057, 0.2
        %v3964 = vmul.f32 %v3449, 0.2
        %v3965 = vmul.f32 %v3841, 0.2
        %v3966 = vmul.f32 %v2667, 0.2
        %v3967 = vmul.f32 %v3059, 0.2
        %v3968 = vmul.f32 %v3451, 0.2
        %v3969 = vmul.f32 %v3843, 0.2
        %v3970 = vmul.f32 %v2670, 0.2
        %v3971 = vmul.f32 %v3062, 0.2
        %v3972 = vmul.f32 %v3454, 0.2
        %v3973 = vmul.f32 %v3846, 0.2
        %v3974 = vmul.f32 %v2672, 0.2
        %v3975 = vmul.f32 %v3064, 0.2
        %v3976 = vmul.f32 %v3456, 0.2
        %v3977 = vmul.f32 %v3848, 0.2
        %v3978 = vsel %vm3850, %v2635, %v3914
        %v3979 = vsel %vm3851, %v3027, %v3915
        %v3980 = vsel %vm3852, %v3419, %v3916
        %v3981 = vsel %vm3853, %v3811, %v3917
        %v3982 = vsel %vm3854, %v2637, %v3918
        %v3983 = vsel %vm3855, %v3029, %v3919
        %v3984 = vsel %vm3856, %v3421, %v3920
        %v3985 = vsel %vm3857, %v3813, %v3921
        %v3986 = vsel %vm3858, %v2640, %v3922
        %v3987 = vsel %vm3859, %v3032, %v3923
        %v3988 = vsel %vm3860, %v3424, %v3924
        %v3989 = vsel %vm3861, %v3816, %v3925
        %v3990 = vsel %vm3862, %v2642, %v3926
        %v3991 = vsel %vm3863, %v3034, %v3927
        %v3992 = vsel %vm3864, %v3426, %v3928
        %v3993 = vsel %vm3865, %v3818, %v3929
        %v3994 = vsel %vm3866, %v2645, %v3930
        %v3995 = vsel %vm3867, %v3037, %v3931
        %v3996 = vsel %vm3868, %v3429, %v3932
        %v3997 = vsel %vm3869, %v3821, %v3933
        %v3998 = vsel %vm3870, %v2647, %v3934
        %v3999 = vsel %vm3871, %v3039, %v3935
        %v4000 = vsel %vm3872, %v3431, %v3936
        %v4001 = vsel %vm3873, %v3823, %v3937
        %v4002 = vsel %vm3874, %v2650, %v3938
        %v4003 = vsel %vm3875, %v3042, %v3939
        %v4004 = vsel %vm3876, %v3434, %v3940
        %v4005 = vsel %vm3877, %v3826, %v3941
        %v4006 = vsel %vm3878, %v2652, %v3942
        %v4007 = vsel %vm3879, %v3044, %v3943
        %v4008 = vsel %vm3880, %v3436, %v3944
        %v4009 = vsel %vm3881, %v3828, %v3945
        %v4010 = vsel %vm3882, %v2655, %v3946
        %v4011 = vsel %vm3883, %v3047, %v3947
        %v4012 = vsel %vm3884, %v3439, %v3948
        %v4013 = vsel %vm3885, %v3831, %v3949
        %v4014 = vsel %vm3886, %v2657, %v3950
        %v4015 = vsel %vm3887, %v3049, %v3951
        %v4016 = vsel %vm3888, %v3441, %v3952
        %v4017 = vsel %vm3889, %v3833, %v3953
        %v4018 = vsel %vm3890, %v2660, %v3954
        %v4019 = vsel %vm3891, %v3052, %v3955
        %v4020 = vsel %vm3892, %v3444, %v3956
        %v4021 = vsel %vm3893, %v3836, %v3957
        %v4022 = vsel %vm3894, %v2662, %v3958
        %v4023 = vsel %vm3895, %v3054, %v3959
        %v4024 = vsel %vm3896, %v3446, %v3960
        %v4025 = vsel %vm3897, %v3838, %v3961
        %v4026 = vsel %vm3898, %v2665, %v3962
        %v4027 = vsel %vm3899, %v3057, %v3963
        %v4028 = vsel %vm3900, %v3449, %v3964
        %v4029 = vsel %vm3901, %v3841, %v3965
        %v4030 = vsel %vm3902, %v2667, %v3966
        %v4031 = vsel %vm3903, %v3059, %v3967
        %v4032 = vsel %vm3904, %v3451, %v3968
        %v4033 = vsel %vm3905, %v3843, %v3969
        %v4034 = vsel %vm3906, %v2670, %v3970
        %v4035 = vsel %vm3907, %v3062, %v3971
        %v4036 = vsel %vm3908, %v3454, %v3972
        %v4037 = vsel %vm3909, %v3846, %v3973
        %v4038 = vsel %vm3910, %v2672, %v3974
        %v4039 = vsel %vm3911, %v3064, %v3975
        %v4040 = vsel %vm3912, %v3456, %v3976
        %v4041 = vsel %vm3913, %v3848, %v3977
        %v4042 = vpack.c.bf16 %v3982, %v3978
        %v4043 = vpack.c.bf16 %v3983, %v3979
        %v4044 = vpack.c.bf16 %v3984, %v3980
        %v4045 = vpack.c.bf16 %v3985, %v3981
        %v4046 = vpack.c.bf16 %v3990, %v3986
        %v4047 = vpack.c.bf16 %v3991, %v3987
        %v4048 = vpack.c.bf16 %v3992, %v3988
        %v4049 = vpack.c.bf16 %v3993, %v3989
        %v4050 = vpack.c.bf16 %v3998, %v3994
        %v4051 = vpack.c.bf16 %v3999, %v3995
        %v4052 = vpack.c.bf16 %v4000, %v3996
        %v4053 = vpack.c.bf16 %v4001, %v3997
        %v4054 = vpack.c.bf16 %v4006, %v4002
        %v4055 = vpack.c.bf16 %v4007, %v4003
        %v4056 = vpack.c.bf16 %v4008, %v4004
        %v4057 = vpack.c.bf16 %v4009, %v4005
        %v4058 = vpack.c.bf16 %v4014, %v4010
        %v4059 = vpack.c.bf16 %v4015, %v4011
        %v4060 = vpack.c.bf16 %v4016, %v4012
        %v4061 = vpack.c.bf16 %v4017, %v4013
        %v4062 = vpack.c.bf16 %v4022, %v4018
        %v4063 = vpack.c.bf16 %v4023, %v4019
        %v4064 = vpack.c.bf16 %v4024, %v4020
        %v4065 = vpack.c.bf16 %v4025, %v4021
        %v4066 = vpack.c.bf16 %v4030, %v4026
        %v4067 = vpack.c.bf16 %v4031, %v4027
        %v4068 = vpack.c.bf16 %v4032, %v4028
        %v4069 = vpack.c.bf16 %v4033, %v4029
        %v4070 = vpack.c.bf16 %v4038, %v4034
        %v4071 = vpack.c.bf16 %v4039, %v4035
        %v4072 = vpack.c.bf16 %v4040, %v4036
        %v4073 = vpack.c.bf16 %v4041, %v4037
        %v4074 = vld [vmem:[#allocation9] sm:$0xff]
        %v4075 = vld [vmem:[#allocation9 + $0x8] sm:$0xff]
        %v4076 = vld [vmem:[#allocation9 + $0x10] sm:$0xff]
        %v4077 = vld [vmem:[#allocation9 + $0x18] sm:$0xff]
        %v4078 = vld [vmem:[#allocation9 + $0x20] sm:$0xff]
        %v4079 = vld [vmem:[#allocation9 + $0x28] sm:$0xff]
        %v4080 = vld [vmem:[#allocation9 + $0x30] sm:$0xff]
        %v4081 = vld [vmem:[#allocation9 + $0x38] sm:$0xff]
        %v4082 = vld [vmem:[#allocation9 + $0x40] sm:$0xff]
        %v4083 = vld [vmem:[#allocation9 + $0x48] sm:$0xff]
        %v4084 = vld [vmem:[#allocation9 + $0x50] sm:$0xff]
        %v4085 = vld [vmem:[#allocation9 + $0x58] sm:$0xff]
        %v4086 = vld [vmem:[#allocation9 + $0x60] sm:$0xff]
        %v4087 = vld [vmem:[#allocation9 + $0x68] sm:$0xff]
        %v4088 = vld [vmem:[#allocation9 + $0x70] sm:$0xff]
        %v4089 = vld [vmem:[#allocation9 + $0x78] sm:$0xff]
        %v4090 = vld [vmem:[#allocation9 + $0x80] sm:$0xff]
        %v4091 = vld [vmem:[#allocation9 + $0x88] sm:$0xff]
        %v4092 = vld [vmem:[#allocation9 + $0x90] sm:$0xff]
        %v4093 = vld [vmem:[#allocation9 + $0x98] sm:$0xff]
        %v4094 = vld [vmem:[#allocation9 + $0xa0] sm:$0xff]
        %v4095 = vld [vmem:[#allocation9 + $0xa8] sm:$0xff]
        %v4096 = vld [vmem:[#allocation9 + $0xb0] sm:$0xff]
        %v4097 = vld [vmem:[#allocation9 + $0xb8] sm:$0xff]
        %v4098 = vld [vmem:[#allocation9 + $0xc0] sm:$0xff]
        %v4099 = vld [vmem:[#allocation9 + $0xc8] sm:$0xff]
        %v4100 = vld [vmem:[#allocation9 + $0xd0] sm:$0xff]
        %v4101 = vld [vmem:[#allocation9 + $0xd8] sm:$0xff]
        %v4102 = vld [vmem:[#allocation9 + $0xe0] sm:$0xff]
        %v4103 = vld [vmem:[#allocation9 + $0xe8] sm:$0xff]
        %v4104 = vld [vmem:[#allocation9 + $0xf0] sm:$0xff]
        %v4105 = vld [vmem:[#allocation9 + $0xf8] sm:$0xff]
        %v4106 = vld [vmem:[#allocation9 + $0x100] sm:$0xff]
        %v4107 = vld [vmem:[#allocation9 + $0x108] sm:$0xff]
        %v4108 = vld [vmem:[#allocation9 + $0x110] sm:$0xff]
        %v4109 = vld [vmem:[#allocation9 + $0x118] sm:$0xff]
        %v4110 = vld [vmem:[#allocation9 + $0x120] sm:$0xff]
        %v4111 = vld [vmem:[#allocation9 + $0x128] sm:$0xff]
        %v4112 = vld [vmem:[#allocation9 + $0x130] sm:$0xff]
        %v4113 = vld [vmem:[#allocation9 + $0x138] sm:$0xff]
        %v4114 = vld [vmem:[#allocation9 + $0x140] sm:$0xff]
        %v4115 = vld [vmem:[#allocation9 + $0x148] sm:$0xff]
        %v4116 = vld [vmem:[#allocation9 + $0x150] sm:$0xff]
        %v4117 = vld [vmem:[#allocation9 + $0x158] sm:$0xff]
        %v4118 = vld [vmem:[#allocation9 + $0x160] sm:$0xff]
        %v4119 = vld [vmem:[#allocation9 + $0x168] sm:$0xff]
        %v4120 = vld [vmem:[#allocation9 + $0x170] sm:$0xff]
        %v4121 = vld [vmem:[#allocation9 + $0x178] sm:$0xff]
        %v4122 = vld [vmem:[#allocation9 + $0x180] sm:$0xff]
        %v4123 = vld [vmem:[#allocation9 + $0x188] sm:$0xff]
        %v4124 = vld [vmem:[#allocation9 + $0x190] sm:$0xff]
        %v4125 = vld [vmem:[#allocation9 + $0x198] sm:$0xff]
        %v4126 = vld [vmem:[#allocation9 + $0x1a0] sm:$0xff]
        %v4127 = vld [vmem:[#allocation9 + $0x1a8] sm:$0xff]
        %v4128 = vld [vmem:[#allocation9 + $0x1b0] sm:$0xff]
        %v4129 = vld [vmem:[#allocation9 + $0x1b8] sm:$0xff]
        %v4130 = vld [vmem:[#allocation9 + $0x1c0] sm:$0xff]
        %v4131 = vld [vmem:[#allocation9 + $0x1c8] sm:$0xff]
        %v4132 = vld [vmem:[#allocation9 + $0x1d0] sm:$0xff]
        %v4133 = vld [vmem:[#allocation9 + $0x1d8] sm:$0xff]
        %v4134 = vld [vmem:[#allocation9 + $0x1e0] sm:$0xff]
        %v4135 = vld [vmem:[#allocation9 + $0x1e8] sm:$0xff]
        %v4136 = vld [vmem:[#allocation9 + $0x1f0] sm:$0xff]
        %v4137 = vld [vmem:[#allocation9 + $0x1f8] sm:$0xff]
        %v4138 = vld [vmem:[%s4] sm:$0x3]
        %v4140 = vperm.slane %v4138, 0
        %v4141 = vperm.slane %v4138, 1
        %v4208 = vunpack.c.l.b16 %v4074
        %v4209 = vunpack.c.h.b16 %v4074
        %v4210 = vunpack.c.l.b16 %v4075
        %v4211 = vunpack.c.h.b16 %v4075
        %v4212 = vunpack.c.l.b16 %v4076
        %v4213 = vunpack.c.h.b16 %v4076
        %v4214 = vunpack.c.l.b16 %v4077
        %v4215 = vunpack.c.h.b16 %v4077
        %v4216 = vunpack.c.l.b16 %v4078
        %v4217 = vunpack.c.h.b16 %v4078
        %v4218 = vunpack.c.l.b16 %v4079
        %v4219 = vunpack.c.h.b16 %v4079
        %v4220 = vunpack.c.l.b16 %v4080
        %v4221 = vunpack.c.h.b16 %v4080
        %v4222 = vunpack.c.l.b16 %v4081
        %v4223 = vunpack.c.h.b16 %v4081
        %v4224 = vunpack.c.l.b16 %v4082
        %v4225 = vunpack.c.h.b16 %v4082
        %v4226 = vunpack.c.l.b16 %v4083
        %v4227 = vunpack.c.h.b16 %v4083
        %v4228 = vunpack.c.l.b16 %v4084
        %v4229 = vunpack.c.h.b16 %v4084
        %v4230 = vunpack.c.l.b16 %v4085
        %v4231 = vunpack.c.h.b16 %v4085
        %v4232 = vunpack.c.l.b16 %v4086
        %v4233 = vunpack.c.h.b16 %v4086
        %v4234 = vunpack.c.l.b16 %v4087
        %v4235 = vunpack.c.h.b16 %v4087
        %v4236 = vunpack.c.l.b16 %v4088
        %v4237 = vunpack.c.h.b16 %v4088
        %v4238 = vunpack.c.l.b16 %v4089
        %v4239 = vunpack.c.h.b16 %v4089
        %v4240 = vunpack.c.l.b16 %v4090
        %v4241 = vunpack.c.h.b16 %v4090
        %v4242 = vunpack.c.l.b16 %v4091
        %v4243 = vunpack.c.h.b16 %v4091
        %v4244 = vunpack.c.l.b16 %v4092
        %v4245 = vunpack.c.h.b16 %v4092
        %v4246 = vunpack.c.l.b16 %v4093
        %v4247 = vunpack.c.h.b16 %v4093
        %v4248 = vunpack.c.l.b16 %v4094
        %v4249 = vunpack.c.h.b16 %v4094
        %v4250 = vunpack.c.l.b16 %v4095
        %v4251 = vunpack.c.h.b16 %v4095
        %v4252 = vunpack.c.l.b16 %v4096
        %v4253 = vunpack.c.h.b16 %v4096
        %v4254 = vunpack.c.l.b16 %v4097
        %v4255 = vunpack.c.h.b16 %v4097
        %v4256 = vunpack.c.l.b16 %v4098
        %v4257 = vunpack.c.h.b16 %v4098
        %v4258 = vunpack.c.l.b16 %v4099
        %v4259 = vunpack.c.h.b16 %v4099
        %v4260 = vunpack.c.l.b16 %v4100
        %v4261 = vunpack.c.h.b16 %v4100
        %v4262 = vunpack.c.l.b16 %v4101
        %v4263 = vunpack.c.h.b16 %v4101
        %v4264 = vunpack.c.l.b16 %v4102
        %v4265 = vunpack.c.h.b16 %v4102
        %v4266 = vunpack.c.l.b16 %v4103
        %v4267 = vunpack.c.h.b16 %v4103
        %v4268 = vunpack.c.l.b16 %v4104
        %v4269 = vunpack.c.h.b16 %v4104
        %v4270 = vunpack.c.l.b16 %v4105
        %v4271 = vunpack.c.h.b16 %v4105
        %v4272 = vunpack.c.l.b16 %v4106
        %v4273 = vunpack.c.h.b16 %v4106
        %v4274 = vunpack.c.l.b16 %v4107
        %v4275 = vunpack.c.h.b16 %v4107
        %v4276 = vunpack.c.l.b16 %v4108
        %v4277 = vunpack.c.h.b16 %v4108
        %v4278 = vunpack.c.l.b16 %v4109
        %v4279 = vunpack.c.h.b16 %v4109
        %v4280 = vunpack.c.l.b16 %v4110
        %v4281 = vunpack.c.h.b16 %v4110
        %v4282 = vunpack.c.l.b16 %v4111
        %v4283 = vunpack.c.h.b16 %v4111
        %v4284 = vunpack.c.l.b16 %v4112
        %v4285 = vunpack.c.h.b16 %v4112
        %v4286 = vunpack.c.l.b16 %v4113
        %v4287 = vunpack.c.h.b16 %v4113
        %v4288 = vunpack.c.l.b16 %v4114
        %v4289 = vunpack.c.h.b16 %v4114
        %v4290 = vunpack.c.l.b16 %v4115
        %v4291 = vunpack.c.h.b16 %v4115
        %v4292 = vunpack.c.l.b16 %v4116
        %v4293 = vunpack.c.h.b16 %v4116
        %v4294 = vunpack.c.l.b16 %v4117
        %v4295 = vunpack.c.h.b16 %v4117
        %v4296 = vunpack.c.l.b16 %v4118
        %v4297 = vunpack.c.h.b16 %v4118
        %v4298 = vunpack.c.l.b16 %v4119
        %v4299 = vunpack.c.h.b16 %v4119
        %v4300 = vunpack.c.l.b16 %v4120
        %v4301 = vunpack.c.h.b16 %v4120
        %v4302 = vunpack.c.l.b16 %v4121
        %v4303 = vunpack.c.h.b16 %v4121
        %v4304 = vunpack.c.l.b16 %v4122
        %v4305 = vunpack.c.h.b16 %v4122
        %v4306 = vunpack.c.l.b16 %v4123
        %v4307 = vunpack.c.h.b16 %v4123
        %v4308 = vunpack.c.l.b16 %v4124
        %v4309 = vunpack.c.h.b16 %v4124
        %v4310 = vunpack.c.l.b16 %v4125
        %v4311 = vunpack.c.h.b16 %v4125
        %v4312 = vunpack.c.l.b16 %v4126
        %v4313 = vunpack.c.h.b16 %v4126
        %v4314 = vunpack.c.l.b16 %v4127
        %v4315 = vunpack.c.h.b16 %v4127
        %v4316 = vunpack.c.l.b16 %v4128
        %v4317 = vunpack.c.h.b16 %v4128
        %v4318 = vunpack.c.l.b16 %v4129
        %v4319 = vunpack.c.h.b16 %v4129
        %v4320 = vunpack.c.l.b16 %v4130
        %v4321 = vunpack.c.h.b16 %v4130
        %v4322 = vunpack.c.l.b16 %v4131
        %v4323 = vunpack.c.h.b16 %v4131
        %v4324 = vunpack.c.l.b16 %v4132
        %v4325 = vunpack.c.h.b16 %v4132
        %v4326 = vunpack.c.l.b16 %v4133
        %v4327 = vunpack.c.h.b16 %v4133
        %v4328 = vunpack.c.l.b16 %v4134
        %v4329 = vunpack.c.h.b16 %v4134
        %v4330 = vunpack.c.l.b16 %v4135
        %v4331 = vunpack.c.h.b16 %v4135
        %v4332 = vunpack.c.l.b16 %v4136
        %v4333 = vunpack.c.h.b16 %v4136
        %v4334 = vunpack.c.l.b16 %v4137
        %v4335 = vunpack.c.h.b16 %v4137
        %v4336 = vpack.c.b16 %v4210, %v4208
        %v4337 = vpack.c.b16 %v4211, %v4209
        %v4338 = vpack.c.b16 %v4214, %v4212
        %v4339 = vpack.c.b16 %v4215, %v4213
        %v4340 = vpack.c.b16 %v4218, %v4216
        %v4341 = vpack.c.b16 %v4219, %v4217
        %v4342 = vpack.c.b16 %v4222, %v4220
        %v4343 = vpack.c.b16 %v4223, %v4221
        %v4344 = vpack.c.b16 %v4226, %v4224
        %v4345 = vpack.c.b16 %v4227, %v4225
        %v4346 = vpack.c.b16 %v4230, %v4228
        %v4347 = vpack.c.b16 %v4231, %v4229
        %v4348 = vpack.c.b16 %v4234, %v4232
        %v4349 = vpack.c.b16 %v4235, %v4233
        %v4350 = vpack.c.b16 %v4238, %v4236
        %v4351 = vpack.c.b16 %v4239, %v4237
        %v4352 = vpack.c.b16 %v4242, %v4240
        %v4353 = vpack.c.b16 %v4243, %v4241
        %v4354 = vpack.c.b16 %v4246, %v4244
        %v4355 = vpack.c.b16 %v4247, %v4245
        %v4356 = vpack.c.b16 %v4250, %v4248
        %v4357 = vpack.c.b16 %v4251, %v4249
        %v4358 = vpack.c.b16 %v4254, %v4252
        %v4359 = vpack.c.b16 %v4255, %v4253
        %v4360 = vpack.c.b16 %v4258, %v4256
        %v4361 = vpack.c.b16 %v4259, %v4257
        %v4362 = vpack.c.b16 %v4262, %v4260
        %v4363 = vpack.c.b16 %v4263, %v4261
        %v4364 = vpack.c.b16 %v4266, %v4264
        %v4365 = vpack.c.b16 %v4267, %v4265
        %v4366 = vpack.c.b16 %v4270, %v4268
        %v4367 = vpack.c.b16 %v4271, %v4269
        %v4368 = vpack.c.b16 %v4274, %v4272
        %v4369 = vpack.c.b16 %v4275, %v4273
        %v4370 = vpack.c.b16 %v4278, %v4276
        %v4371 = vpack.c.b16 %v4279, %v4277
        %v4372 = vpack.c.b16 %v4282, %v4280
        %v4373 = vpack.c.b16 %v4283, %v4281
        %v4374 = vpack.c.b16 %v4286, %v4284
        %v4375 = vpack.c.b16 %v4287, %v4285
        %v4376 = vpack.c.b16 %v4290, %v4288
        %v4377 = vpack.c.b16 %v4291, %v4289
        %v4378 = vpack.c.b16 %v4294, %v4292
        %v4379 = vpack.c.b16 %v4295, %v4293
        %v4380 = vpack.c.b16 %v4298, %v4296
        %v4381 = vpack.c.b16 %v4299, %v4297
        %v4382 = vpack.c.b16 %v4302, %v4300
        %v4383 = vpack.c.b16 %v4303, %v4301
        %v4384 = vpack.c.b16 %v4306, %v4304
        %v4385 = vpack.c.b16 %v4307, %v4305
        %v4386 = vpack.c.b16 %v4310, %v4308
        %v4387 = vpack.c.b16 %v4311, %v4309
        %v4388 = vpack.c.b16 %v4314, %v4312
        %v4389 = vpack.c.b16 %v4315, %v4313
        %v4390 = vpack.c.b16 %v4318, %v4316
        %v4391 = vpack.c.b16 %v4319, %v4317
        %v4392 = vpack.c.b16 %v4322, %v4320
        %v4393 = vpack.c.b16 %v4323, %v4321
        %v4394 = vpack.c.b16 %v4326, %v4324
        %v4395 = vpack.c.b16 %v4327, %v4325
        %v4396 = vpack.c.b16 %v4330, %v4328
        %v4397 = vpack.c.b16 %v4331, %v4329
        %v4398 = vpack.c.b16 %v4334, %v4332
        %v4399 = vpack.c.b16 %v4335, %v4333
        %4464 = vmatpush.bf16.msra.mxu0 %v4350
        %4465 = vmatpush.bf16.msra.mxu0 %v4348
        %4466 = vmatpush.bf16.msra.mxu0 %v4346
        %4467 = vmatpush.bf16.msra.mxu0 %v4344
        %4468 = vmatpush.bf16.msra.mxu0 %v4342
        %4469 = vmatpush.bf16.msra.mxu0 %v4340
        %4470 = vmatpush.bf16.msra.mxu0 %v4338
        %4471 = vmatpush.bf16.msra.mxu0 %v4336
        %4472 = vmatmul.bf16.gmra.mxu0 %v4042
        %v4473 = vpop.f32.mrf.mxu0
        %v4474 = vadd.f32 %v4140, %v4473
        %v4475 = vpop.f32.mrf.mxu0
        %v4476 = vadd.f32 %v4140, %v4475
        %4477 = vmatmul.bf16.gmra.mxu0 %v4046
        %v4478 = vpop.f32.mrf.mxu0
        %v4479 = vadd.f32 %v4140, %v4478
        %v4480 = vpop.f32.mrf.mxu0
        %v4481 = vadd.f32 %v4140, %v4480
        %4482 = vmatmul.bf16.gmra.mxu0 %v4050
        %v4483 = vpop.f32.mrf.mxu0
        %v4484 = vadd.f32 %v4140, %v4483
        %v4485 = vpop.f32.mrf.mxu0
        %v4486 = vadd.f32 %v4140, %v4485
        %4487 = vmatmul.bf16.gmra.mxu0 %v4054
        %v4488 = vpop.f32.mrf.mxu0
        %v4489 = vadd.f32 %v4140, %v4488
        %v4490 = vpop.f32.mrf.mxu0
        %v4491 = vadd.f32 %v4140, %v4490
        %4492 = vmatmul.bf16.gmra.mxu0 %v4058
        %v4493 = vpop.f32.mrf.mxu0
        %v4494 = vadd.f32 %v4140, %v4493
        %v4495 = vpop.f32.mrf.mxu0
        %v4496 = vadd.f32 %v4140, %v4495
        %4497 = vmatmul.bf16.gmra.mxu0 %v4062
        %v4498 = vpop.f32.mrf.mxu0
        %v4499 = vadd.f32 %v4140, %v4498
        %v4500 = vpop.f32.mrf.mxu0
        %v4501 = vadd.f32 %v4140, %v4500
        %4502 = vmatmul.bf16.gmra.mxu0 %v4066
        %v4503 = vpop.f32.mrf.mxu0
        %v4504 = vadd.f32 %v4140, %v4503
        %v4505 = vpop.f32.mrf.mxu0
        %v4506 = vadd.f32 %v4140, %v4505
        %4507 = vmatmul.bf16.gmra.mxu0 %v4070
        %v4508 = vpop.f32.mrf.mxu0
        %v4509 = vadd.f32 %v4140, %v4508
        %v4510 = vpop.f32.mrf.mxu0
        %v4511 = vadd.f32 %v4140, %v4510
        %4512 = vdwg.mxu0
        %4513 = vmatpush.bf16.msra.mxu0 %v4366
        %4514 = vmatpush.bf16.msra.mxu0 %v4364
        %4515 = vmatpush.bf16.msra.mxu0 %v4362
        %4516 = vmatpush.bf16.msra.mxu0 %v4360
        %4517 = vmatpush.bf16.msra.mxu0 %v4358
        %4518 = vmatpush.bf16.msra.mxu0 %v4356
        %4519 = vmatpush.bf16.msra.mxu0 %v4354
        %4520 = vmatpush.bf16.msra.mxu0 %v4352
        %4521 = vmatmul.bf16.gmra.mxu0 %v4043
        %v4522 = vpop.f32.mrf.mxu0
        %v4523 = vadd.f32 %v4474, %v4522
        %v4524 = vpop.f32.mrf.mxu0
        %v4525 = vadd.f32 %v4476, %v4524
        %4526 = vmatmul.bf16.gmra.mxu0 %v4047
        %v4527 = vpop.f32.mrf.mxu0
        %v4528 = vadd.f32 %v4479, %v4527
        %v4529 = vpop.f32.mrf.mxu0
        %v4530 = vadd.f32 %v4481, %v4529
        %4531 = vmatmul.bf16.gmra.mxu0 %v4051
        %v4532 = vpop.f32.mrf.mxu0
        %v4533 = vadd.f32 %v4484, %v4532
        %v4534 = vpop.f32.mrf.mxu0
        %v4535 = vadd.f32 %v4486, %v4534
        %4536 = vmatmul.bf16.gmra.mxu0 %v4055
        %v4537 = vpop.f32.mrf.mxu0
        %v4538 = vadd.f32 %v4489, %v4537
        %v4539 = vpop.f32.mrf.mxu0
        %v4540 = vadd.f32 %v4491, %v4539
        %4541 = vmatmul.bf16.gmra.mxu0 %v4059
        %v4542 = vpop.f32.mrf.mxu0
        %v4543 = vadd.f32 %v4494, %v4542
        %v4544 = vpop.f32.mrf.mxu0
        %v4545 = vadd.f32 %v4496, %v4544
        %4546 = vmatmul.bf16.gmra.mxu0 %v4063
        %v4547 = vpop.f32.mrf.mxu0
        %v4548 = vadd.f32 %v4499, %v4547
        %v4549 = vpop.f32.mrf.mxu0
        %v4550 = vadd.f32 %v4501, %v4549
        %4551 = vmatmul.bf16.gmra.mxu0 %v4067
        %v4552 = vpop.f32.mrf.mxu0
        %v4553 = vadd.f32 %v4504, %v4552
        %v4554 = vpop.f32.mrf.mxu0
        %v4555 = vadd.f32 %v4506, %v4554
        %4556 = vmatmul.bf16.gmra.mxu0 %v4071
        %v4557 = vpop.f32.mrf.mxu0
        %v4558 = vadd.f32 %v4509, %v4557
        %v4559 = vpop.f32.mrf.mxu0
        %v4560 = vadd.f32 %v4511, %v4559
        %4561 = vdwg.mxu0
        %4562 = vmatpush.bf16.msra.mxu0 %v4382
        %4563 = vmatpush.bf16.msra.mxu0 %v4380
        %4564 = vmatpush.bf16.msra.mxu0 %v4378
        %4565 = vmatpush.bf16.msra.mxu0 %v4376
        %4566 = vmatpush.bf16.msra.mxu0 %v4374
        %4567 = vmatpush.bf16.msra.mxu0 %v4372
        %4568 = vmatpush.bf16.msra.mxu0 %v4370
        %4569 = vmatpush.bf16.msra.mxu0 %v4368
        %4570 = vmatmul.bf16.gmra.mxu0 %v4044
        %v4571 = vpop.f32.mrf.mxu0
        %v4572 = vadd.f32 %v4523, %v4571
        %v4573 = vpop.f32.mrf.mxu0
        %v4574 = vadd.f32 %v4525, %v4573
        %4575 = vmatmul.bf16.gmra.mxu0 %v4048
        %v4576 = vpop.f32.mrf.mxu0
        %v4577 = vadd.f32 %v4528, %v4576
        %v4578 = vpop.f32.mrf.mxu0
        %v4579 = vadd.f32 %v4530, %v4578
        %4580 = vmatmul.bf16.gmra.mxu0 %v4052
        %v4581 = vpop.f32.mrf.mxu0
        %v4582 = vadd.f32 %v4533, %v4581
        %v4583 = vpop.f32.mrf.mxu0
        %v4584 = vadd.f32 %v4535, %v4583
        %4585 = vmatmul.bf16.gmra.mxu0 %v4056
        %v4586 = vpop.f32.mrf.mxu0
        %v4587 = vadd.f32 %v4538, %v4586
        %v4588 = vpop.f32.mrf.mxu0
        %v4589 = vadd.f32 %v4540, %v4588
        %4590 = vmatmul.bf16.gmra.mxu0 %v4060
        %v4591 = vpop.f32.mrf.mxu0
        %v4592 = vadd.f32 %v4543, %v4591
        %v4593 = vpop.f32.mrf.mxu0
        %v4594 = vadd.f32 %v4545, %v4593
        %4595 = vmatmul.bf16.gmra.mxu0 %v4064
        %v4596 = vpop.f32.mrf.mxu0
        %v4597 = vadd.f32 %v4548, %v4596
        %v4598 = vpop.f32.mrf.mxu0
        %v4599 = vadd.f32 %v4550, %v4598
        %4600 = vmatmul.bf16.gmra.mxu0 %v4068
        %v4601 = vpop.f32.mrf.mxu0
        %v4602 = vadd.f32 %v4553, %v4601
        %v4603 = vpop.f32.mrf.mxu0
        %v4604 = vadd.f32 %v4555, %v4603
        %4605 = vmatmul.bf16.gmra.mxu0 %v4072
        %v4606 = vpop.f32.mrf.mxu0
        %v4607 = vadd.f32 %v4558, %v4606
        %v4608 = vpop.f32.mrf.mxu0
        %v4609 = vadd.f32 %v4560, %v4608
        %4610 = vdwg.mxu0
        %4611 = vmatpush.bf16.msra.mxu0 %v4398
        %4612 = vmatpush.bf16.msra.mxu0 %v4396
        %4613 = vmatpush.bf16.msra.mxu0 %v4394
        %4614 = vmatpush.bf16.msra.mxu0 %v4392
        %4615 = vmatpush.bf16.msra.mxu0 %v4390
        %4616 = vmatpush.bf16.msra.mxu0 %v4388
        %4617 = vmatpush.bf16.msra.mxu0 %v4386
        %4618 = vmatpush.bf16.msra.mxu0 %v4384
        %4619 = vmatmul.bf16.gmra.mxu0 %v4045
        %v4620 = vpop.f32.mrf.mxu0
        %v4621 = vadd.f32 %v4572, %v4620
        %v4622 = vpop.f32.mrf.mxu0
        %v4623 = vadd.f32 %v4574, %v4622
        %4624 = vmatmul.bf16.gmra.mxu0 %v4049
        %v4625 = vpop.f32.mrf.mxu0
        %v4626 = vadd.f32 %v4577, %v4625
        %v4627 = vpop.f32.mrf.mxu0
        %v4628 = vadd.f32 %v4579, %v4627
        %4629 = vmatmul.bf16.gmra.mxu0 %v4053
        %v4630 = vpop.f32.mrf.mxu0
        %v4631 = vadd.f32 %v4582, %v4630
        %v4632 = vpop.f32.mrf.mxu0
        %v4633 = vadd.f32 %v4584, %v4632
        %4634 = vmatmul.bf16.gmra.mxu0 %v4057
        %v4635 = vpop.f32.mrf.mxu0
        %v4636 = vadd.f32 %v4587, %v4635
        %v4637 = vpop.f32.mrf.mxu0
        %v4638 = vadd.f32 %v4589, %v4637
        %4639 = vmatmul.bf16.gmra.mxu0 %v4061
        %v4640 = vpop.f32.mrf.mxu0
        %v4641 = vadd.f32 %v4592, %v4640
        %v4642 = vpop.f32.mrf.mxu0
        %v4643 = vadd.f32 %v4594, %v4642
        %4644 = vmatmul.bf16.gmra.mxu0 %v4065
        %v4645 = vpop.f32.mrf.mxu0
        %v4646 = vadd.f32 %v4597, %v4645
        %v4647 = vpop.f32.mrf.mxu0
        %v4648 = vadd.f32 %v4599, %v4647
        %4649 = vmatmul.bf16.gmra.mxu0 %v4069
        %v4650 = vpop.f32.mrf.mxu0
        %v4651 = vadd.f32 %v4602, %v4650
        %v4652 = vpop.f32.mrf.mxu0
        %v4653 = vadd.f32 %v4604, %v4652
        %4654 = vmatmul.bf16.gmra.mxu0 %v4073
        %v4655 = vpop.f32.mrf.mxu0
        %v4656 = vadd.f32 %v4607, %v4655
        %v4657 = vpop.f32.mrf.mxu0
        %v4658 = vadd.f32 %v4609, %v4657
        %4659 = vdwg.mxu0
        %4660 = vmatpush.bf16.msra.mxu0 %v4351
        %4661 = vmatpush.bf16.msra.mxu0 %v4349
        %4662 = vmatpush.bf16.msra.mxu0 %v4347
        %4663 = vmatpush.bf16.msra.mxu0 %v4345
        %4664 = vmatpush.bf16.msra.mxu0 %v4343
        %4665 = vmatpush.bf16.msra.mxu0 %v4341
        %4666 = vmatpush.bf16.msra.mxu0 %v4339
        %4667 = vmatpush.bf16.msra.mxu0 %v4337
        %4668 = vmatmul.bf16.gmra.mxu0 %v4042
        %v4669 = vpop.f32.mrf.mxu0
        %v4670 = vadd.f32 %v4141, %v4669
        %v4671 = vpop.f32.mrf.mxu0
        %v4672 = vadd.f32 %v4141, %v4671
        %4673 = vmatmul.bf16.gmra.mxu0 %v4046
        %v4674 = vpop.f32.mrf.mxu0
        %v4675 = vadd.f32 %v4141, %v4674
        %v4676 = vpop.f32.mrf.mxu0
        %v4677 = vadd.f32 %v4141, %v4676
        %4678 = vmatmul.bf16.gmra.mxu0 %v4050
        %v4679 = vpop.f32.mrf.mxu0
        %v4680 = vadd.f32 %v4141, %v4679
        %v4681 = vpop.f32.mrf.mxu0
        %v4682 = vadd.f32 %v4141, %v4681
        %4683 = vmatmul.bf16.gmra.mxu0 %v4054
        %v4684 = vpop.f32.mrf.mxu0
        %v4685 = vadd.f32 %v4141, %v4684
        %v4686 = vpop.f32.mrf.mxu0
        %v4687 = vadd.f32 %v4141, %v4686
        %4688 = vmatmul.bf16.gmra.mxu0 %v4058
        %v4689 = vpop.f32.mrf.mxu0
        %v4690 = vadd.f32 %v4141, %v4689
        %v4691 = vpop.f32.mrf.mxu0
        %v4692 = vadd.f32 %v4141, %v4691
        %4693 = vmatmul.bf16.gmra.mxu0 %v4062
        %v4694 = vpop.f32.mrf.mxu0
        %v4695 = vadd.f32 %v4141, %v4694
        %v4696 = vpop.f32.mrf.mxu0
        %v4697 = vadd.f32 %v4141, %v4696
        %4698 = vmatmul.bf16.gmra.mxu0 %v4066
        %v4699 = vpop.f32.mrf.mxu0
        %v4700 = vadd.f32 %v4141, %v4699
        %v4701 = vpop.f32.mrf.mxu0
        %v4702 = vadd.f32 %v4141, %v4701
        %4703 = vmatmul.bf16.gmra.mxu0 %v4070
        %v4704 = vpop.f32.mrf.mxu0
        %v4705 = vadd.f32 %v4141, %v4704
        %v4706 = vpop.f32.mrf.mxu0
        %v4707 = vadd.f32 %v4141, %v4706
        %4708 = vdwg.mxu0
        %4709 = vmatpush.bf16.msra.mxu0 %v4367
        %4710 = vmatpush.bf16.msra.mxu0 %v4365
        %4711 = vmatpush.bf16.msra.mxu0 %v4363
        %4712 = vmatpush.bf16.msra.mxu0 %v4361
        %4713 = vmatpush.bf16.msra.mxu0 %v4359
        %4714 = vmatpush.bf16.msra.mxu0 %v4357
        %4715 = vmatpush.bf16.msra.mxu0 %v4355
        %4716 = vmatpush.bf16.msra.mxu0 %v4353
        %4717 = vmatmul.bf16.gmra.mxu0 %v4043
        %v4718 = vpop.f32.mrf.mxu0
        %v4719 = vadd.f32 %v4670, %v4718
        %v4720 = vpop.f32.mrf.mxu0
        %v4721 = vadd.f32 %v4672, %v4720
        %4722 = vmatmul.bf16.gmra.mxu0 %v4047
        %v4723 = vpop.f32.mrf.mxu0
        %v4724 = vadd.f32 %v4675, %v4723
        %v4725 = vpop.f32.mrf.mxu0
        %v4726 = vadd.f32 %v4677, %v4725
        %4727 = vmatmul.bf16.gmra.mxu0 %v4051
        %v4728 = vpop.f32.mrf.mxu0
        %v4729 = vadd.f32 %v4680, %v4728
        %v4730 = vpop.f32.mrf.mxu0
        %v4731 = vadd.f32 %v4682, %v4730
        %4732 = vmatmul.bf16.gmra.mxu0 %v4055
        %v4733 = vpop.f32.mrf.mxu0
        %v4734 = vadd.f32 %v4685, %v4733
        %v4735 = vpop.f32.mrf.mxu0
        %v4736 = vadd.f32 %v4687, %v4735
        %4737 = vmatmul.bf16.gmra.mxu0 %v4059
        %v4738 = vpop.f32.mrf.mxu0
        %v4739 = vadd.f32 %v4690, %v4738
        %v4740 = vpop.f32.mrf.mxu0
        %v4741 = vadd.f32 %v4692, %v4740
        %4742 = vmatmul.bf16.gmra.mxu0 %v4063
        %v4743 = vpop.f32.mrf.mxu0
        %v4744 = vadd.f32 %v4695, %v4743
        %v4745 = vpop.f32.mrf.mxu0
        %v4746 = vadd.f32 %v4697, %v4745
        %4747 = vmatmul.bf16.gmra.mxu0 %v4067
        %v4748 = vpop.f32.mrf.mxu0
        %v4749 = vadd.f32 %v4700, %v4748
        %v4750 = vpop.f32.mrf.mxu0
        %v4751 = vadd.f32 %v4702, %v4750
        %4752 = vmatmul.bf16.gmra.mxu0 %v4071
        %v4753 = vpop.f32.mrf.mxu0
        %v4754 = vadd.f32 %v4705, %v4753
        %v4755 = vpop.f32.mrf.mxu0
        %v4756 = vadd.f32 %v4707, %v4755
        %4757 = vdwg.mxu0
        %4758 = vmatpush.bf16.msra.mxu0 %v4383
        %4759 = vmatpush.bf16.msra.mxu0 %v4381
        %4760 = vmatpush.bf16.msra.mxu0 %v4379
        %4761 = vmatpush.bf16.msra.mxu0 %v4377
        %4762 = vmatpush.bf16.msra.mxu0 %v4375
        %4763 = vmatpush.bf16.msra.mxu0 %v4373
        %4764 = vmatpush.bf16.msra.mxu0 %v4371
        %4765 = vmatpush.bf16.msra.mxu0 %v4369
        %4766 = vmatmul.bf16.gmra.mxu0 %v4044
        %v4767 = vpop.f32.mrf.mxu0
        %v4768 = vadd.f32 %v4719, %v4767
        %v4769 = vpop.f32.mrf.mxu0
        %v4770 = vadd.f32 %v4721, %v4769
        %4771 = vmatmul.bf16.gmra.mxu0 %v4048
        %v4772 = vpop.f32.mrf.mxu0
        %v4773 = vadd.f32 %v4724, %v4772
        %v4774 = vpop.f32.mrf.mxu0
        %v4775 = vadd.f32 %v4726, %v4774
        %4776 = vmatmul.bf16.gmra.mxu0 %v4052
        %v4777 = vpop.f32.mrf.mxu0
        %v4778 = vadd.f32 %v4729, %v4777
        %v4779 = vpop.f32.mrf.mxu0
        %v4780 = vadd.f32 %v4731, %v4779
        %4781 = vmatmul.bf16.gmra.mxu0 %v4056
        %v4782 = vpop.f32.mrf.mxu0
        %v4783 = vadd.f32 %v4734, %v4782
        %v4784 = vpop.f32.mrf.mxu0
        %v4785 = vadd.f32 %v4736, %v4784
        %4786 = vmatmul.bf16.gmra.mxu0 %v4060
        %v4787 = vpop.f32.mrf.mxu0
        %v4788 = vadd.f32 %v4739, %v4787
        %v4789 = vpop.f32.mrf.mxu0
        %v4790 = vadd.f32 %v4741, %v4789
        %4791 = vmatmul.bf16.gmra.mxu0 %v4064
        %v4792 = vpop.f32.mrf.mxu0
        %v4793 = vadd.f32 %v4744, %v4792
        %v4794 = vpop.f32.mrf.mxu0
        %v4795 = vadd.f32 %v4746, %v4794
        %4796 = vmatmul.bf16.gmra.mxu0 %v4068
        %v4797 = vpop.f32.mrf.mxu0
        %v4798 = vadd.f32 %v4749, %v4797
        %v4799 = vpop.f32.mrf.mxu0
        %v4800 = vadd.f32 %v4751, %v4799
        %4801 = vmatmul.bf16.gmra.mxu0 %v4072
        %v4802 = vpop.f32.mrf.mxu0
        %v4803 = vadd.f32 %v4754, %v4802
        %v4804 = vpop.f32.mrf.mxu0
        %v4805 = vadd.f32 %v4756, %v4804
        %4806 = vdwg.mxu0
        %4807 = vmatpush.bf16.msra.mxu0 %v4399
        %4808 = vmatpush.bf16.msra.mxu0 %v4397
        %4809 = vmatpush.bf16.msra.mxu0 %v4395
        %4810 = vmatpush.bf16.msra.mxu0 %v4393
        %4811 = vmatpush.bf16.msra.mxu0 %v4391
        %4812 = vmatpush.bf16.msra.mxu0 %v4389
        %4813 = vmatpush.bf16.msra.mxu0 %v4387
        %4814 = vmatpush.bf16.msra.mxu0 %v4385
        %4815 = vmatmul.bf16.gmra.mxu0 %v4045
        %v4816 = vpop.f32.mrf.mxu0
        %v4817 = vadd.f32 %v4768, %v4816
        %v4818 = vpop.f32.mrf.mxu0
        %v4819 = vadd.f32 %v4770, %v4818
        %4820 = vmatmul.bf16.gmra.mxu0 %v4049
        %v4821 = vpop.f32.mrf.mxu0
        %v4822 = vadd.f32 %v4773, %v4821
        %v4823 = vpop.f32.mrf.mxu0
        %v4824 = vadd.f32 %v4775, %v4823
        %4825 = vmatmul.bf16.gmra.mxu0 %v4053
        %v4826 = vpop.f32.mrf.mxu0
        %v4827 = vadd.f32 %v4778, %v4826
        %v4828 = vpop.f32.mrf.mxu0
        %v4829 = vadd.f32 %v4780, %v4828
        %4830 = vmatmul.bf16.gmra.mxu0 %v4057
        %v4831 = vpop.f32.mrf.mxu0
        %v4832 = vadd.f32 %v4783, %v4831
        %v4833 = vpop.f32.mrf.mxu0
        %v4834 = vadd.f32 %v4785, %v4833
        %4835 = vmatmul.bf16.gmra.mxu0 %v4061
        %v4836 = vpop.f32.mrf.mxu0
        %v4837 = vadd.f32 %v4788, %v4836
        %v4838 = vpop.f32.mrf.mxu0
        %v4839 = vadd.f32 %v4790, %v4838
        %4840 = vmatmul.bf16.gmra.mxu0 %v4065
        %v4841 = vpop.f32.mrf.mxu0
        %v4842 = vadd.f32 %v4793, %v4841
        %v4843 = vpop.f32.mrf.mxu0
        %v4844 = vadd.f32 %v4795, %v4843
        %4845 = vmatmul.bf16.gmra.mxu0 %v4069
        %v4846 = vpop.f32.mrf.mxu0
        %v4847 = vadd.f32 %v4798, %v4846
        %v4848 = vpop.f32.mrf.mxu0
        %v4849 = vadd.f32 %v4800, %v4848
        %4850 = vmatmul.bf16.gmra.mxu0 %v4073
        %v4851 = vpop.f32.mrf.mxu0
        %v4852 = vadd.f32 %v4803, %v4851
        %v4853 = vpop.f32.mrf.mxu0
        %v4854 = vadd.f32 %v4805, %v4853
        %4855 = vdwg.mxu0
        %vm4856 = vcmp.gt.f32.partialorder %v4621, 0.0
        %vm4857 = vcmp.gt.f32.partialorder %v4817, 0.0
        %vm4858 = vcmp.gt.f32.partialorder %v4623, 0.0
        %vm4859 = vcmp.gt.f32.partialorder %v4819, 0.0
        %vm4860 = vcmp.gt.f32.partialorder %v4626, 0.0
        %vm4861 = vcmp.gt.f32.partialorder %v4822, 0.0
        %vm4862 = vcmp.gt.f32.partialorder %v4628, 0.0
        %vm4863 = vcmp.gt.f32.partialorder %v4824, 0.0
        %vm4864 = vcmp.gt.f32.partialorder %v4631, 0.0
        %vm4865 = vcmp.gt.f32.partialorder %v4827, 0.0
        %vm4866 = vcmp.gt.f32.partialorder %v4633, 0.0
        %vm4867 = vcmp.gt.f32.partialorder %v4829, 0.0
        %vm4868 = vcmp.gt.f32.partialorder %v4636, 0.0
        %vm4869 = vcmp.gt.f32.partialorder %v4832, 0.0
        %vm4870 = vcmp.gt.f32.partialorder %v4638, 0.0
        %vm4871 = vcmp.gt.f32.partialorder %v4834, 0.0
        %vm4872 = vcmp.gt.f32.partialorder %v4641, 0.0
        %vm4873 = vcmp.gt.f32.partialorder %v4837, 0.0
        %vm4874 = vcmp.gt.f32.partialorder %v4643, 0.0
        %vm4875 = vcmp.gt.f32.partialorder %v4839, 0.0
        %vm4876 = vcmp.gt.f32.partialorder %v4646, 0.0
        %vm4877 = vcmp.gt.f32.partialorder %v4842, 0.0
        %vm4878 = vcmp.gt.f32.partialorder %v4648, 0.0
        %vm4879 = vcmp.gt.f32.partialorder %v4844, 0.0
        %vm4880 = vcmp.gt.f32.partialorder %v4651, 0.0
        %vm4881 = vcmp.gt.f32.partialorder %v4847, 0.0
        %vm4882 = vcmp.gt.f32.partialorder %v4653, 0.0
        %vm4883 = vcmp.gt.f32.partialorder %v4849, 0.0
        %vm4884 = vcmp.gt.f32.partialorder %v4656, 0.0
        %vm4885 = vcmp.gt.f32.partialorder %v4852, 0.0
        %vm4886 = vcmp.gt.f32.partialorder %v4658, 0.0
        %vm4887 = vcmp.gt.f32.partialorder %v4854, 0.0
        %v4888 = vmul.f32 %v4621, 0.2
        %v4889 = vmul.f32 %v4817, 0.2
        %v4890 = vmul.f32 %v4623, 0.2
        %v4891 = vmul.f32 %v4819, 0.2
        %v4892 = vmul.f32 %v4626, 0.2
        %v4893 = vmul.f32 %v4822, 0.2
        %v4894 = vmul.f32 %v4628, 0.2
        %v4895 = vmul.f32 %v4824, 0.2
        %v4896 = vmul.f32 %v4631, 0.2
        %v4897 = vmul.f32 %v4827, 0.2
        %v4898 = vmul.f32 %v4633, 0.2
        %v4899 = vmul.f32 %v4829, 0.2
        %v4900 = vmul.f32 %v4636, 0.2
        %v4901 = vmul.f32 %v4832, 0.2
        %v4902 = vmul.f32 %v4638, 0.2
        %v4903 = vmul.f32 %v4834, 0.2
        %v4904 = vmul.f32 %v4641, 0.2
        %v4905 = vmul.f32 %v4837, 0.2
        %v4906 = vmul.f32 %v4643, 0.2
        %v4907 = vmul.f32 %v4839, 0.2
        %v4908 = vmul.f32 %v4646, 0.2
        %v4909 = vmul.f32 %v4842, 0.2
        %v4910 = vmul.f32 %v4648, 0.2
        %v4911 = vmul.f32 %v4844, 0.2
        %v4912 = vmul.f32 %v4651, 0.2
        %v4913 = vmul.f32 %v4847, 0.2
        %v4914 = vmul.f32 %v4653, 0.2
        %v4915 = vmul.f32 %v4849, 0.2
        %v4916 = vmul.f32 %v4656, 0.2
        %v4917 = vmul.f32 %v4852, 0.2
        %v4918 = vmul.f32 %v4658, 0.2
        %v4919 = vmul.f32 %v4854, 0.2
        %v4920 = vsel %vm4856, %v4621, %v4888
        %v4921 = vsel %vm4857, %v4817, %v4889
        %v4922 = vsel %vm4858, %v4623, %v4890
        %v4923 = vsel %vm4859, %v4819, %v4891
        %v4924 = vsel %vm4860, %v4626, %v4892
        %v4925 = vsel %vm4861, %v4822, %v4893
        %v4926 = vsel %vm4862, %v4628, %v4894
        %v4927 = vsel %vm4863, %v4824, %v4895
        %v4928 = vsel %vm4864, %v4631, %v4896
        %v4929 = vsel %vm4865, %v4827, %v4897
        %v4930 = vsel %vm4866, %v4633, %v4898
        %v4931 = vsel %vm4867, %v4829, %v4899
        %v4932 = vsel %vm4868, %v4636, %v4900
        %v4933 = vsel %vm4869, %v4832, %v4901
        %v4934 = vsel %vm4870, %v4638, %v4902
        %v4935 = vsel %vm4871, %v4834, %v4903
        %v4936 = vsel %vm4872, %v4641, %v4904
        %v4937 = vsel %vm4873, %v4837, %v4905
        %v4938 = vsel %vm4874, %v4643, %v4906
        %v4939 = vsel %vm4875, %v4839, %v4907
        %v4940 = vsel %vm4876, %v4646, %v4908
        %v4941 = vsel %vm4877, %v4842, %v4909
        %v4942 = vsel %vm4878, %v4648, %v4910
        %v4943 = vsel %vm4879, %v4844, %v4911
        %v4944 = vsel %vm4880, %v4651, %v4912
        %v4945 = vsel %vm4881, %v4847, %v4913
        %v4946 = vsel %vm4882, %v4653, %v4914
        %v4947 = vsel %vm4883, %v4849, %v4915
        %v4948 = vsel %vm4884, %v4656, %v4916
        %v4949 = vsel %vm4885, %v4852, %v4917
        %v4950 = vsel %vm4886, %v4658, %v4918
        %v4951 = vsel %vm4887, %v4854, %v4919
        %v4952 = vld [vmem:[%s5] sm:$0x3]
        %v4954 = vperm.slane %v4952, 0
        %v4955 = vperm.slane %v4952, 1
        %v4958 = vmul.f32 %v4920, %v4954
        %v4959 = vmul.f32 %v4921, %v4955
        %v4960 = vmul.f32 %v4922, %v4954
        %v4961 = vmul.f32 %v4923, %v4955
        %v4962 = vmul.f32 %v4924, %v4954
        %v4963 = vmul.f32 %v4925, %v4955
        %v4964 = vmul.f32 %v4926, %v4954
        %v4965 = vmul.f32 %v4927, %v4955
        %v4966 = vmul.f32 %v4928, %v4954
        %v4967 = vmul.f32 %v4929, %v4955
        %v4968 = vmul.f32 %v4930, %v4954
        %v4969 = vmul.f32 %v4931, %v4955
        %v4970 = vmul.f32 %v4932, %v4954
        %v4971 = vmul.f32 %v4933, %v4955
        %v4972 = vmul.f32 %v4934, %v4954
        %v4973 = vmul.f32 %v4935, %v4955
        %v4974 = vmul.f32 %v4936, %v4954
        %v4975 = vmul.f32 %v4937, %v4955
        %v4976 = vmul.f32 %v4938, %v4954
        %v4977 = vmul.f32 %v4939, %v4955
        %v4978 = vmul.f32 %v4940, %v4954
        %v4979 = vmul.f32 %v4941, %v4955
        %v4980 = vmul.f32 %v4942, %v4954
        %v4981 = vmul.f32 %v4943, %v4955
        %v4982 = vmul.f32 %v4944, %v4954
        %v4983 = vmul.f32 %v4945, %v4955
        %v4984 = vmul.f32 %v4946, %v4954
        %v4985 = vmul.f32 %v4947, %v4955
        %v4986 = vmul.f32 %v4948, %v4954
        %v4987 = vmul.f32 %v4949, %v4955
        %v4988 = vmul.f32 %v4950, %v4954
        %v4989 = vmul.f32 %v4951, %v4955
        %v4990 = vadd.f32 %v4958, %v4959
        %4991 = vadd.xlane.f32.xlu0 %v4990
        %v4992 = vpop.xlane.xlu0 %4991
        %v4993 = vadd.f32 %v4960, %v4961
        %4994 = vadd.xlane.f32.xlu0 %v4993
        %v4995 = vpop.xlane.xlu0 %4994
        %v4996 = vadd.f32 %v4962, %v4963
        %4997 = vadd.xlane.f32.xlu0 %v4996
        %v4998 = vpop.xlane.xlu0 %4997
        %v4999 = vadd.f32 %v4964, %v4965
        %5000 = vadd.xlane.f32.xlu0 %v4999
        %v5001 = vpop.xlane.xlu0 %5000
        %v5002 = vadd.f32 %v4966, %v4967
        %5003 = vadd.xlane.f32.xlu0 %v5002
        %v5004 = vpop.xlane.xlu0 %5003
        %v5005 = vadd.f32 %v4968, %v4969
        %5006 = vadd.xlane.f32.xlu0 %v5005
        %v5007 = vpop.xlane.xlu0 %5006
        %v5008 = vadd.f32 %v4970, %v4971
        %5009 = vadd.xlane.f32.xlu0 %v5008
        %v5010 = vpop.xlane.xlu0 %5009
        %v5011 = vadd.f32 %v4972, %v4973
        %5012 = vadd.xlane.f32.xlu0 %v5011
        %v5013 = vpop.xlane.xlu0 %5012
        %v5014 = vadd.f32 %v4974, %v4975
        %5015 = vadd.xlane.f32.xlu0 %v5014
        %v5016 = vpop.xlane.xlu0 %5015
        %v5017 = vadd.f32 %v4976, %v4977
        %5018 = vadd.xlane.f32.xlu0 %v5017
        %v5019 = vpop.xlane.xlu0 %5018
        %v5020 = vadd.f32 %v4978, %v4979
        %5021 = vadd.xlane.f32.xlu0 %v5020
        %v5022 = vpop.xlane.xlu0 %5021
        %v5023 = vadd.f32 %v4980, %v4981
        %5024 = vadd.xlane.f32.xlu0 %v5023
        %v5025 = vpop.xlane.xlu0 %5024
        %v5026 = vadd.f32 %v4982, %v4983
        %5027 = vadd.xlane.f32.xlu0 %v5026
        %v5028 = vpop.xlane.xlu0 %5027
        %v5029 = vadd.f32 %v4984, %v4985
        %5030 = vadd.xlane.f32.xlu0 %v5029
        %v5031 = vpop.xlane.xlu0 %5030
        %v5032 = vadd.f32 %v4986, %v4987
        %5033 = vadd.xlane.f32.xlu0 %v5032
        %v5034 = vpop.xlane.xlu0 %5033
        %v5035 = vadd.f32 %v4988, %v4989
        %5036 = vadd.xlane.f32.xlu0 %v5035
        %v5037 = vpop.xlane.xlu0 %5036
        %v5038 = vld [vmem:[#allocation2] sm:$0x1]
        %v5040 = vperm.slane %v5038, 0
        %v5042 = vadd.f32 %v4992, %v5040
        %v5043 = vadd.f32 %v4995, %v5040
        %v5044 = vadd.f32 %v4998, %v5040
        %v5045 = vadd.f32 %v5001, %v5040
        %v5046 = vadd.f32 %v5004, %v5040
        %v5047 = vadd.f32 %v5007, %v5040
        %v5048 = vadd.f32 %v5010, %v5040
        %v5049 = vadd.f32 %v5013, %v5040
        %v5050 = vadd.f32 %v5016, %v5040
        %v5051 = vadd.f32 %v5019, %v5040
        %v5052 = vadd.f32 %v5022, %v5040
        %v5053 = vadd.f32 %v5025, %v5040
        %v5054 = vadd.f32 %v5028, %v5040
        %v5055 = vadd.f32 %v5031, %v5040
        %v5056 = vadd.f32 %v5034, %v5040
        %v5057 = vadd.f32 %v5037, %v5040
        %5059 = vset.pattern.permute.xlu0 0
        %5060 = vperm.xlu0 %5059, %v5042
        %v5061 = vpop.permute.xlu0 %5060
        %5064 = vset.pattern.permute.xlu0 0
        %5065 = vperm.xlu0 %5064, %v5043
        %v5066 = vpop.permute.xlu0 %5065
        %5069 = vset.pattern.permute.xlu0 0
        %5070 = vperm.xlu0 %5069, %v5044
        %v5071 = vpop.permute.xlu0 %5070
        %5074 = vset.pattern.permute.xlu0 0
        %5075 = vperm.xlu0 %5074, %v5045
        %v5076 = vpop.permute.xlu0 %5075
        %5079 = vset.pattern.permute.xlu0 0
        %5080 = vperm.xlu0 %5079, %v5046
        %v5081 = vpop.permute.xlu0 %5080
        %5084 = vset.pattern.permute.xlu0 0
        %5085 = vperm.xlu0 %5084, %v5047
        %v5086 = vpop.permute.xlu0 %5085
        %5089 = vset.pattern.permute.xlu0 0
        %5090 = vperm.xlu0 %5089, %v5048
        %v5091 = vpop.permute.xlu0 %5090
        %5094 = vset.pattern.permute.xlu0 0
        %5095 = vperm.xlu0 %5094, %v5049
        %v5096 = vpop.permute.xlu0 %5095
        %5099 = vset.pattern.permute.xlu0 0
        %5100 = vperm.xlu0 %5099, %v5050
        %v5101 = vpop.permute.xlu0 %5100
        %5104 = vset.pattern.permute.xlu0 0
        %5105 = vperm.xlu0 %5104, %v5051
        %v5106 = vpop.permute.xlu0 %5105
        %5109 = vset.pattern.permute.xlu0 0
        %5110 = vperm.xlu0 %5109, %v5052
        %v5111 = vpop.permute.xlu0 %5110
        %5114 = vset.pattern.permute.xlu0 0
        %5115 = vperm.xlu0 %5114, %v5053
        %v5116 = vpop.permute.xlu0 %5115
        %5119 = vset.pattern.permute.xlu0 0
        %5120 = vperm.xlu0 %5119, %v5054
        %v5121 = vpop.permute.xlu0 %5120
        %5124 = vset.pattern.permute.xlu0 0
        %5125 = vperm.xlu0 %5124, %v5055
        %v5126 = vpop.permute.xlu0 %5125
        %5129 = vset.pattern.permute.xlu0 0
        %5130 = vperm.xlu0 %5129, %v5056
        %v5131 = vpop.permute.xlu0 %5130
        %5134 = vset.pattern.permute.xlu0 0
        %5135 = vperm.xlu0 %5134, %v5057
        %v5136 = vpop.permute.xlu0 %5135
        %5138 = vst [vmem:[%s349] sm:$0xff] %v5061
        %5139 = vst [vmem:[%s349 + $0x8] sm:$0xff] %v5066
        %5140 = vst [vmem:[%s349 + $0x10] sm:$0xff] %v5071
        %5141 = vst [vmem:[%s349 + $0x18] sm:$0xff] %v5076
        %5142 = vst [vmem:[%s349 + $0x20] sm:$0xff] %v5081
        %5143 = vst [vmem:[%s349 + $0x28] sm:$0xff] %v5086
        %5144 = vst [vmem:[%s349 + $0x30] sm:$0xff] %v5091
        %5145 = vst [vmem:[%s349 + $0x38] sm:$0xff] %v5096
        %5146 = vst [vmem:[%s349 + $0x40] sm:$0xff] %v5101
        %5147 = vst [vmem:[%s349 + $0x48] sm:$0xff] %v5106
        %5148 = vst [vmem:[%s349 + $0x50] sm:$0xff] %v5111
        %5149 = vst [vmem:[%s349 + $0x58] sm:$0xff] %v5116
        %5150 = vst [vmem:[%s349 + $0x60] sm:$0xff] %v5121
        %5151 = vst [vmem:[%s349 + $0x68] sm:$0xff] %v5126
        %5152 = vst [vmem:[%s349 + $0x70] sm:$0xff] %v5131
        %5153 = vst [vmem:[%s349 + $0x78] sm:$0xff] %v5136
        %s5154 = sand.u32 %s188, 1
        %s5155 = scalar_lea.sflag [#allocation5], %s5154
        %s5156 = sand.u32 %s188, 1
        %s5157 = smul.addr %s5156, 128
        %s5158 = scalar_lea.vmem [#allocation11], %s5157
        // Predicated region
        $region65: #{tpu_custom_call.1} parent=47 // pred_check
          %p5159 = pneg %p198
        $region66: #{tpu_custom_call.1} parent=47 // pred_check_branch
          %5161 = sbr.rel (%p5159) target = $region68
        $region67: #{tpu_custom_call.1} parent=47 // pred_region
          %s5162 = smul.u32 16, %s28
          %5164 = vsyncadd %s5155, 0
          %s5165 = smul.addr %s5162, 8
          %s5166 = scalar_lea.hbm %s7, %s5165
          %s5167 = sshll.u32 %s5158, 4
          %s5168 = int_to_ptr.vmem [resolvable:$true] %s5167
          %s5169 = sshll.u32 %s5166, 4
          %s5170 = int_to_ptr.hbm [resolvable:$true] %s5169
          %5175 = dma.vmem_to_hbm [thread:$0]  %s5168, 2048, %s5170, %s5155, 128, 128, 8
        $region68: #{tpu_custom_call.1} parent=47 // pred_fallthru
          _
      $region48: #{tpu_custom_call.1} parent=5 // pred_fallthru
        _
      %p5176 = scmp.le.s32.totalorder 2, %s23
      // Predicated region
      $region69: #{tpu_custom_call.1} parent=5 // pred_check
        %p5177 = pneg %p5176
      $region70: #{tpu_custom_call.1} parent=5 // pred_check_branch
        %5179 = sbr.rel (%p5177) target = $region72
      $region71: #{tpu_custom_call.1} parent=5 // pred_region
        %s5180 = ssub.s32 %s23, 2
        // Predicated region
        $region73: #{tpu_custom_call.1} parent=71 // pred_check
          %p5181 = pneg %p204
        $region74: #{tpu_custom_call.1} parent=71 // pred_check_branch
          %5183 = sbr.rel (%p5181) target = $region76
        $region75: #{tpu_custom_call.1} parent=71 // pred_region
          %s5184 = sand.u32 %s189, 1
          %s5185 = scalar_lea.sflag [#allocation5], %s5184
          %s5186 = sand.u32 %s189, 1
          %s5187 = smul.addr %s5186, 128
          %s5188 = scalar_lea.vmem [#allocation11], %s5187
          %5190 = dma.done %s5185, 2048
        $region76: #{tpu_custom_call.1} parent=71 // pred_fallthru
          _
      $region72: #{tpu_custom_call.1} parent=5 // pred_fallthru
        _
    $region6: #{tpu_custom_call.1} parent=1 // loop_footer
      %s27 = sadd.s32 1, %s23
    $region7: #{tpu_custom_call.1} parent=1 // loop_footer_branch
      %22 = sbr.rel target = $region3
    $region8: #{tpu_custom_call.1} parent=1 // loop_exit
      _
    %5191 = vsyncpa [#allocation4], 1
    %s5192 = scalar_lea.sflag [#allocation4], 1
    %5193 = vsyncpa %s5192, 1
    %5194 = vsyncpa [#allocation7], 1
    %5195 = vsyncpa [#allocation10], 1
    %5196 = vsyncpa [#allocation5], 1
    %s5197 = scalar_lea.sflag [#allocation5], 1
    %5198 = vsyncpa %s5197, 1

</llo_original>
